<compile_context>
chip_gen: v7x
topology: tpu7x:2x2x1
jax: 0.10.0
libtpu: 0.0.40
codegen_flags: <defaults>
</compile_context>

<pallas_src>
import math

import numpy as np

import jax
import jax.numpy as jnp
from jax.experimental import pallas as pl
from jax.experimental.pallas import tpu as pltpu

HIDDEN = 128          # GraphConv hidden width (fixed by the module)
REAL_K = 500          # self.k (true number of clusters)
KPAD = 512            # clusters padded to a multiple of 128 (lane-dense)
NUM_FEATURES = 4      # dataset.num_features (small synthetic choice)
NUM_CLASSES = 4       # dataset.num_classes (small synthetic choice)
RATIO = 0.8           # TopKPooling ratio
NEG = -1e30           # finite "-inf" sentinel (scores/features are tiny)


def _pool_sizes(sizes):
    return [int(math.ceil(RATIO * n)) for n in sizes]


def _full_spec(shape):
    nd = len(shape)
    return pl.BlockSpec(shape, lambda i, _nd=nd: (0,) * _nd)


# --------------------------------------------------------------------------
# Single fused kernel: conv1 -> Clustering -> convk -> pool1 -> readout1 ->
#                      conv2 -> pool2 -> readout2 -> conv3 -> pool3 ->
#                      readout3 -> MLP head -> log_softmax
# --------------------------------------------------------------------------
def _make_kernel(sizes0, sizes1, sizes2, sizes3):
    N = sum(sizes0)
    B = len(sizes0)
    offs = np.cumsum([0] + list(sizes0))[:-1].tolist()   # static row offsets

    def kernel(adj_ref, x_ref,
               c1wr_ref, c1we_ref, c1b_ref,
               uwT_ref, usq_ref,
               ckwr_ref, ckwe_ref, ckb_ref, p1_ref,
               c2wr_ref, c2we_ref, c2b_ref, p2_ref,
               c3wr_ref, c3we_ref, c3b_ref, p3_ref,
               l1w_ref, l1b_ref, l2w_ref, l2b_ref, l3w_ref, l3b_ref,
               out_ref, kl_ref):
        f32, bf16 = jnp.float32, jnp.bfloat16
        adj = adj_ref[...]                                   # [N,N] bf16
        x = x_ref[...]                                       # [N,Fin] bf16

        row_iota = jax.lax.broadcasted_iota(jnp.int32, (N, 1), 0)
        riota_f = row_iota.astype(f32)
        # per-graph row-range indicators (static offsets), hoisted once
        graph_rows = []
        for g in range(B):
            lo, hi = offs[g], offs[g] + sizes0[g]
            graph_rows.append((row_iota >= lo) & (row_iota < hi))

        def graph_conv(xin_bf, wr_ref, we_ref, b_ref):
            # GraphConv: relu(lin_root(x) + lin_rel(A @ x) + b)
            agg = jnp.dot(adj, xin_bf, preferred_element_type=f32)
            # TODO(synk): agg truncated to bf16 before lin_rel (MXU-native);
            # keep f32 here if bit-faithfulness to the torch f32 path matters.
            h = (jnp.dot(xin_bf, wr_ref[...], preferred_element_type=f32)
                 + jnp.dot(agg.astype(bf16), we_ref[...],
                           preferred_element_type=f32)
                 + b_ref[...])
            return jnp.maximum(h, 0.0)

        def topk_score(h, p_ref):
            # p pre-normalized by ||p|| host-side -> VPU mul + lane reduce
            return jnp.tanh(jnp.sum(h * p_ref[...], axis=1, keepdims=True))

        def select_topk(score, active, ks):
            # Per-graph top-k (k static) via unrolled masked argmax -> 0/1 mask.
            new_mask = jnp.zeros((N, 1), f32)
            for g in range(B):
                sg = jnp.where(graph_rows[g] & (active > 0.5), score, NEG)
                for _ in range(ks[g]):
                    mx = jnp.max(sg, axis=0, keepdims=True)          # [1,1]
                    idx = jnp.min(jnp.where(sg >= mx, riota_f,
                                            jnp.float32(N)),
                                  axis=0, keepdims=True)             # first max
                    hit = riota_f == idx                             # one-hot
                    new_mask = new_mask + hit.astype(f32)
                    sg = jnp.where(hit, NEG, sg)
            return new_mask

        def readout(xp, mask, counts):
            # gmp / gap over selected nodes; graphs are row-contiguous so use
            # static per-graph slices (O(N*F), no membership matmul).
            mxs, means = [], []
            for g in range(B):
                lo, hi = offs[g], offs[g] + sizes0[g]
                xg = xp[lo:hi, :]                                    # [n,128]
                mg = mask[lo:hi, :]                                  # [n,1]
                mxs.append(jnp.max(jnp.where(mg > 0.5, xg, NEG),
                                   axis=0, keepdims=True))
                means.append(jnp.sum(xg, axis=0, keepdims=True)
                             * (1.0 / counts[g]))
            return (jnp.concatenate(mxs, axis=0),
                    jnp.concatenate(means, axis=0))                  # [B,128] x2

        # ---- conv1 --------------------------------------------------------
        h1 = graph_conv(x, c1wr_ref, c1we_ref, c1b_ref)              # [N,128]

        # ---- Clustering ----------------------------------------------------
        # TODO(synk): `Clustering` is not defined in the source snippet;
        # implemented as DEC-style Student-t soft assignment q + KL(P||Q).
        h1b = h1.astype(bf16)
        cross = jnp.dot(h1b, uwT_ref[...], preferred_element_type=f32)  # [N,KPAD]
        xsq = jnp.sum(h1 * h1, axis=1, keepdims=True)                   # [N,1]
        col = jax.lax.broadcasted_iota(jnp.int32, (1, KPAD), 1)
        valid = col < REAL_K
        d2 = jnp.maximum(xsq + usq_ref[...] - 2.0 * cross, 0.0)         # >= 0 guard
        q = jnp.where(valid, 1.0 / (1.0 + d2), 0.0)
        q = q / jnp.sum(q, axis=1, keepdims=True)                       # [N,KPAD]
        f = jnp.sum(q, axis=0, keepdims=True)                           # [1,KPAD]
        f_safe = jnp.where(valid, f, 1.0)
        p_un = (q * q) / f_safe
        z = jnp.sum(p_un, axis=1, keepdims=True)
        p = p_un / z
        # KL(P||Q) with one [N,K] log pass: log p - log q = log q - log f - log z
        kl_terms = p * (jnp.log(jnp.where(valid, q, 1.0))
                        - jnp.log(f_safe) - jnp.log(z))
        kl = jnp.sum(jnp.sum(kl_terms, axis=1, keepdims=True),
                     axis=0, keepdims=True)                             # [1,1]
        kl_ref[...] = jnp.zeros(kl_ref.shape, f32) + kl                 # lane-dense

        # ---- convk + pool1 --------------------------------------------------
        hk = graph_conv(q.astype(bf16), ckwr_ref, ckwe_ref, ckb_ref)    # [N,128]
        s1 = topk_score(hk, p1_ref)
        mask1 = select_topk(s1, jnp.ones((N, 1), f32), sizes1)
        xp1 = hk * s1 * mask1          # pooled + gated; dropped rows zeroed
        mx1, mn1 = readout(xp1, mask1, sizes1)

        # ---- conv2 + pool2 --------------------------------------------------
        h2 = graph_conv(xp1.astype(bf16), c2wr_ref, c2we_ref, c2b_ref)
        s2 = topk_score(h2, p2_ref)
        mask2 = select_topk(s2, mask1, sizes2)
        xp2 = h2 * s2 * mask2
        mx2, mn2 = readout(xp2, mask2, sizes2)

        # ---- conv3 + pool3 --------------------------------------------------
        h3 = graph_conv(xp2.astype(bf16), c3wr_ref, c3we_ref, c3b_ref)
        s3 = topk_score(h3, p3_ref)
        mask3 = select_topk(s3, mask2, sizes3)
        xp3 = h3 * s3 * mask3
        mx3, mn3 = readout(xp3, mask3, sizes3)

        # ---- MLP head + log_softmax ----------------------------------------
        # x = x1 + x2 + x3, kept as separate gmp/gap halves; lin1's K=256 is
        # split into two K=128 matmuls (avoids an in-kernel concat).
        xl = (mx1 + mx2 + mx3).astype(bf16)                             # gmp half
        xr = (mn1 + mn2 + mn3).astype(bf16)                             # gap half
        h = (jnp.dot(xl, l1w_ref[0:HIDDEN, :], preferred_element_type=f32)
             + jnp.dot(xr, l1w_ref[HIDDEN:2 * HIDDEN, :],
                       preferred_element_type=f32)
             + l1b_ref[...])
        h = jnp.maximum(h, 0.0)
        # TODO(synk): F.dropout(p=0.5, training=self.training) is identity (eval).
        h = jnp.maximum(jnp.dot(h.astype(bf16), l2w_ref[...],
                                preferred_element_type=f32) + l2b_ref[...], 0.0)
        # lin3 padded to 128 output lanes (pad bias -1e9 -> exp underflows to 0)
        logits = (jnp.dot(h.astype(bf16), l3w_ref[...],
                          preferred_element_type=f32) + l3b_ref[...])   # [B,128]
        m = jnp.max(logits, axis=1, keepdims=True)
        zc = logits - m
        lse = jnp.log(jnp.sum(jnp.exp(zc), axis=1, keepdims=True))
        out_ref[...] = zc - lse                                         # log_softmax

    return kernel


# --------------------------------------------------------------------------
# Wrapper: one pallas_call for the whole forward
# --------------------------------------------------------------------------
def build_forward(sizes):
    sizes = list(sizes)
    sizes1 = _pool_sizes(sizes)
    sizes2 = _pool_sizes(sizes1)
    sizes3 = _pool_sizes(sizes2)
    N, B = sum(sizes), len(sizes)
    kernel = _make_kernel(sizes, sizes1, sizes2, sizes3)

    def forward(params, x, adj):
        args = (adj.astype(jnp.bfloat16), x.astype(jnp.bfloat16),
                params["c1_wr"], params["c1_we"], params["c1_b"],
                params["UwT"], params["usq"],
                params["ck_wr"], params["ck_we"], params["ck_b"], params["p1"],
                params["c2_wr"], params["c2_we"], params["c2_b"], params["p2"],
                params["c3_wr"], params["c3_we"], params["c3_b"], params["p3"],
                params["l1_w"], params["l1_b"], params["l2_w"], params["l2_b"],
                params["l3_w"], params["l3_b"])
        out_shapes = (jax.ShapeDtypeStruct((B, HIDDEN), jnp.float32),
                      jax.ShapeDtypeStruct((1, HIDDEN), jnp.float32))
        out, kl = pl.pallas_call(
            kernel,
            grid=(1,),
            in_specs=[_full_spec(a.shape) for a in args],
            out_specs=tuple(_full_spec(o.shape) for o in out_shapes),
            out_shape=out_shapes,
            compiler_params=pltpu.CompilerParams(
                dimension_semantics=("arbitrary",)),
        )(*args)
        # TODO(synk): at much larger N, tile the node dimension and mark it
        # "parallel" (v7x dual-TC, VMEM limits); unnecessary at these sizes.
        return out[:, :NUM_CLASSES], kl[0, 0]

    return jax.jit(forward)


# --------------------------------------------------------------------------
# Deterministic parameter / input construction
# --------------------------------------------------------------------------
def init_params(key):
    ks = iter(jax.random.split(key, 32))
    bf = jnp.bfloat16

    def nrm(shape, scale=0.1):
        return scale * jax.random.normal(next(ks), shape, jnp.float32)

    def pad_rows(a, rows):
        return jnp.concatenate(
            [a, jnp.zeros((rows - a.shape[0], a.shape[1]), a.dtype)], axis=0)

    # GraphConv: out = lin_root(x) + lin_rel(sum_j x_j) + b   (weights [in, out])
    c1_wr, c1_we, c1_b = nrm((NUM_FEATURES, HIDDEN)), nrm((NUM_FEATURES, HIDDEN)), nrm((1, HIDDEN))
    ck_wr = pad_rows(nrm((REAL_K, HIDDEN)), KPAD)    # K padded 500 -> 512 (zero rows)
    ck_we = pad_rows(nrm((REAL_K, HIDDEN)), KPAD)
    ck_b = nrm((1, HIDDEN))
    c2_wr, c2_we, c2_b = nrm((HIDDEN, HIDDEN)), nrm((HIDDEN, HIDDEN)), nrm((1, HIDDEN))
    c3_wr, c3_we, c3_b = nrm((HIDDEN, HIDDEN)), nrm((HIDDEN, HIDDEN)), nrm((1, HIDDEN))

    # TopKPooling projection vectors, pre-normalized by ||p|| host-side
    def unit_row():
        v = nrm((1, HIDDEN))
        return v / jnp.sqrt(jnp.sum(v * v))
    p1, p2, p3 = unit_row(), unit_row(), unit_row()

    # Cluster centers (zeros in the module; random here for non-trivial compute)
    Uw = pad_rows(nrm((REAL_K, HIDDEN)), KPAD)              # [KPAD,128] f32
    UwT = jnp.transpose(Uw).astype(bf)                      # pre-transposed, bf16
    usq = jnp.transpose(jnp.sum(Uw * Uw, axis=1, keepdims=True))   # [1,KPAD] f32

    # MLP head; lin3 padded to 128 output lanes (pad bias -1e9 -> ignored)
    l1_w, l1_b = nrm((2 * HIDDEN, HIDDEN)), nrm((1, HIDDEN))
    l2_w, l2_b = nrm((HIDDEN, 64)), nrm((1, 64))
    l3_w_real, l3_b_real = nrm((64, NUM_CLASSES)), nrm((1, NUM_CLASSES))
    l3_w = jnp.concatenate(
        [l3_w_real, jnp.zeros((64, HIDDEN - NUM_CLASSES), jnp.float32)], axis=1)
    l3_b = jnp.concatenate(
        [l3_b_real, jnp.full((1, HIDDEN - NUM_CLASSES), -1e9, jnp.float32)], axis=1)

    return {
        "c1_wr": c1_wr.astype(bf), "c1_we": c1_we.astype(bf), "c1_b": c1_b,
        "ck_wr": ck_wr.astype(bf), "ck_we": ck_we.astype(bf), "ck_b": ck_b,
        "c2_wr": c2_wr.astype(bf), "c2_we": c2_we.astype(bf), "c2_b": c2_b,
        "c3_wr": c3_wr.astype(bf), "c3_we": c3_we.astype(bf), "c3_b": c3_b,
        "p1": p1, "p2": p2, "p3": p3,
        "UwT": UwT, "usq": usq,
        "l1_w": l1_w.astype(bf), "l1_b": l1_b,
        "l2_w": l2_w.astype(bf), "l2_b": l2_b,
        "l3_w": l3_w.astype(bf), "l3_b": l3_b,
    }


def make_graph(key, sizes):
    """Block-diagonal ring graphs + random node features (adjacency built host-side)."""
    n_total = sum(sizes)
    x = jax.random.normal(key, (n_total, NUM_FEATURES), jnp.float32)
    adj = np.zeros((n_total, n_total), np.float32)
    off = 0
    for n in sizes:
        for i in range(n):
            j = (i + 1) % n
            adj[off + i, off + j] = 1.0
            adj[off + j, off + i] = 1.0
        off += n
    return x, jnp.asarray(adj)


if __name__ == "__main__":
    key = jax.random.PRNGKey(0)
    k_par, k_x = jax.random.split(key)

    sizes = [8, 8]                     # 2 graphs, 8 nodes each -> 16 nodes total
    params = init_params(k_par)
    x, adj = make_graph(k_x, sizes)    # x: [16, 4], adj: [16, 16]

    forward = build_forward(sizes)
    log_probs, kl_loss = forward(params, x, adj)
    jax.block_until_ready((log_probs, kl_loss))

    assert log_probs.shape == (len(sizes), NUM_CLASSES)
    assert jnp.all(jnp.isfinite(log_probs))
    assert jnp.isfinite(kl_loss)
    print("KERNEL_OK")
</pallas_src>

<mosaic_0001>
module attributes {stable_mosaic.version = 11 : i64} {
  func.func @kernel(%arg0: i32, %arg1: memref<16x16xbf16, #tpu.memory_space<vmem>>, %arg2: memref<16x4xbf16, #tpu.memory_space<vmem>>, %arg3: memref<4x128xbf16, #tpu.memory_space<vmem>>, %arg4: memref<4x128xbf16, #tpu.memory_space<vmem>>, %arg5: memref<1x128xf32, #tpu.memory_space<vmem>>, %arg6: memref<128x512xbf16, #tpu.memory_space<vmem>>, %arg7: memref<1x512xf32, #tpu.memory_space<vmem>>, %arg8: memref<512x128xbf16, #tpu.memory_space<vmem>>, %arg9: memref<512x128xbf16, #tpu.memory_space<vmem>>, %arg10: memref<1x128xf32, #tpu.memory_space<vmem>>, %arg11: memref<1x128xf32, #tpu.memory_space<vmem>>, %arg12: memref<128x128xbf16, #tpu.memory_space<vmem>>, %arg13: memref<128x128xbf16, #tpu.memory_space<vmem>>, %arg14: memref<1x128xf32, #tpu.memory_space<vmem>>, %arg15: memref<1x128xf32, #tpu.memory_space<vmem>>, %arg16: memref<128x128xbf16, #tpu.memory_space<vmem>>, %arg17: memref<128x128xbf16, #tpu.memory_space<vmem>>, %arg18: memref<1x128xf32, #tpu.memory_space<vmem>>, %arg19: memref<1x128xf32, #tpu.memory_space<vmem>>, %arg20: memref<256x128xbf16, #tpu.memory_space<vmem>>, %arg21: memref<1x128xf32, #tpu.memory_space<vmem>>, %arg22: memref<128x64xbf16, #tpu.memory_space<vmem>>, %arg23: memref<1x64xf32, #tpu.memory_space<vmem>>, %arg24: memref<64x128xbf16, #tpu.memory_space<vmem>>, %arg25: memref<1x128xf32, #tpu.memory_space<vmem>>, %arg26: memref<2x128xf32, #tpu.memory_space<vmem>>, %arg27: memref<1x128xf32, #tpu.memory_space<vmem>>) attributes {dimension_semantics = [#tpu.dimension_semantics<arbitrary>], iteration_bounds = array<i64: 1>, scalar_prefetch = 0 : i64, scratch_operands = 0 : i64, tpu.core_type = #tpu.core_type<tc>, window_params = [{pipeline_mode = #tpu.pipeline_mode<synchronous>, transform_indices = @transform_0, window_bounds = array<i64: 16, 16>}, {pipeline_mode = #tpu.pipeline_mode<synchronous>, transform_indices = @transform_1, window_bounds = array<i64: 16, 4>}, {pipeline_mode = #tpu.pipeline_mode<synchronous>, transform_indices = @transform_2, window_bounds = array<i64: 4, 128>}, {pipeline_mode = #tpu.pipeline_mode<synchronous>, transform_indices = @transform_3, window_bounds = array<i64: 4, 128>}, {pipeline_mode = #tpu.pipeline_mode<synchronous>, transform_indices = @transform_4, window_bounds = array<i64: 1, 128>}, {pipeline_mode = #tpu.pipeline_mode<synchronous>, transform_indices = @transform_5, window_bounds = array<i64: 128, 512>}, {pipeline_mode = #tpu.pipeline_mode<synchronous>, transform_indices = @transform_6, window_bounds = array<i64: 1, 512>}, {pipeline_mode = #tpu.pipeline_mode<synchronous>, transform_indices = @transform_7, window_bounds = array<i64: 512, 128>}, {pipeline_mode = #tpu.pipeline_mode<synchronous>, transform_indices = @transform_8, window_bounds = array<i64: 512, 128>}, {pipeline_mode = #tpu.pipeline_mode<synchronous>, transform_indices = @transform_9, window_bounds = array<i64: 1, 128>}, {pipeline_mode = #tpu.pipeline_mode<synchronous>, transform_indices = @transform_10, window_bounds = array<i64: 1, 128>}, {pipeline_mode = #tpu.pipeline_mode<synchronous>, transform_indices = @transform_11, window_bounds = array<i64: 128, 128>}, {pipeline_mode = #tpu.pipeline_mode<synchronous>, transform_indices = @transform_12, window_bounds = array<i64: 128, 128>}, {pipeline_mode = #tpu.pipeline_mode<synchronous>, transform_indices = @transform_13, window_bounds = array<i64: 1, 128>}, {pipeline_mode = #tpu.pipeline_mode<synchronous>, transform_indices = @transform_14, window_bounds = array<i64: 1, 128>}, {pipeline_mode = #tpu.pipeline_mode<synchronous>, transform_indices = @transform_15, window_bounds = array<i64: 128, 128>}, {pipeline_mode = #tpu.pipeline_mode<synchronous>, transform_indices = @transform_16, window_bounds = array<i64: 128, 128>}, {pipeline_mode = #tpu.pipeline_mode<synchronous>, transform_indices = @transform_17, window_bounds = array<i64: 1, 128>}, {pipeline_mode = #tpu.pipeline_mode<synchronous>, transform_indices = @transform_18, window_bounds = array<i64: 1, 128>}, {pipeline_mode = #tpu.pipeline_mode<synchronous>, transform_indices = @transform_19, window_bounds = array<i64: 256, 128>}, {pipeline_mode = #tpu.pipeline_mode<synchronous>, transform_indices = @transform_20, window_bounds = array<i64: 1, 128>}, {pipeline_mode = #tpu.pipeline_mode<synchronous>, transform_indices = @transform_21, window_bounds = array<i64: 128, 64>}, {pipeline_mode = #tpu.pipeline_mode<synchronous>, transform_indices = @transform_22, window_bounds = array<i64: 1, 64>}, {pipeline_mode = #tpu.pipeline_mode<synchronous>, transform_indices = @transform_23, window_bounds = array<i64: 64, 128>}, {pipeline_mode = #tpu.pipeline_mode<synchronous>, transform_indices = @transform_24, window_bounds = array<i64: 1, 128>}, {pipeline_mode = #tpu.pipeline_mode<synchronous>, transform_indices = @transform_25, window_bounds = array<i64: 2, 128>}, {pipeline_mode = #tpu.pipeline_mode<synchronous>, transform_indices = @transform_26, window_bounds = array<i64: 1, 128>}]} {
    %c0 = arith.constant 0 : index
    %c0_0 = arith.constant 0 : index
    %0 = vector.load %arg1[%c0, %c0_0] : memref<16x16xbf16, #tpu.memory_space<vmem>>, vector<16x16xbf16>
    %c0_1 = arith.constant 0 : index
    %c0_2 = arith.constant 0 : index
    %1 = vector.load %arg2[%c0_1, %c0_2] : memref<16x4xbf16, #tpu.memory_space<vmem>>, vector<16x4xbf16>
    %2 = tpu.iota {dimensions = array<i32: 0>} : vector<16x1xi32>
    %3 = arith.sitofp %2 : vector<16x1xi32> to vector<16x1xf32>
    %c0_i32 = arith.constant 0 : i32
    %4 = vector.broadcast %c0_i32 : i32 to vector<16x1xi32>
    %5 = arith.cmpi sge, %2, %4 : vector<16x1xi32>
    %c8_i32 = arith.constant 8 : i32
    %6 = vector.broadcast %c8_i32 : i32 to vector<16x1xi32>
    %7 = arith.cmpi slt, %2, %6 : vector<16x1xi32>
    %8 = arith.andi %5, %7 : vector<16x1xi1>
    %c8_i32_3 = arith.constant 8 : i32
    %9 = vector.broadcast %c8_i32_3 : i32 to vector<16x1xi32>
    %10 = arith.cmpi sge, %2, %9 : vector<16x1xi32>
    %c16_i32 = arith.constant 16 : i32
    %11 = vector.broadcast %c16_i32 : i32 to vector<16x1xi32>
    %12 = arith.cmpi slt, %2, %11 : vector<16x1xi32>
    %13 = arith.andi %10, %12 : vector<16x1xi1>
    %cst = arith.constant dense<0.000000e+00> : vector<16x4xf32>
    %14 = tpu.matmul %0, %1, %cst {dimension_numbers = #tpu.dot_dimension_numbers<[1], [0], [0], [1], [0, 0, 1, 1], [], []>} : vector<16x16xbf16>, vector<16x4xbf16>, vector<16x4xf32> -> vector<16x4xf32>
    %c0_4 = arith.constant 0 : index
    %c0_5 = arith.constant 0 : index
    %15 = vector.load %arg3[%c0_4, %c0_5] : memref<4x128xbf16, #tpu.memory_space<vmem>>, vector<4x128xbf16>
    %cst_6 = arith.constant dense<0.000000e+00> : vector<16x128xf32>
    %16 = tpu.matmul %1, %15, %cst_6 {dimension_numbers = #tpu.dot_dimension_numbers<[1], [0], [0], [1], [0, 0, 1, 1], [], []>} : vector<16x4xbf16>, vector<4x128xbf16>, vector<16x128xf32> -> vector<16x128xf32>
    %17 = arith.truncf %14 : vector<16x4xf32> to vector<16x4xbf16>
    %c0_7 = arith.constant 0 : index
    %c0_8 = arith.constant 0 : index
    %18 = vector.load %arg4[%c0_7, %c0_8] : memref<4x128xbf16, #tpu.memory_space<vmem>>, vector<4x128xbf16>
    %cst_9 = arith.constant dense<0.000000e+00> : vector<16x128xf32>
    %19 = tpu.matmul %17, %18, %cst_9 {dimension_numbers = #tpu.dot_dimension_numbers<[1], [0], [0], [1], [0, 0, 1, 1], [], []>} : vector<16x4xbf16>, vector<4x128xbf16>, vector<16x128xf32> -> vector<16x128xf32>
    %20 = arith.addf %16, %19 : vector<16x128xf32>
    %c0_10 = arith.constant 0 : index
    %c0_11 = arith.constant 0 : index
    %21 = vector.load %arg5[%c0_10, %c0_11] : memref<1x128xf32, #tpu.memory_space<vmem>>, vector<1x128xf32>
    %22 = vector.broadcast %21 : vector<1x128xf32> to vector<16x128xf32>
    %23 = arith.addf %20, %22 : vector<16x128xf32>
    %cst_12 = arith.constant 0.000000e+00 : f32
    %24 = vector.broadcast %cst_12 : f32 to vector<16x128xf32>
    %25 = arith.maximumf %23, %24 : vector<16x128xf32>
    %26 = arith.truncf %25 : vector<16x128xf32> to vector<16x128xbf16>
    %c0_13 = arith.constant 0 : index
    %c0_14 = arith.constant 0 : index
    %27 = vector.load %arg6[%c0_13, %c0_14] : memref<128x512xbf16, #tpu.memory_space<vmem>>, vector<128x512xbf16>
    %cst_15 = arith.constant dense<0.000000e+00> : vector<16x512xf32>
    %28 = tpu.matmul %26, %27, %cst_15 {dimension_numbers = #tpu.dot_dimension_numbers<[1], [0], [0], [1], [0, 0, 1, 1], [], []>} : vector<16x128xbf16>, vector<128x512xbf16>, vector<16x512xf32> -> vector<16x512xf32>
    %29 = arith.mulf %25, %25 : vector<16x128xf32>
    %cst_16 = arith.constant dense<0.000000e+00> : vector<16xf32>
    %30 = vector.multi_reduction <add>, %29, %cst_16 [1] : vector<16x128xf32> to vector<16xf32>
    %31 = vector.shape_cast %30 : vector<16xf32> to vector<16x1xf32>
    %32 = tpu.iota {dimensions = array<i32: 1>} : vector<1x512xi32>
    %c500_i32 = arith.constant 500 : i32
    %33 = vector.broadcast %c500_i32 : i32 to vector<1x512xi32>
    %34 = arith.cmpi slt, %32, %33 : vector<1x512xi32>
    %c0_17 = arith.constant 0 : index
    %c0_18 = arith.constant 0 : index
    %35 = vector.load %arg7[%c0_17, %c0_18] : memref<1x512xf32, #tpu.memory_space<vmem>>, vector<1x512xf32>
    %36 = vector.broadcast %31 : vector<16x1xf32> to vector<16x512xf32>
    %37 = vector.broadcast %35 : vector<1x512xf32> to vector<16x512xf32>
    %38 = arith.addf %36, %37 : vector<16x512xf32>
    %cst_19 = arith.constant 2.000000e+00 : f32
    %39 = vector.broadcast %cst_19 : f32 to vector<16x512xf32>
    %40 = arith.mulf %39, %28 : vector<16x512xf32>
    %41 = arith.subf %38, %40 : vector<16x512xf32>
    %cst_20 = arith.constant 0.000000e+00 : f32
    %42 = vector.broadcast %cst_20 : f32 to vector<16x512xf32>
    %43 = arith.maximumf %41, %42 : vector<16x512xf32>
    %cst_21 = arith.constant 1.000000e+00 : f32
    %44 = vector.broadcast %cst_21 : f32 to vector<16x512xf32>
    %45 = arith.addf %44, %43 : vector<16x512xf32>
    %cst_22 = arith.constant 1.000000e+00 : f32
    %46 = vector.broadcast %cst_22 : f32 to vector<16x512xf32>
    %47 = arith.divf %46, %45 : vector<16x512xf32>
    %cst_23 = arith.constant 0.000000e+00 : f32
    %48 = vector.shape_cast %34 : vector<1x512xi1> to vector<1x512xi1>
    %49 = vector.broadcast %48 : vector<1x512xi1> to vector<16x512xi1>
    %50 = vector.broadcast %cst_23 : f32 to vector<16x512xf32>
    %51 = arith.select %49, %47, %50 : vector<16x512xi1>, vector<16x512xf32>
    %cst_24 = arith.constant dense<0.000000e+00> : vector<16xf32>
    %52 = vector.multi_reduction <add>, %51, %cst_24 [1] : vector<16x512xf32> to vector<16xf32>
    %53 = vector.shape_cast %52 : vector<16xf32> to vector<16x1xf32>
    %54 = vector.broadcast %53 : vector<16x1xf32> to vector<16x512xf32>
    %55 = arith.divf %51, %54 : vector<16x512xf32>
    %cst_25 = arith.constant dense<0.000000e+00> : vector<512xf32>
    %56 = vector.multi_reduction <add>, %55, %cst_25 [0] : vector<16x512xf32> to vector<512xf32>
    %57 = vector.shape_cast %56 : vector<512xf32> to vector<1x512xf32>
    %cst_26 = arith.constant 1.000000e+00 : f32
    %58 = vector.broadcast %cst_26 : f32 to vector<1x512xf32>
    %59 = arith.select %34, %57, %58 : vector<1x512xi1>, vector<1x512xf32>
    %60 = arith.mulf %55, %55 : vector<16x512xf32>
    %61 = vector.broadcast %59 : vector<1x512xf32> to vector<16x512xf32>
    %62 = arith.divf %60, %61 : vector<16x512xf32>
    %cst_27 = arith.constant dense<0.000000e+00> : vector<16xf32>
    %63 = vector.multi_reduction <add>, %62, %cst_27 [1] : vector<16x512xf32> to vector<16xf32>
    %64 = vector.shape_cast %63 : vector<16xf32> to vector<16x1xf32>
    %65 = vector.broadcast %64 : vector<16x1xf32> to vector<16x512xf32>
    %66 = arith.divf %62, %65 : vector<16x512xf32>
    %cst_28 = arith.constant 1.000000e+00 : f32
    %67 = vector.shape_cast %34 : vector<1x512xi1> to vector<1x512xi1>
    %68 = vector.broadcast %67 : vector<1x512xi1> to vector<16x512xi1>
    %69 = vector.broadcast %cst_28 : f32 to vector<16x512xf32>
    %70 = arith.select %68, %55, %69 : vector<16x512xi1>, vector<16x512xf32>
    %71 = math.log %70 : vector<16x512xf32>
    %72 = math.log %59 : vector<1x512xf32>
    %73 = vector.broadcast %72 : vector<1x512xf32> to vector<16x512xf32>
    %74 = arith.subf %71, %73 : vector<16x512xf32>
    %75 = math.log %64 : vector<16x1xf32>
    %76 = vector.broadcast %75 : vector<16x1xf32> to vector<16x512xf32>
    %77 = arith.subf %74, %76 : vector<16x512xf32>
    %78 = arith.mulf %66, %77 : vector<16x512xf32>
    %cst_29 = arith.constant dense<0.000000e+00> : vector<16xf32>
    %79 = vector.multi_reduction <add>, %78, %cst_29 [1] : vector<16x512xf32> to vector<16xf32>
    %80 = vector.shape_cast %79 : vector<16xf32> to vector<16x1xf32>
    %cst_30 = arith.constant dense<0.000000e+00> : vector<1xf32>
    %81 = vector.multi_reduction <add>, %80, %cst_30 [0] : vector<16x1xf32> to vector<1xf32>
    %82 = vector.shape_cast %81 : vector<1xf32> to vector<1x1xf32>
    %cst_31 = arith.constant 0.000000e+00 : f32
    %83 = vector.broadcast %cst_31 : f32 to vector<1x128xf32>
    %84 = vector.broadcast %82 : vector<1x1xf32> to vector<1x128xf32>
    %85 = arith.addf %83, %84 : vector<1x128xf32>
    %c0_32 = arith.constant 0 : index
    %c0_33 = arith.constant 0 : index
    %86 = vector.load %arg27[%c0_32, %c0_33] : memref<1x128xf32, #tpu.memory_space<vmem>>, vector<1x128xf32>
    tpu.vector_store %arg27[%c0_32, %c0_33], %85 {strides = array<i32>} : memref<1x128xf32, #tpu.memory_space<vmem>>, vector<1x128xf32>,
    %87 = arith.truncf %55 : vector<16x512xf32> to vector<16x512xbf16>
    %cst_34 = arith.constant dense<0.000000e+00> : vector<16x512xf32>
    %88 = tpu.matmul %0, %87, %cst_34 {dimension_numbers = #tpu.dot_dimension_numbers<[1], [0], [0], [1], [0, 0, 1, 1], [], []>} : vector<16x16xbf16>, vector<16x512xbf16>, vector<16x512xf32> -> vector<16x512xf32>
    %c0_35 = arith.constant 0 : index
    %c0_36 = arith.constant 0 : index
    %89 = vector.load %arg8[%c0_35, %c0_36] : memref<512x128xbf16, #tpu.memory_space<vmem>>, vector<512x128xbf16>
    %cst_37 = arith.constant dense<0.000000e+00> : vector<16x128xf32>
    %90 = tpu.matmul %87, %89, %cst_37 {dimension_numbers = #tpu.dot_dimension_numbers<[1], [0], [0], [1], [0, 0, 1, 1], [], []>} : vector<16x512xbf16>, vector<512x128xbf16>, vector<16x128xf32> -> vector<16x128xf32>
    %91 = arith.truncf %88 : vector<16x512xf32> to vector<16x512xbf16>
    %c0_38 = arith.constant 0 : index
    %c0_39 = arith.constant 0 : index
    %92 = vector.load %arg9[%c0_38, %c0_39] : memref<512x128xbf16, #tpu.memory_space<vmem>>, vector<512x128xbf16>
    %cst_40 = arith.constant dense<0.000000e+00> : vector<16x128xf32>
    %93 = tpu.matmul %91, %92, %cst_40 {dimension_numbers = #tpu.dot_dimension_numbers<[1], [0], [0], [1], [0, 0, 1, 1], [], []>} : vector<16x512xbf16>, vector<512x128xbf16>, vector<16x128xf32> -> vector<16x128xf32>
    %94 = arith.addf %90, %93 : vector<16x128xf32>
    %c0_41 = arith.constant 0 : index
    %c0_42 = arith.constant 0 : index
    %95 = vector.load %arg10[%c0_41, %c0_42] : memref<1x128xf32, #tpu.memory_space<vmem>>, vector<1x128xf32>
    %96 = vector.broadcast %95 : vector<1x128xf32> to vector<16x128xf32>
    %97 = arith.addf %94, %96 : vector<16x128xf32>
    %cst_43 = arith.constant 0.000000e+00 : f32
    %98 = vector.broadcast %cst_43 : f32 to vector<16x128xf32>
    %99 = arith.maximumf %97, %98 : vector<16x128xf32>
    %c0_44 = arith.constant 0 : index
    %c0_45 = arith.constant 0 : index
    %100 = vector.load %arg11[%c0_44, %c0_45] : memref<1x128xf32, #tpu.memory_space<vmem>>, vector<1x128xf32>
    %101 = vector.broadcast %100 : vector<1x128xf32> to vector<16x128xf32>
    %102 = arith.mulf %99, %101 : vector<16x128xf32>
    %cst_46 = arith.constant dense<0.000000e+00> : vector<16xf32>
    %103 = vector.multi_reduction <add>, %102, %cst_46 [1] : vector<16x128xf32> to vector<16xf32>
    %104 = vector.shape_cast %103 : vector<16xf32> to vector<16x1xf32>
    %105 = math.tanh %104 : vector<16x1xf32>
    %cst_47 = arith.constant 1.000000e+00 : f32
    %106 = vector.broadcast %cst_47 : f32 to vector<16x1xf32>
    %cst_48 = arith.constant 0.000000e+00 : f32
    %107 = vector.broadcast %cst_48 : f32 to vector<16x1xf32>
    %cst_49 = arith.constant 5.000000e-01 : f32
    %108 = vector.broadcast %cst_49 : f32 to vector<16x1xf32>
    %109 = arith.cmpf ogt, %106, %108 : vector<16x1xf32>
    %110 = arith.andi %8, %109 : vector<16x1xi1>
    %cst_50 = arith.constant -1.000000e+30 : f32
    %111 = vector.broadcast %cst_50 : f32 to vector<16x1xf32>
    %112 = arith.select %110, %105, %111 : vector<16x1xi1>, vector<16x1xf32>
    %cst_51 = arith.constant dense<0xFF800000> : vector<1xf32>
    %113 = vector.multi_reduction <maximumf>, %112, %cst_51 [0] : vector<16x1xf32> to vector<1xf32>
    %114 = vector.shape_cast %113 : vector<1xf32> to vector<1x1xf32>
    %115 = vector.broadcast %114 : vector<1x1xf32> to vector<16x1xf32>
    %116 = arith.cmpf oge, %112, %115 : vector<16x1xf32>
    %cst_52 = arith.constant 1.600000e+01 : f32
    %117 = vector.broadcast %cst_52 : f32 to vector<16x1xf32>
    %118 = arith.select %116, %3, %117 : vector<16x1xi1>, vector<16x1xf32>
    %cst_53 = arith.constant dense<0x7F800000> : vector<1xf32>
    %119 = vector.multi_reduction <minimumf>, %118, %cst_53 [0] : vector<16x1xf32> to vector<1xf32>
    %120 = vector.shape_cast %119 : vector<1xf32> to vector<1x1xf32>
    %121 = vector.broadcast %120 : vector<1x1xf32> to vector<16x1xf32>
    %122 = arith.cmpf oeq, %3, %121 : vector<16x1xf32>
    %123 = arith.extui %122 : vector<16x1xi1> to vector<16x1xi32>
    %124 = arith.sitofp %123 : vector<16x1xi32> to vector<16x1xf32>
    %125 = arith.addf %107, %124 : vector<16x1xf32>
    %cst_54 = arith.constant -1.000000e+30 : f32
    %126 = vector.broadcast %cst_54 : f32 to vector<16x1xf32>
    %127 = arith.select %122, %126, %112 : vector<16x1xi1>, vector<16x1xf32>
    %cst_55 = arith.constant dense<0xFF800000> : vector<1xf32>
    %128 = vector.multi_reduction <maximumf>, %127, %cst_55 [0] : vector<16x1xf32> to vector<1xf32>
    %129 = vector.shape_cast %128 : vector<1xf32> to vector<1x1xf32>
    %130 = vector.broadcast %129 : vector<1x1xf32> to vector<16x1xf32>
    %131 = arith.cmpf oge, %127, %130 : vector<16x1xf32>
    %cst_56 = arith.constant 1.600000e+01 : f32
    %132 = vector.broadcast %cst_56 : f32 to vector<16x1xf32>
    %133 = arith.select %131, %3, %132 : vector<16x1xi1>, vector<16x1xf32>
    %cst_57 = arith.constant dense<0x7F800000> : vector<1xf32>
    %134 = vector.multi_reduction <minimumf>, %133, %cst_57 [0] : vector<16x1xf32> to vector<1xf32>
    %135 = vector.shape_cast %134 : vector<1xf32> to vector<1x1xf32>
    %136 = vector.broadcast %135 : vector<1x1xf32> to vector<16x1xf32>
    %137 = arith.cmpf oeq, %3, %136 : vector<16x1xf32>
    %138 = arith.extui %137 : vector<16x1xi1> to vector<16x1xi32>
    %139 = arith.sitofp %138 : vector<16x1xi32> to vector<16x1xf32>
    %140 = arith.addf %125, %139 : vector<16x1xf32>
    %cst_58 = arith.constant -1.000000e+30 : f32
    %141 = vector.broadcast %cst_58 : f32 to vector<16x1xf32>
    %142 = arith.select %137, %141, %127 : vector<16x1xi1>, vector<16x1xf32>
    %cst_59 = arith.constant dense<0xFF800000> : vector<1xf32>
    %143 = vector.multi_reduction <maximumf>, %142, %cst_59 [0] : vector<16x1xf32> to vector<1xf32>
    %144 = vector.shape_cast %143 : vector<1xf32> to vector<1x1xf32>
    %145 = vector.broadcast %144 : vector<1x1xf32> to vector<16x1xf32>
    %146 = arith.cmpf oge, %142, %145 : vector<16x1xf32>
    %cst_60 = arith.constant 1.600000e+01 : f32
    %147 = vector.broadcast %cst_60 : f32 to vector<16x1xf32>
    %148 = arith.select %146, %3, %147 : vector<16x1xi1>, vector<16x1xf32>
    %cst_61 = arith.constant dense<0x7F800000> : vector<1xf32>
    %149 = vector.multi_reduction <minimumf>, %148, %cst_61 [0] : vector<16x1xf32> to vector<1xf32>
    %150 = vector.shape_cast %149 : vector<1xf32> to vector<1x1xf32>
    %151 = vector.broadcast %150 : vector<1x1xf32> to vector<16x1xf32>
    %152 = arith.cmpf oeq, %3, %151 : vector<16x1xf32>
    %153 = arith.extui %152 : vector<16x1xi1> to vector<16x1xi32>
    %154 = arith.sitofp %153 : vector<16x1xi32> to vector<16x1xf32>
    %155 = arith.addf %140, %154 : vector<16x1xf32>
    %cst_62 = arith.constant -1.000000e+30 : f32
    %156 = vector.broadcast %cst_62 : f32 to vector<16x1xf32>
    %157 = arith.select %152, %156, %142 : vector<16x1xi1>, vector<16x1xf32>
    %cst_63 = arith.constant dense<0xFF800000> : vector<1xf32>
    %158 = vector.multi_reduction <maximumf>, %157, %cst_63 [0] : vector<16x1xf32> to vector<1xf32>
    %159 = vector.shape_cast %158 : vector<1xf32> to vector<1x1xf32>
    %160 = vector.broadcast %159 : vector<1x1xf32> to vector<16x1xf32>
    %161 = arith.cmpf oge, %157, %160 : vector<16x1xf32>
    %cst_64 = arith.constant 1.600000e+01 : f32
    %162 = vector.broadcast %cst_64 : f32 to vector<16x1xf32>
    %163 = arith.select %161, %3, %162 : vector<16x1xi1>, vector<16x1xf32>
    %cst_65 = arith.constant dense<0x7F800000> : vector<1xf32>
    %164 = vector.multi_reduction <minimumf>, %163, %cst_65 [0] : vector<16x1xf32> to vector<1xf32>
    %165 = vector.shape_cast %164 : vector<1xf32> to vector<1x1xf32>
    %166 = vector.broadcast %165 : vector<1x1xf32> to vector<16x1xf32>
    %167 = arith.cmpf oeq, %3, %166 : vector<16x1xf32>
    %168 = arith.extui %167 : vector<16x1xi1> to vector<16x1xi32>
    %169 = arith.sitofp %168 : vector<16x1xi32> to vector<16x1xf32>
    %170 = arith.addf %155, %169 : vector<16x1xf32>
    %cst_66 = arith.constant -1.000000e+30 : f32
    %171 = vector.broadcast %cst_66 : f32 to vector<16x1xf32>
    %172 = arith.select %167, %171, %157 : vector<16x1xi1>, vector<16x1xf32>
    %cst_67 = arith.constant dense<0xFF800000> : vector<1xf32>
    %173 = vector.multi_reduction <maximumf>, %172, %cst_67 [0] : vector<16x1xf32> to vector<1xf32>
    %174 = vector.shape_cast %173 : vector<1xf32> to vector<1x1xf32>
    %175 = vector.broadcast %174 : vector<1x1xf32> to vector<16x1xf32>
    %176 = arith.cmpf oge, %172, %175 : vector<16x1xf32>
    %cst_68 = arith.constant 1.600000e+01 : f32
    %177 = vector.broadcast %cst_68 : f32 to vector<16x1xf32>
    %178 = arith.select %176, %3, %177 : vector<16x1xi1>, vector<16x1xf32>
    %cst_69 = arith.constant dense<0x7F800000> : vector<1xf32>
    %179 = vector.multi_reduction <minimumf>, %178, %cst_69 [0] : vector<16x1xf32> to vector<1xf32>
    %180 = vector.shape_cast %179 : vector<1xf32> to vector<1x1xf32>
    %181 = vector.broadcast %180 : vector<1x1xf32> to vector<16x1xf32>
    %182 = arith.cmpf oeq, %3, %181 : vector<16x1xf32>
    %183 = arith.extui %182 : vector<16x1xi1> to vector<16x1xi32>
    %184 = arith.sitofp %183 : vector<16x1xi32> to vector<16x1xf32>
    %185 = arith.addf %170, %184 : vector<16x1xf32>
    %cst_70 = arith.constant -1.000000e+30 : f32
    %186 = vector.broadcast %cst_70 : f32 to vector<16x1xf32>
    %187 = arith.select %182, %186, %172 : vector<16x1xi1>, vector<16x1xf32>
    %cst_71 = arith.constant dense<0xFF800000> : vector<1xf32>
    %188 = vector.multi_reduction <maximumf>, %187, %cst_71 [0] : vector<16x1xf32> to vector<1xf32>
    %189 = vector.shape_cast %188 : vector<1xf32> to vector<1x1xf32>
    %190 = vector.broadcast %189 : vector<1x1xf32> to vector<16x1xf32>
    %191 = arith.cmpf oge, %187, %190 : vector<16x1xf32>
    %cst_72 = arith.constant 1.600000e+01 : f32
    %192 = vector.broadcast %cst_72 : f32 to vector<16x1xf32>
    %193 = arith.select %191, %3, %192 : vector<16x1xi1>, vector<16x1xf32>
    %cst_73 = arith.constant dense<0x7F800000> : vector<1xf32>
    %194 = vector.multi_reduction <minimumf>, %193, %cst_73 [0] : vector<16x1xf32> to vector<1xf32>
    %195 = vector.shape_cast %194 : vector<1xf32> to vector<1x1xf32>
    %196 = vector.broadcast %195 : vector<1x1xf32> to vector<16x1xf32>
    %197 = arith.cmpf oeq, %3, %196 : vector<16x1xf32>
    %198 = arith.extui %197 : vector<16x1xi1> to vector<16x1xi32>
    %199 = arith.sitofp %198 : vector<16x1xi32> to vector<16x1xf32>
    %200 = arith.addf %185, %199 : vector<16x1xf32>
    %cst_74 = arith.constant -1.000000e+30 : f32
    %201 = vector.broadcast %cst_74 : f32 to vector<16x1xf32>
    %202 = arith.select %197, %201, %187 : vector<16x1xi1>, vector<16x1xf32>
    %cst_75 = arith.constant dense<0xFF800000> : vector<1xf32>
    %203 = vector.multi_reduction <maximumf>, %202, %cst_75 [0] : vector<16x1xf32> to vector<1xf32>
    %204 = vector.shape_cast %203 : vector<1xf32> to vector<1x1xf32>
    %205 = vector.broadcast %204 : vector<1x1xf32> to vector<16x1xf32>
    %206 = arith.cmpf oge, %202, %205 : vector<16x1xf32>
    %cst_76 = arith.constant 1.600000e+01 : f32
    %207 = vector.broadcast %cst_76 : f32 to vector<16x1xf32>
    %208 = arith.select %206, %3, %207 : vector<16x1xi1>, vector<16x1xf32>
    %cst_77 = arith.constant dense<0x7F800000> : vector<1xf32>
    %209 = vector.multi_reduction <minimumf>, %208, %cst_77 [0] : vector<16x1xf32> to vector<1xf32>
    %210 = vector.shape_cast %209 : vector<1xf32> to vector<1x1xf32>
    %211 = vector.broadcast %210 : vector<1x1xf32> to vector<16x1xf32>
    %212 = arith.cmpf oeq, %3, %211 : vector<16x1xf32>
    %213 = arith.extui %212 : vector<16x1xi1> to vector<16x1xi32>
    %214 = arith.sitofp %213 : vector<16x1xi32> to vector<16x1xf32>
    %215 = arith.addf %200, %214 : vector<16x1xf32>
    %cst_78 = arith.constant 5.000000e-01 : f32
    %216 = vector.broadcast %cst_78 : f32 to vector<16x1xf32>
    %217 = arith.cmpf ogt, %106, %216 : vector<16x1xf32>
    %218 = arith.andi %13, %217 : vector<16x1xi1>
    %cst_79 = arith.constant -1.000000e+30 : f32
    %219 = vector.broadcast %cst_79 : f32 to vector<16x1xf32>
    %220 = arith.select %218, %105, %219 : vector<16x1xi1>, vector<16x1xf32>
    %cst_80 = arith.constant dense<0xFF800000> : vector<1xf32>
    %221 = vector.multi_reduction <maximumf>, %220, %cst_80 [0] : vector<16x1xf32> to vector<1xf32>
    %222 = vector.shape_cast %221 : vector<1xf32> to vector<1x1xf32>
    %223 = vector.broadcast %222 : vector<1x1xf32> to vector<16x1xf32>
    %224 = arith.cmpf oge, %220, %223 : vector<16x1xf32>
    %cst_81 = arith.constant 1.600000e+01 : f32
    %225 = vector.broadcast %cst_81 : f32 to vector<16x1xf32>
    %226 = arith.select %224, %3, %225 : vector<16x1xi1>, vector<16x1xf32>
    %cst_82 = arith.constant dense<0x7F800000> : vector<1xf32>
    %227 = vector.multi_reduction <minimumf>, %226, %cst_82 [0] : vector<16x1xf32> to vector<1xf32>
    %228 = vector.shape_cast %227 : vector<1xf32> to vector<1x1xf32>
    %229 = vector.broadcast %228 : vector<1x1xf32> to vector<16x1xf32>
    %230 = arith.cmpf oeq, %3, %229 : vector<16x1xf32>
    %231 = arith.extui %230 : vector<16x1xi1> to vector<16x1xi32>
    %232 = arith.sitofp %231 : vector<16x1xi32> to vector<16x1xf32>
    %233 = arith.addf %215, %232 : vector<16x1xf32>
    %cst_83 = arith.constant -1.000000e+30 : f32
    %234 = vector.broadcast %cst_83 : f32 to vector<16x1xf32>
    %235 = arith.select %230, %234, %220 : vector<16x1xi1>, vector<16x1xf32>
    %cst_84 = arith.constant dense<0xFF800000> : vector<1xf32>
    %236 = vector.multi_reduction <maximumf>, %235, %cst_84 [0] : vector<16x1xf32> to vector<1xf32>
    %237 = vector.shape_cast %236 : vector<1xf32> to vector<1x1xf32>
    %238 = vector.broadcast %237 : vector<1x1xf32> to vector<16x1xf32>
    %239 = arith.cmpf oge, %235, %238 : vector<16x1xf32>
    %cst_85 = arith.constant 1.600000e+01 : f32
    %240 = vector.broadcast %cst_85 : f32 to vector<16x1xf32>
    %241 = arith.select %239, %3, %240 : vector<16x1xi1>, vector<16x1xf32>
    %cst_86 = arith.constant dense<0x7F800000> : vector<1xf32>
    %242 = vector.multi_reduction <minimumf>, %241, %cst_86 [0] : vector<16x1xf32> to vector<1xf32>
    %243 = vector.shape_cast %242 : vector<1xf32> to vector<1x1xf32>
    %244 = vector.broadcast %243 : vector<1x1xf32> to vector<16x1xf32>
    %245 = arith.cmpf oeq, %3, %244 : vector<16x1xf32>
    %246 = arith.extui %245 : vector<16x1xi1> to vector<16x1xi32>
    %247 = arith.sitofp %246 : vector<16x1xi32> to vector<16x1xf32>
    %248 = arith.addf %233, %247 : vector<16x1xf32>
    %cst_87 = arith.constant -1.000000e+30 : f32
    %249 = vector.broadcast %cst_87 : f32 to vector<16x1xf32>
    %250 = arith.select %245, %249, %235 : vector<16x1xi1>, vector<16x1xf32>
    %cst_88 = arith.constant dense<0xFF800000> : vector<1xf32>
    %251 = vector.multi_reduction <maximumf>, %250, %cst_88 [0] : vector<16x1xf32> to vector<1xf32>
    %252 = vector.shape_cast %251 : vector<1xf32> to vector<1x1xf32>
    %253 = vector.broadcast %252 : vector<1x1xf32> to vector<16x1xf32>
    %254 = arith.cmpf oge, %250, %253 : vector<16x1xf32>
    %cst_89 = arith.constant 1.600000e+01 : f32
    %255 = vector.broadcast %cst_89 : f32 to vector<16x1xf32>
    %256 = arith.select %254, %3, %255 : vector<16x1xi1>, vector<16x1xf32>
    %cst_90 = arith.constant dense<0x7F800000> : vector<1xf32>
    %257 = vector.multi_reduction <minimumf>, %256, %cst_90 [0] : vector<16x1xf32> to vector<1xf32>
    %258 = vector.shape_cast %257 : vector<1xf32> to vector<1x1xf32>
    %259 = vector.broadcast %258 : vector<1x1xf32> to vector<16x1xf32>
    %260 = arith.cmpf oeq, %3, %259 : vector<16x1xf32>
    %261 = arith.extui %260 : vector<16x1xi1> to vector<16x1xi32>
    %262 = arith.sitofp %261 : vector<16x1xi32> to vector<16x1xf32>
    %263 = arith.addf %248, %262 : vector<16x1xf32>
    %cst_91 = arith.constant -1.000000e+30 : f32
    %264 = vector.broadcast %cst_91 : f32 to vector<16x1xf32>
    %265 = arith.select %260, %264, %250 : vector<16x1xi1>, vector<16x1xf32>
    %cst_92 = arith.constant dense<0xFF800000> : vector<1xf32>
    %266 = vector.multi_reduction <maximumf>, %265, %cst_92 [0] : vector<16x1xf32> to vector<1xf32>
    %267 = vector.shape_cast %266 : vector<1xf32> to vector<1x1xf32>
    %268 = vector.broadcast %267 : vector<1x1xf32> to vector<16x1xf32>
    %269 = arith.cmpf oge, %265, %268 : vector<16x1xf32>
    %cst_93 = arith.constant 1.600000e+01 : f32
    %270 = vector.broadcast %cst_93 : f32 to vector<16x1xf32>
    %271 = arith.select %269, %3, %270 : vector<16x1xi1>, vector<16x1xf32>
    %cst_94 = arith.constant dense<0x7F800000> : vector<1xf32>
    %272 = vector.multi_reduction <minimumf>, %271, %cst_94 [0] : vector<16x1xf32> to vector<1xf32>
    %273 = vector.shape_cast %272 : vector<1xf32> to vector<1x1xf32>
    %274 = vector.broadcast %273 : vector<1x1xf32> to vector<16x1xf32>
    %275 = arith.cmpf oeq, %3, %274 : vector<16x1xf32>
    %276 = arith.extui %275 : vector<16x1xi1> to vector<16x1xi32>
    %277 = arith.sitofp %276 : vector<16x1xi32> to vector<16x1xf32>
    %278 = arith.addf %263, %277 : vector<16x1xf32>
    %cst_95 = arith.constant -1.000000e+30 : f32
    %279 = vector.broadcast %cst_95 : f32 to vector<16x1xf32>
    %280 = arith.select %275, %279, %265 : vector<16x1xi1>, vector<16x1xf32>
    %cst_96 = arith.constant dense<0xFF800000> : vector<1xf32>
    %281 = vector.multi_reduction <maximumf>, %280, %cst_96 [0] : vector<16x1xf32> to vector<1xf32>
    %282 = vector.shape_cast %281 : vector<1xf32> to vector<1x1xf32>
    %283 = vector.broadcast %282 : vector<1x1xf32> to vector<16x1xf32>
    %284 = arith.cmpf oge, %280, %283 : vector<16x1xf32>
    %cst_97 = arith.constant 1.600000e+01 : f32
    %285 = vector.broadcast %cst_97 : f32 to vector<16x1xf32>
    %286 = arith.select %284, %3, %285 : vector<16x1xi1>, vector<16x1xf32>
    %cst_98 = arith.constant dense<0x7F800000> : vector<1xf32>
    %287 = vector.multi_reduction <minimumf>, %286, %cst_98 [0] : vector<16x1xf32> to vector<1xf32>
    %288 = vector.shape_cast %287 : vector<1xf32> to vector<1x1xf32>
    %289 = vector.broadcast %288 : vector<1x1xf32> to vector<16x1xf32>
    %290 = arith.cmpf oeq, %3, %289 : vector<16x1xf32>
    %291 = arith.extui %290 : vector<16x1xi1> to vector<16x1xi32>
    %292 = arith.sitofp %291 : vector<16x1xi32> to vector<16x1xf32>
    %293 = arith.addf %278, %292 : vector<16x1xf32>
    %cst_99 = arith.constant -1.000000e+30 : f32
    %294 = vector.broadcast %cst_99 : f32 to vector<16x1xf32>
    %295 = arith.select %290, %294, %280 : vector<16x1xi1>, vector<16x1xf32>
    %cst_100 = arith.constant dense<0xFF800000> : vector<1xf32>
    %296 = vector.multi_reduction <maximumf>, %295, %cst_100 [0] : vector<16x1xf32> to vector<1xf32>
    %297 = vector.shape_cast %296 : vector<1xf32> to vector<1x1xf32>
    %298 = vector.broadcast %297 : vector<1x1xf32> to vector<16x1xf32>
    %299 = arith.cmpf oge, %295, %298 : vector<16x1xf32>
    %cst_101 = arith.constant 1.600000e+01 : f32
    %300 = vector.broadcast %cst_101 : f32 to vector<16x1xf32>
    %301 = arith.select %299, %3, %300 : vector<16x1xi1>, vector<16x1xf32>
    %cst_102 = arith.constant dense<0x7F800000> : vector<1xf32>
    %302 = vector.multi_reduction <minimumf>, %301, %cst_102 [0] : vector<16x1xf32> to vector<1xf32>
    %303 = vector.shape_cast %302 : vector<1xf32> to vector<1x1xf32>
    %304 = vector.broadcast %303 : vector<1x1xf32> to vector<16x1xf32>
    %305 = arith.cmpf oeq, %3, %304 : vector<16x1xf32>
    %306 = arith.extui %305 : vector<16x1xi1> to vector<16x1xi32>
    %307 = arith.sitofp %306 : vector<16x1xi32> to vector<16x1xf32>
    %308 = arith.addf %293, %307 : vector<16x1xf32>
    %cst_103 = arith.constant -1.000000e+30 : f32
    %309 = vector.broadcast %cst_103 : f32 to vector<16x1xf32>
    %310 = arith.select %305, %309, %295 : vector<16x1xi1>, vector<16x1xf32>
    %cst_104 = arith.constant dense<0xFF800000> : vector<1xf32>
    %311 = vector.multi_reduction <maximumf>, %310, %cst_104 [0] : vector<16x1xf32> to vector<1xf32>
    %312 = vector.shape_cast %311 : vector<1xf32> to vector<1x1xf32>
    %313 = vector.broadcast %312 : vector<1x1xf32> to vector<16x1xf32>
    %314 = arith.cmpf oge, %310, %313 : vector<16x1xf32>
    %cst_105 = arith.constant 1.600000e+01 : f32
    %315 = vector.broadcast %cst_105 : f32 to vector<16x1xf32>
    %316 = arith.select %314, %3, %315 : vector<16x1xi1>, vector<16x1xf32>
    %cst_106 = arith.constant dense<0x7F800000> : vector<1xf32>
    %317 = vector.multi_reduction <minimumf>, %316, %cst_106 [0] : vector<16x1xf32> to vector<1xf32>
    %318 = vector.shape_cast %317 : vector<1xf32> to vector<1x1xf32>
    %319 = vector.broadcast %318 : vector<1x1xf32> to vector<16x1xf32>
    %320 = arith.cmpf oeq, %3, %319 : vector<16x1xf32>
    %321 = arith.extui %320 : vector<16x1xi1> to vector<16x1xi32>
    %322 = arith.sitofp %321 : vector<16x1xi32> to vector<16x1xf32>
    %323 = arith.addf %308, %322 : vector<16x1xf32>
    %324 = vector.broadcast %105 : vector<16x1xf32> to vector<16x128xf32>
    %325 = arith.mulf %99, %324 : vector<16x128xf32>
    %326 = vector.broadcast %323 : vector<16x1xf32> to vector<16x128xf32>
    %327 = arith.mulf %325, %326 : vector<16x128xf32>
    %328 = vector.extract_strided_slice %327 {offsets = [0, 0], sizes = [8, 128], strides = [1, 1]} : vector<16x128xf32> to vector<8x128xf32>
    %329 = vector.extract_strided_slice %323 {offsets = [0, 0], sizes = [8, 1], strides = [1, 1]} : vector<16x1xf32> to vector<8x1xf32>
    %cst_107 = arith.constant 5.000000e-01 : f32
    %330 = vector.broadcast %cst_107 : f32 to vector<8x1xf32>
    %331 = arith.cmpf ogt, %329, %330 : vector<8x1xf32>
    %cst_108 = arith.constant -1.000000e+30 : f32
    %332 = vector.shape_cast %331 : vector<8x1xi1> to vector<8x1xi1>
    %333 = vector.broadcast %332 : vector<8x1xi1> to vector<8x128xi1>
    %334 = vector.broadcast %cst_108 : f32 to vector<8x128xf32>
    %335 = arith.select %333, %328, %334 : vector<8x128xi1>, vector<8x128xf32>
    %cst_109 = arith.constant dense<0xFF800000> : vector<128xf32>
    %336 = vector.multi_reduction <maximumf>, %335, %cst_109 [0] : vector<8x128xf32> to vector<128xf32>
    %337 = vector.shape_cast %336 : vector<128xf32> to vector<1x128xf32>
    %cst_110 = arith.constant dense<0.000000e+00> : vector<128xf32>
    %338 = vector.multi_reduction <add>, %328, %cst_110 [0] : vector<8x128xf32> to vector<128xf32>
    %339 = vector.shape_cast %338 : vector<128xf32> to vector<1x128xf32>
    %cst_111 = arith.constant 0.142857149 : f32
    %340 = vector.broadcast %cst_111 : f32 to vector<1x128xf32>
    %341 = arith.mulf %339, %340 : vector<1x128xf32>
    %342 = vector.extract_strided_slice %327 {offsets = [8, 0], sizes = [8, 128], strides = [1, 1]} : vector<16x128xf32> to vector<8x128xf32>
    %343 = vector.extract_strided_slice %323 {offsets = [8, 0], sizes = [8, 1], strides = [1, 1]} : vector<16x1xf32> to vector<8x1xf32>
    %cst_112 = arith.constant 5.000000e-01 : f32
    %344 = vector.broadcast %cst_112 : f32 to vector<8x1xf32>
    %345 = arith.cmpf ogt, %343, %344 : vector<8x1xf32>
    %cst_113 = arith.constant -1.000000e+30 : f32
    %346 = vector.shape_cast %345 : vector<8x1xi1> to vector<8x1xi1>
    %347 = vector.broadcast %346 : vector<8x1xi1> to vector<8x128xi1>
    %348 = vector.broadcast %cst_113 : f32 to vector<8x128xf32>
    %349 = arith.select %347, %342, %348 : vector<8x128xi1>, vector<8x128xf32>
    %cst_114 = arith.constant dense<0xFF800000> : vector<128xf32>
    %350 = vector.multi_reduction <maximumf>, %349, %cst_114 [0] : vector<8x128xf32> to vector<128xf32>
    %351 = vector.shape_cast %350 : vector<128xf32> to vector<1x128xf32>
    %cst_115 = arith.constant dense<0.000000e+00> : vector<128xf32>
    %352 = vector.multi_reduction <add>, %342, %cst_115 [0] : vector<8x128xf32> to vector<128xf32>
    %353 = vector.shape_cast %352 : vector<128xf32> to vector<1x128xf32>
    %cst_116 = arith.constant 0.142857149 : f32
    %354 = vector.broadcast %cst_116 : f32 to vector<1x128xf32>
    %355 = arith.mulf %353, %354 : vector<1x128xf32>
    %356 = tpu.concatenate %337, %351 in 0 : vector<1x128xf32>, vector<1x128xf32> -> vector<2x128xf32>
    %357 = tpu.concatenate %341, %355 in 0 : vector<1x128xf32>, vector<1x128xf32> -> vector<2x128xf32>
    %358 = arith.truncf %327 : vector<16x128xf32> to vector<16x128xbf16>
    %cst_117 = arith.constant dense<0.000000e+00> : vector<16x128xf32>
    %359 = tpu.matmul %0, %358, %cst_117 {dimension_numbers = #tpu.dot_dimension_numbers<[1], [0], [0], [1], [0, 0, 1, 1], [], []>} : vector<16x16xbf16>, vector<16x128xbf16>, vector<16x128xf32> -> vector<16x128xf32>
    %c0_118 = arith.constant 0 : index
    %c0_119 = arith.constant 0 : index
    %360 = vector.load %arg12[%c0_118, %c0_119] : memref<128x128xbf16, #tpu.memory_space<vmem>>, vector<128x128xbf16>
    %cst_120 = arith.constant dense<0.000000e+00> : vector<16x128xf32>
    %361 = tpu.matmul %358, %360, %cst_120 {dimension_numbers = #tpu.dot_dimension_numbers<[1], [0], [0], [1], [0, 0, 1, 1], [], []>} : vector<16x128xbf16>, vector<128x128xbf16>, vector<16x128xf32> -> vector<16x128xf32>
    %362 = arith.truncf %359 : vector<16x128xf32> to vector<16x128xbf16>
    %c0_121 = arith.constant 0 : index
    %c0_122 = arith.constant 0 : index
    %363 = vector.load %arg13[%c0_121, %c0_122] : memref<128x128xbf16, #tpu.memory_space<vmem>>, vector<128x128xbf16>
    %cst_123 = arith.constant dense<0.000000e+00> : vector<16x128xf32>
    %364 = tpu.matmul %362, %363, %cst_123 {dimension_numbers = #tpu.dot_dimension_numbers<[1], [0], [0], [1], [0, 0, 1, 1], [], []>} : vector<16x128xbf16>, vector<128x128xbf16>, vector<16x128xf32> -> vector<16x128xf32>
    %365 = arith.addf %361, %364 : vector<16x128xf32>
    %c0_124 = arith.constant 0 : index
    %c0_125 = arith.constant 0 : index
    %366 = vector.load %arg14[%c0_124, %c0_125] : memref<1x128xf32, #tpu.memory_space<vmem>>, vector<1x128xf32>
    %367 = vector.broadcast %366 : vector<1x128xf32> to vector<16x128xf32>
    %368 = arith.addf %365, %367 : vector<16x128xf32>
    %cst_126 = arith.constant 0.000000e+00 : f32
    %369 = vector.broadcast %cst_126 : f32 to vector<16x128xf32>
    %370 = arith.maximumf %368, %369 : vector<16x128xf32>
    %c0_127 = arith.constant 0 : index
    %c0_128 = arith.constant 0 : index
    %371 = vector.load %arg15[%c0_127, %c0_128] : memref<1x128xf32, #tpu.memory_space<vmem>>, vector<1x128xf32>
    %372 = vector.broadcast %371 : vector<1x128xf32> to vector<16x128xf32>
    %373 = arith.mulf %370, %372 : vector<16x128xf32>
    %cst_129 = arith.constant dense<0.000000e+00> : vector<16xf32>
    %374 = vector.multi_reduction <add>, %373, %cst_129 [1] : vector<16x128xf32> to vector<16xf32>
    %375 = vector.shape_cast %374 : vector<16xf32> to vector<16x1xf32>
    %376 = math.tanh %375 : vector<16x1xf32>
    %cst_130 = arith.constant 0.000000e+00 : f32
    %377 = vector.broadcast %cst_130 : f32 to vector<16x1xf32>
    %cst_131 = arith.constant 5.000000e-01 : f32
    %378 = vector.broadcast %cst_131 : f32 to vector<16x1xf32>
    %379 = arith.cmpf ogt, %323, %378 : vector<16x1xf32>
    %380 = arith.andi %8, %379 : vector<16x1xi1>
    %cst_132 = arith.constant -1.000000e+30 : f32
    %381 = vector.broadcast %cst_132 : f32 to vector<16x1xf32>
    %382 = arith.select %380, %376, %381 : vector<16x1xi1>, vector<16x1xf32>
    %cst_133 = arith.constant dense<0xFF800000> : vector<1xf32>
    %383 = vector.multi_reduction <maximumf>, %382, %cst_133 [0] : vector<16x1xf32> to vector<1xf32>
    %384 = vector.shape_cast %383 : vector<1xf32> to vector<1x1xf32>
    %385 = vector.broadcast %384 : vector<1x1xf32> to vector<16x1xf32>
    %386 = arith.cmpf oge, %382, %385 : vector<16x1xf32>
    %cst_134 = arith.constant 1.600000e+01 : f32
    %387 = vector.broadcast %cst_134 : f32 to vector<16x1xf32>
    %388 = arith.select %386, %3, %387 : vector<16x1xi1>, vector<16x1xf32>
    %cst_135 = arith.constant dense<0x7F800000> : vector<1xf32>
    %389 = vector.multi_reduction <minimumf>, %388, %cst_135 [0] : vector<16x1xf32> to vector<1xf32>
    %390 = vector.shape_cast %389 : vector<1xf32> to vector<1x1xf32>
    %391 = vector.broadcast %390 : vector<1x1xf32> to vector<16x1xf32>
    %392 = arith.cmpf oeq, %3, %391 : vector<16x1xf32>
    %393 = arith.extui %392 : vector<16x1xi1> to vector<16x1xi32>
    %394 = arith.sitofp %393 : vector<16x1xi32> to vector<16x1xf32>
    %395 = arith.addf %377, %394 : vector<16x1xf32>
    %cst_136 = arith.constant -1.000000e+30 : f32
    %396 = vector.broadcast %cst_136 : f32 to vector<16x1xf32>
    %397 = arith.select %392, %396, %382 : vector<16x1xi1>, vector<16x1xf32>
    %cst_137 = arith.constant dense<0xFF800000> : vector<1xf32>
    %398 = vector.multi_reduction <maximumf>, %397, %cst_137 [0] : vector<16x1xf32> to vector<1xf32>
    %399 = vector.shape_cast %398 : vector<1xf32> to vector<1x1xf32>
    %400 = vector.broadcast %399 : vector<1x1xf32> to vector<16x1xf32>
    %401 = arith.cmpf oge, %397, %400 : vector<16x1xf32>
    %cst_138 = arith.constant 1.600000e+01 : f32
    %402 = vector.broadcast %cst_138 : f32 to vector<16x1xf32>
    %403 = arith.select %401, %3, %402 : vector<16x1xi1>, vector<16x1xf32>
    %cst_139 = arith.constant dense<0x7F800000> : vector<1xf32>
    %404 = vector.multi_reduction <minimumf>, %403, %cst_139 [0] : vector<16x1xf32> to vector<1xf32>
    %405 = vector.shape_cast %404 : vector<1xf32> to vector<1x1xf32>
    %406 = vector.broadcast %405 : vector<1x1xf32> to vector<16x1xf32>
    %407 = arith.cmpf oeq, %3, %406 : vector<16x1xf32>
    %408 = arith.extui %407 : vector<16x1xi1> to vector<16x1xi32>
    %409 = arith.sitofp %408 : vector<16x1xi32> to vector<16x1xf32>
    %410 = arith.addf %395, %409 : vector<16x1xf32>
    %cst_140 = arith.constant -1.000000e+30 : f32
    %411 = vector.broadcast %cst_140 : f32 to vector<16x1xf32>
    %412 = arith.select %407, %411, %397 : vector<16x1xi1>, vector<16x1xf32>
    %cst_141 = arith.constant dense<0xFF800000> : vector<1xf32>
    %413 = vector.multi_reduction <maximumf>, %412, %cst_141 [0] : vector<16x1xf32> to vector<1xf32>
    %414 = vector.shape_cast %413 : vector<1xf32> to vector<1x1xf32>
    %415 = vector.broadcast %414 : vector<1x1xf32> to vector<16x1xf32>
    %416 = arith.cmpf oge, %412, %415 : vector<16x1xf32>
    %cst_142 = arith.constant 1.600000e+01 : f32
    %417 = vector.broadcast %cst_142 : f32 to vector<16x1xf32>
    %418 = arith.select %416, %3, %417 : vector<16x1xi1>, vector<16x1xf32>
    %cst_143 = arith.constant dense<0x7F800000> : vector<1xf32>
    %419 = vector.multi_reduction <minimumf>, %418, %cst_143 [0] : vector<16x1xf32> to vector<1xf32>
    %420 = vector.shape_cast %419 : vector<1xf32> to vector<1x1xf32>
    %421 = vector.broadcast %420 : vector<1x1xf32> to vector<16x1xf32>
    %422 = arith.cmpf oeq, %3, %421 : vector<16x1xf32>
    %423 = arith.extui %422 : vector<16x1xi1> to vector<16x1xi32>
    %424 = arith.sitofp %423 : vector<16x1xi32> to vector<16x1xf32>
    %425 = arith.addf %410, %424 : vector<16x1xf32>
    %cst_144 = arith.constant -1.000000e+30 : f32
    %426 = vector.broadcast %cst_144 : f32 to vector<16x1xf32>
    %427 = arith.select %422, %426, %412 : vector<16x1xi1>, vector<16x1xf32>
    %cst_145 = arith.constant dense<0xFF800000> : vector<1xf32>
    %428 = vector.multi_reduction <maximumf>, %427, %cst_145 [0] : vector<16x1xf32> to vector<1xf32>
    %429 = vector.shape_cast %428 : vector<1xf32> to vector<1x1xf32>
    %430 = vector.broadcast %429 : vector<1x1xf32> to vector<16x1xf32>
    %431 = arith.cmpf oge, %427, %430 : vector<16x1xf32>
    %cst_146 = arith.constant 1.600000e+01 : f32
    %432 = vector.broadcast %cst_146 : f32 to vector<16x1xf32>
    %433 = arith.select %431, %3, %432 : vector<16x1xi1>, vector<16x1xf32>
    %cst_147 = arith.constant dense<0x7F800000> : vector<1xf32>
    %434 = vector.multi_reduction <minimumf>, %433, %cst_147 [0] : vector<16x1xf32> to vector<1xf32>
    %435 = vector.shape_cast %434 : vector<1xf32> to vector<1x1xf32>
    %436 = vector.broadcast %435 : vector<1x1xf32> to vector<16x1xf32>
    %437 = arith.cmpf oeq, %3, %436 : vector<16x1xf32>
    %438 = arith.extui %437 : vector<16x1xi1> to vector<16x1xi32>
    %439 = arith.sitofp %438 : vector<16x1xi32> to vector<16x1xf32>
    %440 = arith.addf %425, %439 : vector<16x1xf32>
    %cst_148 = arith.constant -1.000000e+30 : f32
    %441 = vector.broadcast %cst_148 : f32 to vector<16x1xf32>
    %442 = arith.select %437, %441, %427 : vector<16x1xi1>, vector<16x1xf32>
    %cst_149 = arith.constant dense<0xFF800000> : vector<1xf32>
    %443 = vector.multi_reduction <maximumf>, %442, %cst_149 [0] : vector<16x1xf32> to vector<1xf32>
    %444 = vector.shape_cast %443 : vector<1xf32> to vector<1x1xf32>
    %445 = vector.broadcast %444 : vector<1x1xf32> to vector<16x1xf32>
    %446 = arith.cmpf oge, %442, %445 : vector<16x1xf32>
    %cst_150 = arith.constant 1.600000e+01 : f32
    %447 = vector.broadcast %cst_150 : f32 to vector<16x1xf32>
    %448 = arith.select %446, %3, %447 : vector<16x1xi1>, vector<16x1xf32>
    %cst_151 = arith.constant dense<0x7F800000> : vector<1xf32>
    %449 = vector.multi_reduction <minimumf>, %448, %cst_151 [0] : vector<16x1xf32> to vector<1xf32>
    %450 = vector.shape_cast %449 : vector<1xf32> to vector<1x1xf32>
    %451 = vector.broadcast %450 : vector<1x1xf32> to vector<16x1xf32>
    %452 = arith.cmpf oeq, %3, %451 : vector<16x1xf32>
    %453 = arith.extui %452 : vector<16x1xi1> to vector<16x1xi32>
    %454 = arith.sitofp %453 : vector<16x1xi32> to vector<16x1xf32>
    %455 = arith.addf %440, %454 : vector<16x1xf32>
    %cst_152 = arith.constant -1.000000e+30 : f32
    %456 = vector.broadcast %cst_152 : f32 to vector<16x1xf32>
    %457 = arith.select %452, %456, %442 : vector<16x1xi1>, vector<16x1xf32>
    %cst_153 = arith.constant dense<0xFF800000> : vector<1xf32>
    %458 = vector.multi_reduction <maximumf>, %457, %cst_153 [0] : vector<16x1xf32> to vector<1xf32>
    %459 = vector.shape_cast %458 : vector<1xf32> to vector<1x1xf32>
    %460 = vector.broadcast %459 : vector<1x1xf32> to vector<16x1xf32>
    %461 = arith.cmpf oge, %457, %460 : vector<16x1xf32>
    %cst_154 = arith.constant 1.600000e+01 : f32
    %462 = vector.broadcast %cst_154 : f32 to vector<16x1xf32>
    %463 = arith.select %461, %3, %462 : vector<16x1xi1>, vector<16x1xf32>
    %cst_155 = arith.constant dense<0x7F800000> : vector<1xf32>
    %464 = vector.multi_reduction <minimumf>, %463, %cst_155 [0] : vector<16x1xf32> to vector<1xf32>
    %465 = vector.shape_cast %464 : vector<1xf32> to vector<1x1xf32>
    %466 = vector.broadcast %465 : vector<1x1xf32> to vector<16x1xf32>
    %467 = arith.cmpf oeq, %3, %466 : vector<16x1xf32>
    %468 = arith.extui %467 : vector<16x1xi1> to vector<16x1xi32>
    %469 = arith.sitofp %468 : vector<16x1xi32> to vector<16x1xf32>
    %470 = arith.addf %455, %469 : vector<16x1xf32>
    %cst_156 = arith.constant 5.000000e-01 : f32
    %471 = vector.broadcast %cst_156 : f32 to vector<16x1xf32>
    %472 = arith.cmpf ogt, %323, %471 : vector<16x1xf32>
    %473 = arith.andi %13, %472 : vector<16x1xi1>
    %cst_157 = arith.constant -1.000000e+30 : f32
    %474 = vector.broadcast %cst_157 : f32 to vector<16x1xf32>
    %475 = arith.select %473, %376, %474 : vector<16x1xi1>, vector<16x1xf32>
    %cst_158 = arith.constant dense<0xFF800000> : vector<1xf32>
    %476 = vector.multi_reduction <maximumf>, %475, %cst_158 [0] : vector<16x1xf32> to vector<1xf32>
    %477 = vector.shape_cast %476 : vector<1xf32> to vector<1x1xf32>
    %478 = vector.broadcast %477 : vector<1x1xf32> to vector<16x1xf32>
    %479 = arith.cmpf oge, %475, %478 : vector<16x1xf32>
    %cst_159 = arith.constant 1.600000e+01 : f32
    %480 = vector.broadcast %cst_159 : f32 to vector<16x1xf32>
    %481 = arith.select %479, %3, %480 : vector<16x1xi1>, vector<16x1xf32>
    %cst_160 = arith.constant dense<0x7F800000> : vector<1xf32>
    %482 = vector.multi_reduction <minimumf>, %481, %cst_160 [0] : vector<16x1xf32> to vector<1xf32>
    %483 = vector.shape_cast %482 : vector<1xf32> to vector<1x1xf32>
    %484 = vector.broadcast %483 : vector<1x1xf32> to vector<16x1xf32>
    %485 = arith.cmpf oeq, %3, %484 : vector<16x1xf32>
    %486 = arith.extui %485 : vector<16x1xi1> to vector<16x1xi32>
    %487 = arith.sitofp %486 : vector<16x1xi32> to vector<16x1xf32>
    %488 = arith.addf %470, %487 : vector<16x1xf32>
    %cst_161 = arith.constant -1.000000e+30 : f32
    %489 = vector.broadcast %cst_161 : f32 to vector<16x1xf32>
    %490 = arith.select %485, %489, %475 : vector<16x1xi1>, vector<16x1xf32>
    %cst_162 = arith.constant dense<0xFF800000> : vector<1xf32>
    %491 = vector.multi_reduction <maximumf>, %490, %cst_162 [0] : vector<16x1xf32> to vector<1xf32>
    %492 = vector.shape_cast %491 : vector<1xf32> to vector<1x1xf32>
    %493 = vector.broadcast %492 : vector<1x1xf32> to vector<16x1xf32>
    %494 = arith.cmpf oge, %490, %493 : vector<16x1xf32>
    %cst_163 = arith.constant 1.600000e+01 : f32
    %495 = vector.broadcast %cst_163 : f32 to vector<16x1xf32>
    %496 = arith.select %494, %3, %495 : vector<16x1xi1>, vector<16x1xf32>
    %cst_164 = arith.constant dense<0x7F800000> : vector<1xf32>
    %497 = vector.multi_reduction <minimumf>, %496, %cst_164 [0] : vector<16x1xf32> to vector<1xf32>
    %498 = vector.shape_cast %497 : vector<1xf32> to vector<1x1xf32>
    %499 = vector.broadcast %498 : vector<1x1xf32> to vector<16x1xf32>
    %500 = arith.cmpf oeq, %3, %499 : vector<16x1xf32>
    %501 = arith.extui %500 : vector<16x1xi1> to vector<16x1xi32>
    %502 = arith.sitofp %501 : vector<16x1xi32> to vector<16x1xf32>
    %503 = arith.addf %488, %502 : vector<16x1xf32>
    %cst_165 = arith.constant -1.000000e+30 : f32
    %504 = vector.broadcast %cst_165 : f32 to vector<16x1xf32>
    %505 = arith.select %500, %504, %490 : vector<16x1xi1>, vector<16x1xf32>
    %cst_166 = arith.constant dense<0xFF800000> : vector<1xf32>
    %506 = vector.multi_reduction <maximumf>, %505, %cst_166 [0] : vector<16x1xf32> to vector<1xf32>
    %507 = vector.shape_cast %506 : vector<1xf32> to vector<1x1xf32>
    %508 = vector.broadcast %507 : vector<1x1xf32> to vector<16x1xf32>
    %509 = arith.cmpf oge, %505, %508 : vector<16x1xf32>
    %cst_167 = arith.constant 1.600000e+01 : f32
    %510 = vector.broadcast %cst_167 : f32 to vector<16x1xf32>
    %511 = arith.select %509, %3, %510 : vector<16x1xi1>, vector<16x1xf32>
    %cst_168 = arith.constant dense<0x7F800000> : vector<1xf32>
    %512 = vector.multi_reduction <minimumf>, %511, %cst_168 [0] : vector<16x1xf32> to vector<1xf32>
    %513 = vector.shape_cast %512 : vector<1xf32> to vector<1x1xf32>
    %514 = vector.broadcast %513 : vector<1x1xf32> to vector<16x1xf32>
    %515 = arith.cmpf oeq, %3, %514 : vector<16x1xf32>
    %516 = arith.extui %515 : vector<16x1xi1> to vector<16x1xi32>
    %517 = arith.sitofp %516 : vector<16x1xi32> to vector<16x1xf32>
    %518 = arith.addf %503, %517 : vector<16x1xf32>
    %cst_169 = arith.constant -1.000000e+30 : f32
    %519 = vector.broadcast %cst_169 : f32 to vector<16x1xf32>
    %520 = arith.select %515, %519, %505 : vector<16x1xi1>, vector<16x1xf32>
    %cst_170 = arith.constant dense<0xFF800000> : vector<1xf32>
    %521 = vector.multi_reduction <maximumf>, %520, %cst_170 [0] : vector<16x1xf32> to vector<1xf32>
    %522 = vector.shape_cast %521 : vector<1xf32> to vector<1x1xf32>
    %523 = vector.broadcast %522 : vector<1x1xf32> to vector<16x1xf32>
    %524 = arith.cmpf oge, %520, %523 : vector<16x1xf32>
    %cst_171 = arith.constant 1.600000e+01 : f32
    %525 = vector.broadcast %cst_171 : f32 to vector<16x1xf32>
    %526 = arith.select %524, %3, %525 : vector<16x1xi1>, vector<16x1xf32>
    %cst_172 = arith.constant dense<0x7F800000> : vector<1xf32>
    %527 = vector.multi_reduction <minimumf>, %526, %cst_172 [0] : vector<16x1xf32> to vector<1xf32>
    %528 = vector.shape_cast %527 : vector<1xf32> to vector<1x1xf32>
    %529 = vector.broadcast %528 : vector<1x1xf32> to vector<16x1xf32>
    %530 = arith.cmpf oeq, %3, %529 : vector<16x1xf32>
    %531 = arith.extui %530 : vector<16x1xi1> to vector<16x1xi32>
    %532 = arith.sitofp %531 : vector<16x1xi32> to vector<16x1xf32>
    %533 = arith.addf %518, %532 : vector<16x1xf32>
    %cst_173 = arith.constant -1.000000e+30 : f32
    %534 = vector.broadcast %cst_173 : f32 to vector<16x1xf32>
    %535 = arith.select %530, %534, %520 : vector<16x1xi1>, vector<16x1xf32>
    %cst_174 = arith.constant dense<0xFF800000> : vector<1xf32>
    %536 = vector.multi_reduction <maximumf>, %535, %cst_174 [0] : vector<16x1xf32> to vector<1xf32>
    %537 = vector.shape_cast %536 : vector<1xf32> to vector<1x1xf32>
    %538 = vector.broadcast %537 : vector<1x1xf32> to vector<16x1xf32>
    %539 = arith.cmpf oge, %535, %538 : vector<16x1xf32>
    %cst_175 = arith.constant 1.600000e+01 : f32
    %540 = vector.broadcast %cst_175 : f32 to vector<16x1xf32>
    %541 = arith.select %539, %3, %540 : vector<16x1xi1>, vector<16x1xf32>
    %cst_176 = arith.constant dense<0x7F800000> : vector<1xf32>
    %542 = vector.multi_reduction <minimumf>, %541, %cst_176 [0] : vector<16x1xf32> to vector<1xf32>
    %543 = vector.shape_cast %542 : vector<1xf32> to vector<1x1xf32>
    %544 = vector.broadcast %543 : vector<1x1xf32> to vector<16x1xf32>
    %545 = arith.cmpf oeq, %3, %544 : vector<16x1xf32>
    %546 = arith.extui %545 : vector<16x1xi1> to vector<16x1xi32>
    %547 = arith.sitofp %546 : vector<16x1xi32> to vector<16x1xf32>
    %548 = arith.addf %533, %547 : vector<16x1xf32>
    %cst_177 = arith.constant -1.000000e+30 : f32
    %549 = vector.broadcast %cst_177 : f32 to vector<16x1xf32>
    %550 = arith.select %545, %549, %535 : vector<16x1xi1>, vector<16x1xf32>
    %cst_178 = arith.constant dense<0xFF800000> : vector<1xf32>
    %551 = vector.multi_reduction <maximumf>, %550, %cst_178 [0] : vector<16x1xf32> to vector<1xf32>
    %552 = vector.shape_cast %551 : vector<1xf32> to vector<1x1xf32>
    %553 = vector.broadcast %552 : vector<1x1xf32> to vector<16x1xf32>
    %554 = arith.cmpf oge, %550, %553 : vector<16x1xf32>
    %cst_179 = arith.constant 1.600000e+01 : f32
    %555 = vector.broadcast %cst_179 : f32 to vector<16x1xf32>
    %556 = arith.select %554, %3, %555 : vector<16x1xi1>, vector<16x1xf32>
    %cst_180 = arith.constant dense<0x7F800000> : vector<1xf32>
    %557 = vector.multi_reduction <minimumf>, %556, %cst_180 [0] : vector<16x1xf32> to vector<1xf32>
    %558 = vector.shape_cast %557 : vector<1xf32> to vector<1x1xf32>
    %559 = vector.broadcast %558 : vector<1x1xf32> to vector<16x1xf32>
    %560 = arith.cmpf oeq, %3, %559 : vector<16x1xf32>
    %561 = arith.extui %560 : vector<16x1xi1> to vector<16x1xi32>
    %562 = arith.sitofp %561 : vector<16x1xi32> to vector<16x1xf32>
    %563 = arith.addf %548, %562 : vector<16x1xf32>
    %564 = vector.broadcast %376 : vector<16x1xf32> to vector<16x128xf32>
    %565 = arith.mulf %370, %564 : vector<16x128xf32>
    %566 = vector.broadcast %563 : vector<16x1xf32> to vector<16x128xf32>
    %567 = arith.mulf %565, %566 : vector<16x128xf32>
    %568 = vector.extract_strided_slice %567 {offsets = [0, 0], sizes = [8, 128], strides = [1, 1]} : vector<16x128xf32> to vector<8x128xf32>
    %569 = vector.extract_strided_slice %563 {offsets = [0, 0], sizes = [8, 1], strides = [1, 1]} : vector<16x1xf32> to vector<8x1xf32>
    %cst_181 = arith.constant 5.000000e-01 : f32
    %570 = vector.broadcast %cst_181 : f32 to vector<8x1xf32>
    %571 = arith.cmpf ogt, %569, %570 : vector<8x1xf32>
    %cst_182 = arith.constant -1.000000e+30 : f32
    %572 = vector.shape_cast %571 : vector<8x1xi1> to vector<8x1xi1>
    %573 = vector.broadcast %572 : vector<8x1xi1> to vector<8x128xi1>
    %574 = vector.broadcast %cst_182 : f32 to vector<8x128xf32>
    %575 = arith.select %573, %568, %574 : vector<8x128xi1>, vector<8x128xf32>
    %cst_183 = arith.constant dense<0xFF800000> : vector<128xf32>
    %576 = vector.multi_reduction <maximumf>, %575, %cst_183 [0] : vector<8x128xf32> to vector<128xf32>
    %577 = vector.shape_cast %576 : vector<128xf32> to vector<1x128xf32>
    %cst_184 = arith.constant dense<0.000000e+00> : vector<128xf32>
    %578 = vector.multi_reduction <add>, %568, %cst_184 [0] : vector<8x128xf32> to vector<128xf32>
    %579 = vector.shape_cast %578 : vector<128xf32> to vector<1x128xf32>
    %cst_185 = arith.constant 0.166666672 : f32
    %580 = vector.broadcast %cst_185 : f32 to vector<1x128xf32>
    %581 = arith.mulf %579, %580 : vector<1x128xf32>
    %582 = vector.extract_strided_slice %567 {offsets = [8, 0], sizes = [8, 128], strides = [1, 1]} : vector<16x128xf32> to vector<8x128xf32>
    %583 = vector.extract_strided_slice %563 {offsets = [8, 0], sizes = [8, 1], strides = [1, 1]} : vector<16x1xf32> to vector<8x1xf32>
    %cst_186 = arith.constant 5.000000e-01 : f32
    %584 = vector.broadcast %cst_186 : f32 to vector<8x1xf32>
    %585 = arith.cmpf ogt, %583, %584 : vector<8x1xf32>
    %cst_187 = arith.constant -1.000000e+30 : f32
    %586 = vector.shape_cast %585 : vector<8x1xi1> to vector<8x1xi1>
    %587 = vector.broadcast %586 : vector<8x1xi1> to vector<8x128xi1>
    %588 = vector.broadcast %cst_187 : f32 to vector<8x128xf32>
    %589 = arith.select %587, %582, %588 : vector<8x128xi1>, vector<8x128xf32>
    %cst_188 = arith.constant dense<0xFF800000> : vector<128xf32>
    %590 = vector.multi_reduction <maximumf>, %589, %cst_188 [0] : vector<8x128xf32> to vector<128xf32>
    %591 = vector.shape_cast %590 : vector<128xf32> to vector<1x128xf32>
    %cst_189 = arith.constant dense<0.000000e+00> : vector<128xf32>
    %592 = vector.multi_reduction <add>, %582, %cst_189 [0] : vector<8x128xf32> to vector<128xf32>
    %593 = vector.shape_cast %592 : vector<128xf32> to vector<1x128xf32>
    %cst_190 = arith.constant 0.166666672 : f32
    %594 = vector.broadcast %cst_190 : f32 to vector<1x128xf32>
    %595 = arith.mulf %593, %594 : vector<1x128xf32>
    %596 = tpu.concatenate %577, %591 in 0 : vector<1x128xf32>, vector<1x128xf32> -> vector<2x128xf32>
    %597 = tpu.concatenate %581, %595 in 0 : vector<1x128xf32>, vector<1x128xf32> -> vector<2x128xf32>
    %598 = arith.truncf %567 : vector<16x128xf32> to vector<16x128xbf16>
    %cst_191 = arith.constant dense<0.000000e+00> : vector<16x128xf32>
    %599 = tpu.matmul %0, %598, %cst_191 {dimension_numbers = #tpu.dot_dimension_numbers<[1], [0], [0], [1], [0, 0, 1, 1], [], []>} : vector<16x16xbf16>, vector<16x128xbf16>, vector<16x128xf32> -> vector<16x128xf32>
    %c0_192 = arith.constant 0 : index
    %c0_193 = arith.constant 0 : index
    %600 = vector.load %arg16[%c0_192, %c0_193] : memref<128x128xbf16, #tpu.memory_space<vmem>>, vector<128x128xbf16>
    %cst_194 = arith.constant dense<0.000000e+00> : vector<16x128xf32>
    %601 = tpu.matmul %598, %600, %cst_194 {dimension_numbers = #tpu.dot_dimension_numbers<[1], [0], [0], [1], [0, 0, 1, 1], [], []>} : vector<16x128xbf16>, vector<128x128xbf16>, vector<16x128xf32> -> vector<16x128xf32>
    %602 = arith.truncf %599 : vector<16x128xf32> to vector<16x128xbf16>
    %c0_195 = arith.constant 0 : index
    %c0_196 = arith.constant 0 : index
    %603 = vector.load %arg17[%c0_195, %c0_196] : memref<128x128xbf16, #tpu.memory_space<vmem>>, vector<128x128xbf16>
    %cst_197 = arith.constant dense<0.000000e+00> : vector<16x128xf32>
    %604 = tpu.matmul %602, %603, %cst_197 {dimension_numbers = #tpu.dot_dimension_numbers<[1], [0], [0], [1], [0, 0, 1, 1], [], []>} : vector<16x128xbf16>, vector<128x128xbf16>, vector<16x128xf32> -> vector<16x128xf32>
    %605 = arith.addf %601, %604 : vector<16x128xf32>
    %c0_198 = arith.constant 0 : index
    %c0_199 = arith.constant 0 : index
    %606 = vector.load %arg18[%c0_198, %c0_199] : memref<1x128xf32, #tpu.memory_space<vmem>>, vector<1x128xf32>
    %607 = vector.broadcast %606 : vector<1x128xf32> to vector<16x128xf32>
    %608 = arith.addf %605, %607 : vector<16x128xf32>
    %cst_200 = arith.constant 0.000000e+00 : f32
    %609 = vector.broadcast %cst_200 : f32 to vector<16x128xf32>
    %610 = arith.maximumf %608, %609 : vector<16x128xf32>
    %c0_201 = arith.constant 0 : index
    %c0_202 = arith.constant 0 : index
    %611 = vector.load %arg19[%c0_201, %c0_202] : memref<1x128xf32, #tpu.memory_space<vmem>>, vector<1x128xf32>
    %612 = vector.broadcast %611 : vector<1x128xf32> to vector<16x128xf32>
    %613 = arith.mulf %610, %612 : vector<16x128xf32>
    %cst_203 = arith.constant dense<0.000000e+00> : vector<16xf32>
    %614 = vector.multi_reduction <add>, %613, %cst_203 [1] : vector<16x128xf32> to vector<16xf32>
    %615 = vector.shape_cast %614 : vector<16xf32> to vector<16x1xf32>
    %616 = math.tanh %615 : vector<16x1xf32>
    %cst_204 = arith.constant 0.000000e+00 : f32
    %617 = vector.broadcast %cst_204 : f32 to vector<16x1xf32>
    %cst_205 = arith.constant 5.000000e-01 : f32
    %618 = vector.broadcast %cst_205 : f32 to vector<16x1xf32>
    %619 = arith.cmpf ogt, %563, %618 : vector<16x1xf32>
    %620 = arith.andi %8, %619 : vector<16x1xi1>
    %cst_206 = arith.constant -1.000000e+30 : f32
    %621 = vector.broadcast %cst_206 : f32 to vector<16x1xf32>
    %622 = arith.select %620, %616, %621 : vector<16x1xi1>, vector<16x1xf32>
    %cst_207 = arith.constant dense<0xFF800000> : vector<1xf32>
    %623 = vector.multi_reduction <maximumf>, %622, %cst_207 [0] : vector<16x1xf32> to vector<1xf32>
    %624 = vector.shape_cast %623 : vector<1xf32> to vector<1x1xf32>
    %625 = vector.broadcast %624 : vector<1x1xf32> to vector<16x1xf32>
    %626 = arith.cmpf oge, %622, %625 : vector<16x1xf32>
    %cst_208 = arith.constant 1.600000e+01 : f32
    %627 = vector.broadcast %cst_208 : f32 to vector<16x1xf32>
    %628 = arith.select %626, %3, %627 : vector<16x1xi1>, vector<16x1xf32>
    %cst_209 = arith.constant dense<0x7F800000> : vector<1xf32>
    %629 = vector.multi_reduction <minimumf>, %628, %cst_209 [0] : vector<16x1xf32> to vector<1xf32>
    %630 = vector.shape_cast %629 : vector<1xf32> to vector<1x1xf32>
    %631 = vector.broadcast %630 : vector<1x1xf32> to vector<16x1xf32>
    %632 = arith.cmpf oeq, %3, %631 : vector<16x1xf32>
    %633 = arith.extui %632 : vector<16x1xi1> to vector<16x1xi32>
    %634 = arith.sitofp %633 : vector<16x1xi32> to vector<16x1xf32>
    %635 = arith.addf %617, %634 : vector<16x1xf32>
    %cst_210 = arith.constant -1.000000e+30 : f32
    %636 = vector.broadcast %cst_210 : f32 to vector<16x1xf32>
    %637 = arith.select %632, %636, %622 : vector<16x1xi1>, vector<16x1xf32>
    %cst_211 = arith.constant dense<0xFF800000> : vector<1xf32>
    %638 = vector.multi_reduction <maximumf>, %637, %cst_211 [0] : vector<16x1xf32> to vector<1xf32>
    %639 = vector.shape_cast %638 : vector<1xf32> to vector<1x1xf32>
    %640 = vector.broadcast %639 : vector<1x1xf32> to vector<16x1xf32>
    %641 = arith.cmpf oge, %637, %640 : vector<16x1xf32>
    %cst_212 = arith.constant 1.600000e+01 : f32
    %642 = vector.broadcast %cst_212 : f32 to vector<16x1xf32>
    %643 = arith.select %641, %3, %642 : vector<16x1xi1>, vector<16x1xf32>
    %cst_213 = arith.constant dense<0x7F800000> : vector<1xf32>
    %644 = vector.multi_reduction <minimumf>, %643, %cst_213 [0] : vector<16x1xf32> to vector<1xf32>
    %645 = vector.shape_cast %644 : vector<1xf32> to vector<1x1xf32>
    %646 = vector.broadcast %645 : vector<1x1xf32> to vector<16x1xf32>
    %647 = arith.cmpf oeq, %3, %646 : vector<16x1xf32>
    %648 = arith.extui %647 : vector<16x1xi1> to vector<16x1xi32>
    %649 = arith.sitofp %648 : vector<16x1xi32> to vector<16x1xf32>
    %650 = arith.addf %635, %649 : vector<16x1xf32>
    %cst_214 = arith.constant -1.000000e+30 : f32
    %651 = vector.broadcast %cst_214 : f32 to vector<16x1xf32>
    %652 = arith.select %647, %651, %637 : vector<16x1xi1>, vector<16x1xf32>
    %cst_215 = arith.constant dense<0xFF800000> : vector<1xf32>
    %653 = vector.multi_reduction <maximumf>, %652, %cst_215 [0] : vector<16x1xf32> to vector<1xf32>
    %654 = vector.shape_cast %653 : vector<1xf32> to vector<1x1xf32>
    %655 = vector.broadcast %654 : vector<1x1xf32> to vector<16x1xf32>
    %656 = arith.cmpf oge, %652, %655 : vector<16x1xf32>
    %cst_216 = arith.constant 1.600000e+01 : f32
    %657 = vector.broadcast %cst_216 : f32 to vector<16x1xf32>
    %658 = arith.select %656, %3, %657 : vector<16x1xi1>, vector<16x1xf32>
    %cst_217 = arith.constant dense<0x7F800000> : vector<1xf32>
    %659 = vector.multi_reduction <minimumf>, %658, %cst_217 [0] : vector<16x1xf32> to vector<1xf32>
    %660 = vector.shape_cast %659 : vector<1xf32> to vector<1x1xf32>
    %661 = vector.broadcast %660 : vector<1x1xf32> to vector<16x1xf32>
    %662 = arith.cmpf oeq, %3, %661 : vector<16x1xf32>
    %663 = arith.extui %662 : vector<16x1xi1> to vector<16x1xi32>
    %664 = arith.sitofp %663 : vector<16x1xi32> to vector<16x1xf32>
    %665 = arith.addf %650, %664 : vector<16x1xf32>
    %cst_218 = arith.constant -1.000000e+30 : f32
    %666 = vector.broadcast %cst_218 : f32 to vector<16x1xf32>
    %667 = arith.select %662, %666, %652 : vector<16x1xi1>, vector<16x1xf32>
    %cst_219 = arith.constant dense<0xFF800000> : vector<1xf32>
    %668 = vector.multi_reduction <maximumf>, %667, %cst_219 [0] : vector<16x1xf32> to vector<1xf32>
    %669 = vector.shape_cast %668 : vector<1xf32> to vector<1x1xf32>
    %670 = vector.broadcast %669 : vector<1x1xf32> to vector<16x1xf32>
    %671 = arith.cmpf oge, %667, %670 : vector<16x1xf32>
    %cst_220 = arith.constant 1.600000e+01 : f32
    %672 = vector.broadcast %cst_220 : f32 to vector<16x1xf32>
    %673 = arith.select %671, %3, %672 : vector<16x1xi1>, vector<16x1xf32>
    %cst_221 = arith.constant dense<0x7F800000> : vector<1xf32>
    %674 = vector.multi_reduction <minimumf>, %673, %cst_221 [0] : vector<16x1xf32> to vector<1xf32>
    %675 = vector.shape_cast %674 : vector<1xf32> to vector<1x1xf32>
    %676 = vector.broadcast %675 : vector<1x1xf32> to vector<16x1xf32>
    %677 = arith.cmpf oeq, %3, %676 : vector<16x1xf32>
    %678 = arith.extui %677 : vector<16x1xi1> to vector<16x1xi32>
    %679 = arith.sitofp %678 : vector<16x1xi32> to vector<16x1xf32>
    %680 = arith.addf %665, %679 : vector<16x1xf32>
    %cst_222 = arith.constant -1.000000e+30 : f32
    %681 = vector.broadcast %cst_222 : f32 to vector<16x1xf32>
    %682 = arith.select %677, %681, %667 : vector<16x1xi1>, vector<16x1xf32>
    %cst_223 = arith.constant dense<0xFF800000> : vector<1xf32>
    %683 = vector.multi_reduction <maximumf>, %682, %cst_223 [0] : vector<16x1xf32> to vector<1xf32>
    %684 = vector.shape_cast %683 : vector<1xf32> to vector<1x1xf32>
    %685 = vector.broadcast %684 : vector<1x1xf32> to vector<16x1xf32>
    %686 = arith.cmpf oge, %682, %685 : vector<16x1xf32>
    %cst_224 = arith.constant 1.600000e+01 : f32
    %687 = vector.broadcast %cst_224 : f32 to vector<16x1xf32>
    %688 = arith.select %686, %3, %687 : vector<16x1xi1>, vector<16x1xf32>
    %cst_225 = arith.constant dense<0x7F800000> : vector<1xf32>
    %689 = vector.multi_reduction <minimumf>, %688, %cst_225 [0] : vector<16x1xf32> to vector<1xf32>
    %690 = vector.shape_cast %689 : vector<1xf32> to vector<1x1xf32>
    %691 = vector.broadcast %690 : vector<1x1xf32> to vector<16x1xf32>
    %692 = arith.cmpf oeq, %3, %691 : vector<16x1xf32>
    %693 = arith.extui %692 : vector<16x1xi1> to vector<16x1xi32>
    %694 = arith.sitofp %693 : vector<16x1xi32> to vector<16x1xf32>
    %695 = arith.addf %680, %694 : vector<16x1xf32>
    %cst_226 = arith.constant 5.000000e-01 : f32
    %696 = vector.broadcast %cst_226 : f32 to vector<16x1xf32>
    %697 = arith.cmpf ogt, %563, %696 : vector<16x1xf32>
    %698 = arith.andi %13, %697 : vector<16x1xi1>
    %cst_227 = arith.constant -1.000000e+30 : f32
    %699 = vector.broadcast %cst_227 : f32 to vector<16x1xf32>
    %700 = arith.select %698, %616, %699 : vector<16x1xi1>, vector<16x1xf32>
    %cst_228 = arith.constant dense<0xFF800000> : vector<1xf32>
    %701 = vector.multi_reduction <maximumf>, %700, %cst_228 [0] : vector<16x1xf32> to vector<1xf32>
    %702 = vector.shape_cast %701 : vector<1xf32> to vector<1x1xf32>
    %703 = vector.broadcast %702 : vector<1x1xf32> to vector<16x1xf32>
    %704 = arith.cmpf oge, %700, %703 : vector<16x1xf32>
    %cst_229 = arith.constant 1.600000e+01 : f32
    %705 = vector.broadcast %cst_229 : f32 to vector<16x1xf32>
    %706 = arith.select %704, %3, %705 : vector<16x1xi1>, vector<16x1xf32>
    %cst_230 = arith.constant dense<0x7F800000> : vector<1xf32>
    %707 = vector.multi_reduction <minimumf>, %706, %cst_230 [0] : vector<16x1xf32> to vector<1xf32>
    %708 = vector.shape_cast %707 : vector<1xf32> to vector<1x1xf32>
    %709 = vector.broadcast %708 : vector<1x1xf32> to vector<16x1xf32>
    %710 = arith.cmpf oeq, %3, %709 : vector<16x1xf32>
    %711 = arith.extui %710 : vector<16x1xi1> to vector<16x1xi32>
    %712 = arith.sitofp %711 : vector<16x1xi32> to vector<16x1xf32>
    %713 = arith.addf %695, %712 : vector<16x1xf32>
    %cst_231 = arith.constant -1.000000e+30 : f32
    %714 = vector.broadcast %cst_231 : f32 to vector<16x1xf32>
    %715 = arith.select %710, %714, %700 : vector<16x1xi1>, vector<16x1xf32>
    %cst_232 = arith.constant dense<0xFF800000> : vector<1xf32>
    %716 = vector.multi_reduction <maximumf>, %715, %cst_232 [0] : vector<16x1xf32> to vector<1xf32>
    %717 = vector.shape_cast %716 : vector<1xf32> to vector<1x1xf32>
    %718 = vector.broadcast %717 : vector<1x1xf32> to vector<16x1xf32>
    %719 = arith.cmpf oge, %715, %718 : vector<16x1xf32>
    %cst_233 = arith.constant 1.600000e+01 : f32
    %720 = vector.broadcast %cst_233 : f32 to vector<16x1xf32>
    %721 = arith.select %719, %3, %720 : vector<16x1xi1>, vector<16x1xf32>
    %cst_234 = arith.constant dense<0x7F800000> : vector<1xf32>
    %722 = vector.multi_reduction <minimumf>, %721, %cst_234 [0] : vector<16x1xf32> to vector<1xf32>
    %723 = vector.shape_cast %722 : vector<1xf32> to vector<1x1xf32>
    %724 = vector.broadcast %723 : vector<1x1xf32> to vector<16x1xf32>
    %725 = arith.cmpf oeq, %3, %724 : vector<16x1xf32>
    %726 = arith.extui %725 : vector<16x1xi1> to vector<16x1xi32>
    %727 = arith.sitofp %726 : vector<16x1xi32> to vector<16x1xf32>
    %728 = arith.addf %713, %727 : vector<16x1xf32>
    %cst_235 = arith.constant -1.000000e+30 : f32
    %729 = vector.broadcast %cst_235 : f32 to vector<16x1xf32>
    %730 = arith.select %725, %729, %715 : vector<16x1xi1>, vector<16x1xf32>
    %cst_236 = arith.constant dense<0xFF800000> : vector<1xf32>
    %731 = vector.multi_reduction <maximumf>, %730, %cst_236 [0] : vector<16x1xf32> to vector<1xf32>
    %732 = vector.shape_cast %731 : vector<1xf32> to vector<1x1xf32>
    %733 = vector.broadcast %732 : vector<1x1xf32> to vector<16x1xf32>
    %734 = arith.cmpf oge, %730, %733 : vector<16x1xf32>
    %cst_237 = arith.constant 1.600000e+01 : f32
    %735 = vector.broadcast %cst_237 : f32 to vector<16x1xf32>
    %736 = arith.select %734, %3, %735 : vector<16x1xi1>, vector<16x1xf32>
    %cst_238 = arith.constant dense<0x7F800000> : vector<1xf32>
    %737 = vector.multi_reduction <minimumf>, %736, %cst_238 [0] : vector<16x1xf32> to vector<1xf32>
    %738 = vector.shape_cast %737 : vector<1xf32> to vector<1x1xf32>
    %739 = vector.broadcast %738 : vector<1x1xf32> to vector<16x1xf32>
    %740 = arith.cmpf oeq, %3, %739 : vector<16x1xf32>
    %741 = arith.extui %740 : vector<16x1xi1> to vector<16x1xi32>
    %742 = arith.sitofp %741 : vector<16x1xi32> to vector<16x1xf32>
    %743 = arith.addf %728, %742 : vector<16x1xf32>
    %cst_239 = arith.constant -1.000000e+30 : f32
    %744 = vector.broadcast %cst_239 : f32 to vector<16x1xf32>
    %745 = arith.select %740, %744, %730 : vector<16x1xi1>, vector<16x1xf32>
    %cst_240 = arith.constant dense<0xFF800000> : vector<1xf32>
    %746 = vector.multi_reduction <maximumf>, %745, %cst_240 [0] : vector<16x1xf32> to vector<1xf32>
    %747 = vector.shape_cast %746 : vector<1xf32> to vector<1x1xf32>
    %748 = vector.broadcast %747 : vector<1x1xf32> to vector<16x1xf32>
    %749 = arith.cmpf oge, %745, %748 : vector<16x1xf32>
    %cst_241 = arith.constant 1.600000e+01 : f32
    %750 = vector.broadcast %cst_241 : f32 to vector<16x1xf32>
    %751 = arith.select %749, %3, %750 : vector<16x1xi1>, vector<16x1xf32>
    %cst_242 = arith.constant dense<0x7F800000> : vector<1xf32>
    %752 = vector.multi_reduction <minimumf>, %751, %cst_242 [0] : vector<16x1xf32> to vector<1xf32>
    %753 = vector.shape_cast %752 : vector<1xf32> to vector<1x1xf32>
    %754 = vector.broadcast %753 : vector<1x1xf32> to vector<16x1xf32>
    %755 = arith.cmpf oeq, %3, %754 : vector<16x1xf32>
    %756 = arith.extui %755 : vector<16x1xi1> to vector<16x1xi32>
    %757 = arith.sitofp %756 : vector<16x1xi32> to vector<16x1xf32>
    %758 = arith.addf %743, %757 : vector<16x1xf32>
    %cst_243 = arith.constant -1.000000e+30 : f32
    %759 = vector.broadcast %cst_243 : f32 to vector<16x1xf32>
    %760 = arith.select %755, %759, %745 : vector<16x1xi1>, vector<16x1xf32>
    %cst_244 = arith.constant dense<0xFF800000> : vector<1xf32>
    %761 = vector.multi_reduction <maximumf>, %760, %cst_244 [0] : vector<16x1xf32> to vector<1xf32>
    %762 = vector.shape_cast %761 : vector<1xf32> to vector<1x1xf32>
    %763 = vector.broadcast %762 : vector<1x1xf32> to vector<16x1xf32>
    %764 = arith.cmpf oge, %760, %763 : vector<16x1xf32>
    %cst_245 = arith.constant 1.600000e+01 : f32
    %765 = vector.broadcast %cst_245 : f32 to vector<16x1xf32>
    %766 = arith.select %764, %3, %765 : vector<16x1xi1>, vector<16x1xf32>
    %cst_246 = arith.constant dense<0x7F800000> : vector<1xf32>
    %767 = vector.multi_reduction <minimumf>, %766, %cst_246 [0] : vector<16x1xf32> to vector<1xf32>
    %768 = vector.shape_cast %767 : vector<1xf32> to vector<1x1xf32>
    %769 = vector.broadcast %768 : vector<1x1xf32> to vector<16x1xf32>
    %770 = arith.cmpf oeq, %3, %769 : vector<16x1xf32>
    %771 = arith.extui %770 : vector<16x1xi1> to vector<16x1xi32>
    %772 = arith.sitofp %771 : vector<16x1xi32> to vector<16x1xf32>
    %773 = arith.addf %758, %772 : vector<16x1xf32>
    %774 = vector.broadcast %616 : vector<16x1xf32> to vector<16x128xf32>
    %775 = arith.mulf %610, %774 : vector<16x128xf32>
    %776 = vector.broadcast %773 : vector<16x1xf32> to vector<16x128xf32>
    %777 = arith.mulf %775, %776 : vector<16x128xf32>
    %778 = vector.extract_strided_slice %777 {offsets = [0, 0], sizes = [8, 128], strides = [1, 1]} : vector<16x128xf32> to vector<8x128xf32>
    %779 = vector.extract_strided_slice %773 {offsets = [0, 0], sizes = [8, 1], strides = [1, 1]} : vector<16x1xf32> to vector<8x1xf32>
    %cst_247 = arith.constant 5.000000e-01 : f32
    %780 = vector.broadcast %cst_247 : f32 to vector<8x1xf32>
    %781 = arith.cmpf ogt, %779, %780 : vector<8x1xf32>
    %cst_248 = arith.constant -1.000000e+30 : f32
    %782 = vector.shape_cast %781 : vector<8x1xi1> to vector<8x1xi1>
    %783 = vector.broadcast %782 : vector<8x1xi1> to vector<8x128xi1>
    %784 = vector.broadcast %cst_248 : f32 to vector<8x128xf32>
    %785 = arith.select %783, %778, %784 : vector<8x128xi1>, vector<8x128xf32>
    %cst_249 = arith.constant dense<0xFF800000> : vector<128xf32>
    %786 = vector.multi_reduction <maximumf>, %785, %cst_249 [0] : vector<8x128xf32> to vector<128xf32>
    %787 = vector.shape_cast %786 : vector<128xf32> to vector<1x128xf32>
    %cst_250 = arith.constant dense<0.000000e+00> : vector<128xf32>
    %788 = vector.multi_reduction <add>, %778, %cst_250 [0] : vector<8x128xf32> to vector<128xf32>
    %789 = vector.shape_cast %788 : vector<128xf32> to vector<1x128xf32>
    %cst_251 = arith.constant 2.000000e-01 : f32
    %790 = vector.broadcast %cst_251 : f32 to vector<1x128xf32>
    %791 = arith.mulf %789, %790 : vector<1x128xf32>
    %792 = vector.extract_strided_slice %777 {offsets = [8, 0], sizes = [8, 128], strides = [1, 1]} : vector<16x128xf32> to vector<8x128xf32>
    %793 = vector.extract_strided_slice %773 {offsets = [8, 0], sizes = [8, 1], strides = [1, 1]} : vector<16x1xf32> to vector<8x1xf32>
    %cst_252 = arith.constant 5.000000e-01 : f32
    %794 = vector.broadcast %cst_252 : f32 to vector<8x1xf32>
    %795 = arith.cmpf ogt, %793, %794 : vector<8x1xf32>
    %cst_253 = arith.constant -1.000000e+30 : f32
    %796 = vector.shape_cast %795 : vector<8x1xi1> to vector<8x1xi1>
    %797 = vector.broadcast %796 : vector<8x1xi1> to vector<8x128xi1>
    %798 = vector.broadcast %cst_253 : f32 to vector<8x128xf32>
    %799 = arith.select %797, %792, %798 : vector<8x128xi1>, vector<8x128xf32>
    %cst_254 = arith.constant dense<0xFF800000> : vector<128xf32>
    %800 = vector.multi_reduction <maximumf>, %799, %cst_254 [0] : vector<8x128xf32> to vector<128xf32>
    %801 = vector.shape_cast %800 : vector<128xf32> to vector<1x128xf32>
    %cst_255 = arith.constant dense<0.000000e+00> : vector<128xf32>
    %802 = vector.multi_reduction <add>, %792, %cst_255 [0] : vector<8x128xf32> to vector<128xf32>
    %803 = vector.shape_cast %802 : vector<128xf32> to vector<1x128xf32>
    %cst_256 = arith.constant 2.000000e-01 : f32
    %804 = vector.broadcast %cst_256 : f32 to vector<1x128xf32>
    %805 = arith.mulf %803, %804 : vector<1x128xf32>
    %806 = tpu.concatenate %787, %801 in 0 : vector<1x128xf32>, vector<1x128xf32> -> vector<2x128xf32>
    %807 = tpu.concatenate %791, %805 in 0 : vector<1x128xf32>, vector<1x128xf32> -> vector<2x128xf32>
    %808 = arith.addf %356, %596 : vector<2x128xf32>
    %809 = arith.addf %808, %806 : vector<2x128xf32>
    %810 = arith.truncf %809 : vector<2x128xf32> to vector<2x128xbf16>
    %811 = arith.addf %357, %597 : vector<2x128xf32>
    %812 = arith.addf %811, %807 : vector<2x128xf32>
    %813 = arith.truncf %812 : vector<2x128xf32> to vector<2x128xbf16>
    %c0_257 = arith.constant 0 : index
    %c0_258 = arith.constant 0 : index
    %814 = vector.load %arg20[%c0_257, %c0_258] : memref<256x128xbf16, #tpu.memory_space<vmem>>, vector<128x128xbf16>
    %cst_259 = arith.constant dense<0.000000e+00> : vector<2x128xf32>
    %815 = tpu.matmul %810, %814, %cst_259 {dimension_numbers = #tpu.dot_dimension_numbers<[1], [0], [0], [1], [0, 0, 1, 1], [], []>} : vector<2x128xbf16>, vector<128x128xbf16>, vector<2x128xf32> -> vector<2x128xf32>
    %c128 = arith.constant 128 : index
    %c0_260 = arith.constant 0 : index
    %816 = vector.load %arg20[%c128, %c0_260] : memref<256x128xbf16, #tpu.memory_space<vmem>>, vector<128x128xbf16>
    %cst_261 = arith.constant dense<0.000000e+00> : vector<2x128xf32>
    %817 = tpu.matmul %813, %816, %cst_261 {dimension_numbers = #tpu.dot_dimension_numbers<[1], [0], [0], [1], [0, 0, 1, 1], [], []>} : vector<2x128xbf16>, vector<128x128xbf16>, vector<2x128xf32> -> vector<2x128xf32>
    %818 = arith.addf %815, %817 : vector<2x128xf32>
    %c0_262 = arith.constant 0 : index
    %c0_263 = arith.constant 0 : index
    %819 = vector.load %arg21[%c0_262, %c0_263] : memref<1x128xf32, #tpu.memory_space<vmem>>, vector<1x128xf32>
    %820 = vector.broadcast %819 : vector<1x128xf32> to vector<2x128xf32>
    %821 = arith.addf %818, %820 : vector<2x128xf32>
    %cst_264 = arith.constant 0.000000e+00 : f32
    %822 = vector.broadcast %cst_264 : f32 to vector<2x128xf32>
    %823 = arith.maximumf %821, %822 : vector<2x128xf32>
    %824 = arith.truncf %823 : vector<2x128xf32> to vector<2x128xbf16>
    %c0_265 = arith.constant 0 : index
    %c0_266 = arith.constant 0 : index
    %825 = vector.load %arg22[%c0_265, %c0_266] : memref<128x64xbf16, #tpu.memory_space<vmem>>, vector<128x64xbf16>
    %cst_267 = arith.constant dense<0.000000e+00> : vector<2x64xf32>
    %826 = tpu.matmul %824, %825, %cst_267 {dimension_numbers = #tpu.dot_dimension_numbers<[1], [0], [0], [1], [0, 0, 1, 1], [], []>} : vector<2x128xbf16>, vector<128x64xbf16>, vector<2x64xf32> -> vector<2x64xf32>
    %c0_268 = arith.constant 0 : index
    %c0_269 = arith.constant 0 : index
    %827 = vector.load %arg23[%c0_268, %c0_269] : memref<1x64xf32, #tpu.memory_space<vmem>>, vector<1x64xf32>
    %828 = vector.broadcast %827 : vector<1x64xf32> to vector<2x64xf32>
    %829 = arith.addf %826, %828 : vector<2x64xf32>
    %cst_270 = arith.constant 0.000000e+00 : f32
    %830 = vector.broadcast %cst_270 : f32 to vector<2x64xf32>
    %831 = arith.maximumf %829, %830 : vector<2x64xf32>
    %832 = arith.truncf %831 : vector<2x64xf32> to vector<2x64xbf16>
    %c0_271 = arith.constant 0 : index
    %c0_272 = arith.constant 0 : index
    %833 = vector.load %arg24[%c0_271, %c0_272] : memref<64x128xbf16, #tpu.memory_space<vmem>>, vector<64x128xbf16>
    %cst_273 = arith.constant dense<0.000000e+00> : vector<2x128xf32>
    %834 = tpu.matmul %832, %833, %cst_273 {dimension_numbers = #tpu.dot_dimension_numbers<[1], [0], [0], [1], [0, 0, 1, 1], [], []>} : vector<2x64xbf16>, vector<64x128xbf16>, vector<2x128xf32> -> vector<2x128xf32>
    %c0_274 = arith.constant 0 : index
    %c0_275 = arith.constant 0 : index
    %835 = vector.load %arg25[%c0_274, %c0_275] : memref<1x128xf32, #tpu.memory_space<vmem>>, vector<1x128xf32>
    %836 = vector.broadcast %835 : vector<1x128xf32> to vector<2x128xf32>
    %837 = arith.addf %834, %836 : vector<2x128xf32>
    %cst_276 = arith.constant dense<0xFF800000> : vector<2xf32>
    %838 = vector.multi_reduction <maximumf>, %837, %cst_276 [1] : vector<2x128xf32> to vector<2xf32>
    %839 = vector.shape_cast %838 : vector<2xf32> to vector<2x1xf32>
    %840 = vector.broadcast %839 : vector<2x1xf32> to vector<2x128xf32>
    %841 = arith.subf %837, %840 : vector<2x128xf32>
    %842 = math.exp %841 : vector<2x128xf32>
    %cst_277 = arith.constant dense<0.000000e+00> : vector<2xf32>
    %843 = vector.multi_reduction <add>, %842, %cst_277 [1] : vector<2x128xf32> to vector<2xf32>
    %844 = vector.shape_cast %843 : vector<2xf32> to vector<2x1xf32>
    %845 = math.log %844 : vector<2x1xf32>
    %846 = vector.broadcast %845 : vector<2x1xf32> to vector<2x128xf32>
    %847 = arith.subf %841, %846 : vector<2x128xf32>
    %c0_278 = arith.constant 0 : index
    %c0_279 = arith.constant 0 : index
    %848 = vector.load %arg26[%c0_278, %c0_279] : memref<2x128xf32, #tpu.memory_space<vmem>>, vector<2x128xf32>
    tpu.vector_store %arg26[%c0_278, %c0_279], %847 {strides = array<i32>} : memref<2x128xf32, #tpu.memory_space<vmem>>, vector<2x128xf32>,
    return
  }
  func.func @transform_0(%arg0: i32) -> (i32, i32) {
    %c0_i32 = arith.constant 0 : i32
    %c0_i32_0 = arith.constant 0 : i32
    %c0_i32_1 = arith.constant 0 : i32
    return %c0_i32, %c0_i32_0 : i32, i32
  }
  func.func @transform_1(%arg0: i32) -> (i32, i32) {
    %c0_i32 = arith.constant 0 : i32
    %c0_i32_0 = arith.constant 0 : i32
    %c0_i32_1 = arith.constant 0 : i32
    return %c0_i32, %c0_i32_0 : i32, i32
  }
  func.func @transform_2(%arg0: i32) -> (i32, i32) {
    %c0_i32 = arith.constant 0 : i32
    %c0_i32_0 = arith.constant 0 : i32
    %c0_i32_1 = arith.constant 0 : i32
    return %c0_i32, %c0_i32_0 : i32, i32
  }
  func.func @transform_3(%arg0: i32) -> (i32, i32) {
    %c0_i32 = arith.constant 0 : i32
    %c0_i32_0 = arith.constant 0 : i32
    %c0_i32_1 = arith.constant 0 : i32
    return %c0_i32, %c0_i32_0 : i32, i32
  }
  func.func @transform_4(%arg0: i32) -> (i32, i32) {
    %c0_i32 = arith.constant 0 : i32
    %c0_i32_0 = arith.constant 0 : i32
    %c0_i32_1 = arith.constant 0 : i32
    return %c0_i32, %c0_i32_0 : i32, i32
  }
  func.func @transform_5(%arg0: i32) -> (i32, i32) {
    %c0_i32 = arith.constant 0 : i32
    %c0_i32_0 = arith.constant 0 : i32
    %c0_i32_1 = arith.constant 0 : i32
    return %c0_i32, %c0_i32_0 : i32, i32
  }
  func.func @transform_6(%arg0: i32) -> (i32, i32) {
    %c0_i32 = arith.constant 0 : i32
    %c0_i32_0 = arith.constant 0 : i32
    %c0_i32_1 = arith.constant 0 : i32
    return %c0_i32, %c0_i32_0 : i32, i32
  }
  func.func @transform_7(%arg0: i32) -> (i32, i32) {
    %c0_i32 = arith.constant 0 : i32
    %c0_i32_0 = arith.constant 0 : i32
    %c0_i32_1 = arith.constant 0 : i32
    return %c0_i32, %c0_i32_0 : i32, i32
  }
  func.func @transform_8(%arg0: i32) -> (i32, i32) {
    %c0_i32 = arith.constant 0 : i32
    %c0_i32_0 = arith.constant 0 : i32
    %c0_i32_1 = arith.constant 0 : i32
    return %c0_i32, %c0_i32_0 : i32, i32
  }
  func.func @transform_9(%arg0: i32) -> (i32, i32) {
    %c0_i32 = arith.constant 0 : i32
    %c0_i32_0 = arith.constant 0 : i32
    %c0_i32_1 = arith.constant 0 : i32
    return %c0_i32, %c0_i32_0 : i32, i32
  }
  func.func @transform_10(%arg0: i32) -> (i32, i32) {
    %c0_i32 = arith.constant 0 : i32
    %c0_i32_0 = arith.constant 0 : i32
    %c0_i32_1 = arith.constant 0 : i32
    return %c0_i32, %c0_i32_0 : i32, i32
  }
  func.func @transform_11(%arg0: i32) -> (i32, i32) {
    %c0_i32 = arith.constant 0 : i32
    %c0_i32_0 = arith.constant 0 : i32
    %c0_i32_1 = arith.constant 0 : i32
    return %c0_i32, %c0_i32_0 : i32, i32
  }
  func.func @transform_12(%arg0: i32) -> (i32, i32) {
    %c0_i32 = arith.constant 0 : i32
    %c0_i32_0 = arith.constant 0 : i32
    %c0_i32_1 = arith.constant 0 : i32
    return %c0_i32, %c0_i32_0 : i32, i32
  }
  func.func @transform_13(%arg0: i32) -> (i32, i32) {
    %c0_i32 = arith.constant 0 : i32
    %c0_i32_0 = arith.constant 0 : i32
    %c0_i32_1 = arith.constant 0 : i32
    return %c0_i32, %c0_i32_0 : i32, i32
  }
  func.func @transform_14(%arg0: i32) -> (i32, i32) {
    %c0_i32 = arith.constant 0 : i32
    %c0_i32_0 = arith.constant 0 : i32
    %c0_i32_1 = arith.constant 0 : i32
    return %c0_i32, %c0_i32_0 : i32, i32
  }
  func.func @transform_15(%arg0: i32) -> (i32, i32) {
    %c0_i32 = arith.constant 0 : i32
    %c0_i32_0 = arith.constant 0 : i32
    %c0_i32_1 = arith.constant 0 : i32
    return %c0_i32, %c0_i32_0 : i32, i32
  }
  func.func @transform_16(%arg0: i32) -> (i32, i32) {
    %c0_i32 = arith.constant 0 : i32
    %c0_i32_0 = arith.constant 0 : i32
    %c0_i32_1 = arith.constant 0 : i32
    return %c0_i32, %c0_i32_0 : i32, i32
  }
  func.func @transform_17(%arg0: i32) -> (i32, i32) {
    %c0_i32 = arith.constant 0 : i32
    %c0_i32_0 = arith.constant 0 : i32
    %c0_i32_1 = arith.constant 0 : i32
    return %c0_i32, %c0_i32_0 : i32, i32
  }
  func.func @transform_18(%arg0: i32) -> (i32, i32) {
    %c0_i32 = arith.constant 0 : i32
    %c0_i32_0 = arith.constant 0 : i32
    %c0_i32_1 = arith.constant 0 : i32
    return %c0_i32, %c0_i32_0 : i32, i32
  }
  func.func @transform_19(%arg0: i32) -> (i32, i32) {
    %c0_i32 = arith.constant 0 : i32
    %c0_i32_0 = arith.constant 0 : i32
    %c0_i32_1 = arith.constant 0 : i32
    return %c0_i32, %c0_i32_0 : i32, i32
  }
  func.func @transform_20(%arg0: i32) -> (i32, i32) {
    %c0_i32 = arith.constant 0 : i32
    %c0_i32_0 = arith.constant 0 : i32
    %c0_i32_1 = arith.constant 0 : i32
    return %c0_i32, %c0_i32_0 : i32, i32
  }
  func.func @transform_21(%arg0: i32) -> (i32, i32) {
    %c0_i32 = arith.constant 0 : i32
    %c0_i32_0 = arith.constant 0 : i32
    %c0_i32_1 = arith.constant 0 : i32
    return %c0_i32, %c0_i32_0 : i32, i32
  }
  func.func @transform_22(%arg0: i32) -> (i32, i32) {
    %c0_i32 = arith.constant 0 : i32
    %c0_i32_0 = arith.constant 0 : i32
    %c0_i32_1 = arith.constant 0 : i32
    return %c0_i32, %c0_i32_0 : i32, i32
  }
  func.func @transform_23(%arg0: i32) -> (i32, i32) {
    %c0_i32 = arith.constant 0 : i32
    %c0_i32_0 = arith.constant 0 : i32
    %c0_i32_1 = arith.constant 0 : i32
    return %c0_i32, %c0_i32_0 : i32, i32
  }
  func.func @transform_24(%arg0: i32) -> (i32, i32) {
    %c0_i32 = arith.constant 0 : i32
    %c0_i32_0 = arith.constant 0 : i32
    %c0_i32_1 = arith.constant 0 : i32
    return %c0_i32, %c0_i32_0 : i32, i32
  }
  func.func @transform_25(%arg0: i32) -> (i32, i32) {
    %c0_i32 = arith.constant 0 : i32
    %c0_i32_0 = arith.constant 0 : i32
    %c0_i32_1 = arith.constant 0 : i32
    return %c0_i32, %c0_i32_0 : i32, i32
  }
  func.func @transform_26(%arg0: i32) -> (i32, i32) {
    %c0_i32 = arith.constant 0 : i32
    %c0_i32_0 = arith.constant 0 : i32
    %c0_i32_1 = arith.constant 0 : i32
    return %c0_i32, %c0_i32_0 : i32, i32
  }
}

</mosaic_0001>

<llo_original>
// kernel: forward.1
$region0: #{forward.1}
  #allocation0 [shape = 'u32[]', space=smem, size = 0x4, offset = 0x4, fixed_abs, tag = 'smem constant byte address 0x4 - core index']
  #allocation1 [shape = 'u32[144,128]{1,0:T(1,128)}', space=vmem, size = 0x12000, scoped, tag = 'internal scratch']
  %s0 = inlined_call_operand.vmem [shape: bf16[16,16], index: 0, kind: input, shape index: {}]
  %s1 = inlined_call_operand.vmem [shape: bf16[16,4], index: 1, kind: input, shape index: {}]
  %s2 = inlined_call_operand.hbm [shape: bf16[4,128], index: 2, kind: input, shape index: {}]
  %s3 = inlined_call_operand.hbm [shape: bf16[4,128], index: 3, kind: input, shape index: {}]
  %s4 = inlined_call_operand.hbm [shape: f32[1,128], index: 4, kind: input, shape index: {}]
  %s5 = inlined_call_operand.hbm [shape: bf16[128,512], index: 5, kind: input, shape index: {}]
  %s6 = inlined_call_operand.vmem [shape: f32[1,512], index: 6, kind: input, shape index: {}]
  %s7 = inlined_call_operand.hbm [shape: bf16[512,128], index: 7, kind: input, shape index: {}]
  %s8 = inlined_call_operand.hbm [shape: bf16[512,128], index: 8, kind: input, shape index: {}]
  %s9 = inlined_call_operand.hbm [shape: f32[1,128], index: 9, kind: input, shape index: {}]
  %s10 = inlined_call_operand.vmem [shape: f32[1,128], index: 10, kind: input, shape index: {}]
  %s11 = inlined_call_operand.hbm [shape: bf16[128,128], index: 11, kind: input, shape index: {}]
  %s12 = inlined_call_operand.hbm [shape: bf16[128,128], index: 12, kind: input, shape index: {}]
  %s13 = inlined_call_operand.hbm [shape: f32[1,128], index: 13, kind: input, shape index: {}]
  %s14 = inlined_call_operand.vmem [shape: f32[1,128], index: 14, kind: input, shape index: {}]
  %s15 = inlined_call_operand.hbm [shape: bf16[128,128], index: 15, kind: input, shape index: {}]
  %s16 = inlined_call_operand.hbm [shape: bf16[128,128], index: 16, kind: input, shape index: {}]
  %s17 = inlined_call_operand.hbm [shape: f32[1,128], index: 17, kind: input, shape index: {}]
  %s18 = inlined_call_operand.vmem [shape: f32[1,128], index: 18, kind: input, shape index: {}]
  %s19 = inlined_call_operand.vmem [shape: bf16[256,128], index: 19, kind: input, shape index: {}]
  %s20 = inlined_call_operand.hbm [shape: f32[1,128], index: 20, kind: input, shape index: {}]
  %s21 = inlined_call_operand.vmem [shape: bf16[128,64], index: 21, kind: input, shape index: {}]
  %s22 = inlined_call_operand.hbm [shape: f32[1,64], index: 22, kind: input, shape index: {}]
  %s23 = inlined_call_operand.vmem [shape: bf16[64,128], index: 23, kind: input, shape index: {}]
  %s24 = inlined_call_operand.hbm [shape: f32[1,128], index: 24, kind: input, shape index: {}]
  %s25 = inlined_call_operand.hbm [shape: f32[2,128], index: 25, kind: output, shape index: {0}]
  %s26 = inlined_call_operand.hbm [shape: f32[1,128], index: 26, kind: output, shape index: {1}]
  %27 = xla_tuple %s25, %s26
  %s28 = sld [smem:[#allocation0]]
  $region182: #{forward.1} parent=0
    _
  %s30 = ssub.s32 1, %s28
  %s31 = scalar_select 0, %s30, %s28
  $region1: #{forward.1} parent=0
    #allocation2 [shape = 'u8[1024]{0}', space=vmem, size = 0x400, scoped, tag = 'input window, operand 2, single buffered']
    #allocation3 [shape = 's32[1]{0}', space=sflag, size = 0x4, scoped, tag = 'scoped memory for forward.1']
    #allocation4 [shape = 's32[1]{0}', space=sflag, size = 0x4, scoped, tag = 'scoped memory for forward.1']
    #allocation5 [shape = 'u8[1024]{0}', space=vmem, size = 0x400, scoped, tag = 'input window, operand 3, single buffered']
    #allocation6 [shape = 's32[1]{0}', space=sflag, size = 0x4, scoped, tag = 'scoped memory for forward.1']
    #allocation7 [shape = 'u8[512]{0}', space=vmem, size = 0x400, scoped, tag = 'input window, operand 4, single buffered']
    #allocation8 [shape = 'u8[131072]{0}', space=vmem, size = 0x20000, scoped, tag = 'input window, operand 5, single buffered']
    #allocation9 [shape = 's32[1]{0}', space=sflag, size = 0x4, scoped, tag = 'scoped memory for forward.1']
    #allocation10 [shape = 'u8[131072]{0}', space=vmem, size = 0x20000, scoped, tag = 'input window, operand 7, single buffered']
    #allocation11 [shape = 'u8[131072]{0}', space=vmem, size = 0x20000, scoped, tag = 'input window, operand 8, single buffered']
    #allocation12 [shape = 's32[1]{0}', space=sflag, size = 0x4, scoped, tag = 'scoped memory for forward.1']
    #allocation13 [shape = 'u8[512]{0}', space=vmem, size = 0x400, scoped, tag = 'input window, operand 9, single buffered']
    #allocation14 [shape = 'u8[32768]{0}', space=vmem, size = 0x8000, scoped, tag = 'input window, operand 11, single buffered']
    #allocation15 [shape = 's32[1]{0}', space=sflag, size = 0x4, scoped, tag = 'scoped memory for forward.1']
    #allocation16 [shape = 'u8[32768]{0}', space=vmem, size = 0x8000, scoped, tag = 'input window, operand 12, single buffered']
    #allocation17 [shape = 'u8[512]{0}', space=vmem, size = 0x400, scoped, tag = 'input window, operand 13, single buffered']
    #allocation18 [shape = 's32[1]{0}', space=sflag, size = 0x4, scoped, tag = 'scoped memory for forward.1']
    #allocation19 [shape = 'u8[32768]{0}', space=vmem, size = 0x8000, scoped, tag = 'input window, operand 15, single buffered']
    #allocation20 [shape = 'u8[32768]{0}', space=vmem, size = 0x8000, scoped, tag = 'input window, operand 16, single buffered']
    #allocation21 [shape = 's32[1]{0}', space=sflag, size = 0x4, scoped, tag = 'scoped memory for forward.1']
    #allocation22 [shape = 'u8[512]{0}', space=vmem, size = 0x400, scoped, tag = 'input window, operand 17, single buffered']
    #allocation23 [shape = 'u8[512]{0}', space=vmem, size = 0x400, scoped, tag = 'input window, operand 20, single buffered']
    #allocation24 [shape = 's32[1]{0}', space=sflag, size = 0x4, scoped, tag = 'scoped memory for forward.1']
    #allocation25 [shape = 'u8[512]{0}', space=vmem, size = 0x400, scoped, tag = 'input window, operand 22, single buffered']
    #allocation26 [shape = 'u8[512]{0}', space=vmem, size = 0x400, scoped, tag = 'input window, operand 24, single buffered']
    #allocation27 [shape = 's32[1]{0}', space=sflag, size = 0x4, scoped, tag = 'scoped memory for forward.1']
    #allocation28 [shape = 'u8[1024]{0}', space=vmem, size = 0x400, scoped, tag = 'output window, operand 0, single buffered']
    #allocation29 [shape = 'u8[512]{0}', space=vmem, size = 0x400, scoped, tag = 'output window, operand 1, single buffered']
    #allocation30 [shape = 's32[1]{0}', space=sflag, size = 0x4, scoped, tag = 'scoped memory for forward.1']
    %32 = vsyncpa [#allocation3], 0
    %33 = vsyncpa [#allocation6], 0
    %34 = vsyncpa [#allocation9], 0
    %35 = vsyncpa [#allocation12], 0
    %36 = vsyncpa [#allocation15], 0
    %37 = vsyncpa [#allocation18], 0
    %38 = vsyncpa [#allocation21], 0
    %39 = vsyncpa [#allocation24], 0
    %40 = vsyncpa [#allocation27], 0
    %41 = vsyncpa [#allocation4], 0
    %42 = vsyncpa [#allocation30], 0
    // Predicated region
    $region2: #{forward.1} parent=1 // pred_check
      _
    $region3: #{forward.1} parent=1 // pred_check_branch
      %44 = sbr.rel (0) target = $region5
    $region4: #{forward.1} parent=1 // pred_region
      _
    $region5: #{forward.1} parent=1 // pred_fallthru
      _
    // Predicated region
    $region6: #{forward.1} parent=1 // pred_check
      _
    $region7: #{forward.1} parent=1 // pred_check_branch
      %46 = sbr.rel (0) target = $region9
    $region8: #{forward.1} parent=1 // pred_region
      _
    $region9: #{forward.1} parent=1 // pred_fallthru
      _
    // Predicated region
    $region10: #{forward.1} parent=1 // pred_check
      _
    $region11: #{forward.1} parent=1 // pred_check_branch
      %48 = sbr.rel (0) target = $region13
    $region12: #{forward.1} parent=1 // pred_region
      %s50 = ssub.s32 32, 32
      %51 = vsyncadd [#allocation3], %s50
      %s53 = sshll.u32 [#allocation2], 4
      %s54 = int_to_ptr.vmem [resolvable:$true] %s53
      %56 = dma.hbm_to_vmem [thread:$0]  %s2, 32, %s54, [#allocation3]
    $region13: #{forward.1} parent=1 // pred_fallthru
      _
    // Predicated region
    $region14: #{forward.1} parent=1 // pred_check
      _
    $region15: #{forward.1} parent=1 // pred_check_branch
      %58 = sbr.rel (0) target = $region17
    $region16: #{forward.1} parent=1 // pred_region
      %s60 = ssub.s32 32, 32
      %61 = vsyncadd [#allocation6], %s60
      %s63 = sshll.u32 [#allocation5], 4
      %s64 = int_to_ptr.vmem [resolvable:$true] %s63
      %66 = dma.hbm_to_vmem [thread:$0]  %s3, 32, %s64, [#allocation6]
    $region17: #{forward.1} parent=1 // pred_fallthru
      _
    // Predicated region
    $region18: #{forward.1} parent=1 // pred_check
      _
    $region19: #{forward.1} parent=1 // pred_check_branch
      %68 = sbr.rel (0) target = $region21
    $region20: #{forward.1} parent=1 // pred_region
      %s70 = ssub.s32 16, 16
      %71 = vsyncadd [#allocation6], %s70
      %s73 = sshll.u32 [#allocation7], 4
      %s74 = int_to_ptr.vmem [resolvable:$true] %s73
      %76 = dma.hbm_to_vmem [thread:$0]  %s4, 16, %s74, [#allocation6]
    $region21: #{forward.1} parent=1 // pred_fallthru
      _
    // Predicated region
    $region22: #{forward.1} parent=1 // pred_check
      _
    $region23: #{forward.1} parent=1 // pred_check_branch
      %78 = sbr.rel (0) target = $region25
    $region24: #{forward.1} parent=1 // pred_region
      %s80 = ssub.s32 4096, 4096
      %81 = vsyncadd [#allocation9], %s80
      %s82 = sshll.u32 [#allocation8], 4
      %s83 = int_to_ptr.vmem [resolvable:$true] %s82
      %88 = dma.hbm_to_vmem [thread:$0]  %s5, 4096, %s83, [#allocation9], 256, 256, 16
    $region25: #{forward.1} parent=1 // pred_fallthru
      _
    // Predicated region
    $region26: #{forward.1} parent=1 // pred_check
      _
    $region27: #{forward.1} parent=1 // pred_check_branch
      %90 = sbr.rel (0) target = $region29
    $region28: #{forward.1} parent=1 // pred_region
      _
    $region29: #{forward.1} parent=1 // pred_fallthru
      _
    // Predicated region
    $region30: #{forward.1} parent=1 // pred_check
      _
    $region31: #{forward.1} parent=1 // pred_check_branch
      %92 = sbr.rel (0) target = $region33
    $region32: #{forward.1} parent=1 // pred_region
      %s94 = ssub.s32 4096, 4096
      %95 = vsyncadd [#allocation9], %s94
      %s96 = sshll.u32 [#allocation10], 4
      %s97 = int_to_ptr.vmem [resolvable:$true] %s96
      %102 = dma.hbm_to_vmem [thread:$0]  %s7, 4096, %s97, [#allocation9], 64, 64, 4
    $region33: #{forward.1} parent=1 // pred_fallthru
      _
    // Predicated region
    $region34: #{forward.1} parent=1 // pred_check
      _
    $region35: #{forward.1} parent=1 // pred_check_branch
      %104 = sbr.rel (0) target = $region37
    $region36: #{forward.1} parent=1 // pred_region
      %s106 = ssub.s32 4096, 4096
      %107 = vsyncadd [#allocation12], %s106
      %s108 = sshll.u32 [#allocation11], 4
      %s109 = int_to_ptr.vmem [resolvable:$true] %s108
      %114 = dma.hbm_to_vmem [thread:$0]  %s8, 4096, %s109, [#allocation12], 64, 64, 4
    $region37: #{forward.1} parent=1 // pred_fallthru
      _
    // Predicated region
    $region38: #{forward.1} parent=1 // pred_check
      _
    $region39: #{forward.1} parent=1 // pred_check_branch
      %116 = sbr.rel (0) target = $region41
    $region40: #{forward.1} parent=1 // pred_region
      %s118 = ssub.s32 16, 16
      %119 = vsyncadd [#allocation12], %s118
      %s121 = sshll.u32 [#allocation13], 4
      %s122 = int_to_ptr.vmem [resolvable:$true] %s121
      %124 = dma.hbm_to_vmem [thread:$0]  %s9, 16, %s122, [#allocation12]
    $region41: #{forward.1} parent=1 // pred_fallthru
      _
    // Predicated region
    $region42: #{forward.1} parent=1 // pred_check
      _
    $region43: #{forward.1} parent=1 // pred_check_branch
      %126 = sbr.rel (0) target = $region45
    $region44: #{forward.1} parent=1 // pred_region
      _
    $region45: #{forward.1} parent=1 // pred_fallthru
      _
    // Predicated region
    $region46: #{forward.1} parent=1 // pred_check
      _
    $region47: #{forward.1} parent=1 // pred_check_branch
      %128 = sbr.rel (0) target = $region49
    $region48: #{forward.1} parent=1 // pred_region
      %s130 = ssub.s32 1024, 1024
      %131 = vsyncadd [#allocation15], %s130
      %s132 = sshll.u32 [#allocation14], 4
      %s133 = int_to_ptr.vmem [resolvable:$true] %s132
      %138 = dma.hbm_to_vmem [thread:$0]  %s11, 1024, %s133, [#allocation15], 64, 64, 4
    $region49: #{forward.1} parent=1 // pred_fallthru
      _
    // Predicated region
    $region50: #{forward.1} parent=1 // pred_check
      _
    $region51: #{forward.1} parent=1 // pred_check_branch
      %140 = sbr.rel (0) target = $region53
    $region52: #{forward.1} parent=1 // pred_region
      %s142 = ssub.s32 1024, 1024
      %143 = vsyncadd [#allocation15], %s142
      %s144 = sshll.u32 [#allocation16], 4
      %s145 = int_to_ptr.vmem [resolvable:$true] %s144
      %150 = dma.hbm_to_vmem [thread:$0]  %s12, 1024, %s145, [#allocation15], 64, 64, 4
    $region53: #{forward.1} parent=1 // pred_fallthru
      _
    // Predicated region
    $region54: #{forward.1} parent=1 // pred_check
      _
    $region55: #{forward.1} parent=1 // pred_check_branch
      %152 = sbr.rel (0) target = $region57
    $region56: #{forward.1} parent=1 // pred_region
      %s154 = ssub.s32 16, 16
      %155 = vsyncadd [#allocation18], %s154
      %s157 = sshll.u32 [#allocation17], 4
      %s158 = int_to_ptr.vmem [resolvable:$true] %s157
      %160 = dma.hbm_to_vmem [thread:$0]  %s13, 16, %s158, [#allocation18]
    $region57: #{forward.1} parent=1 // pred_fallthru
      _
    // Predicated region
    $region58: #{forward.1} parent=1 // pred_check
      _
    $region59: #{forward.1} parent=1 // pred_check_branch
      %162 = sbr.rel (0) target = $region61
    $region60: #{forward.1} parent=1 // pred_region
      _
    $region61: #{forward.1} parent=1 // pred_fallthru
      _
    // Predicated region
    $region62: #{forward.1} parent=1 // pred_check
      _
    $region63: #{forward.1} parent=1 // pred_check_branch
      %164 = sbr.rel (0) target = $region65
    $region64: #{forward.1} parent=1 // pred_region
      %s166 = ssub.s32 1024, 1024
      %167 = vsyncadd [#allocation18], %s166
      %s168 = sshll.u32 [#allocation19], 4
      %s169 = int_to_ptr.vmem [resolvable:$true] %s168
      %174 = dma.hbm_to_vmem [thread:$0]  %s15, 1024, %s169, [#allocation18], 64, 64, 4
    $region65: #{forward.1} parent=1 // pred_fallthru
      _
    // Predicated region
    $region66: #{forward.1} parent=1 // pred_check
      _
    $region67: #{forward.1} parent=1 // pred_check_branch
      %176 = sbr.rel (0) target = $region69
    $region68: #{forward.1} parent=1 // pred_region
      %s178 = ssub.s32 1024, 1024
      %179 = vsyncadd [#allocation21], %s178
      %s180 = sshll.u32 [#allocation20], 4
      %s181 = int_to_ptr.vmem [resolvable:$true] %s180
      %186 = dma.hbm_to_vmem [thread:$0]  %s16, 1024, %s181, [#allocation21], 64, 64, 4
    $region69: #{forward.1} parent=1 // pred_fallthru
      _
    // Predicated region
    $region70: #{forward.1} parent=1 // pred_check
      _
    $region71: #{forward.1} parent=1 // pred_check_branch
      %188 = sbr.rel (0) target = $region73
    $region72: #{forward.1} parent=1 // pred_region
      %s190 = ssub.s32 16, 16
      %191 = vsyncadd [#allocation21], %s190
      %s193 = sshll.u32 [#allocation22], 4
      %s194 = int_to_ptr.vmem [resolvable:$true] %s193
      %196 = dma.hbm_to_vmem [thread:$0]  %s17, 16, %s194, [#allocation21]
    $region73: #{forward.1} parent=1 // pred_fallthru
      _
    // Predicated region
    $region74: #{forward.1} parent=1 // pred_check
      _
    $region75: #{forward.1} parent=1 // pred_check_branch
      %198 = sbr.rel (0) target = $region77
    $region76: #{forward.1} parent=1 // pred_region
      _
    $region77: #{forward.1} parent=1 // pred_fallthru
      _
    // Predicated region
    $region78: #{forward.1} parent=1 // pred_check
      _
    $region79: #{forward.1} parent=1 // pred_check_branch
      %200 = sbr.rel (0) target = $region81
    $region80: #{forward.1} parent=1 // pred_region
      _
    $region81: #{forward.1} parent=1 // pred_fallthru
      _
    // Predicated region
    $region82: #{forward.1} parent=1 // pred_check
      _
    $region83: #{forward.1} parent=1 // pred_check_branch
      %202 = sbr.rel (0) target = $region85
    $region84: #{forward.1} parent=1 // pred_region
      %s204 = ssub.s32 16, 16
      %205 = vsyncadd [#allocation24], %s204
      %s207 = sshll.u32 [#allocation23], 4
      %s208 = int_to_ptr.vmem [resolvable:$true] %s207
      %210 = dma.hbm_to_vmem [thread:$0]  %s20, 16, %s208, [#allocation24]
    $region85: #{forward.1} parent=1 // pred_fallthru
      _
    // Predicated region
    $region86: #{forward.1} parent=1 // pred_check
      _
    $region87: #{forward.1} parent=1 // pred_check_branch
      %212 = sbr.rel (0) target = $region89
    $region88: #{forward.1} parent=1 // pred_region
      _
    $region89: #{forward.1} parent=1 // pred_fallthru
      _
    // Predicated region
    $region90: #{forward.1} parent=1 // pred_check
      _
    $region91: #{forward.1} parent=1 // pred_check_branch
      %214 = sbr.rel (0) target = $region93
    $region92: #{forward.1} parent=1 // pred_region
      %s216 = ssub.s32 16, 16
      %217 = vsyncadd [#allocation24], %s216
      %s219 = sshll.u32 [#allocation25], 4
      %s220 = int_to_ptr.vmem [resolvable:$true] %s219
      %222 = dma.hbm_to_vmem [thread:$0]  %s22, 16, %s220, [#allocation24]
    $region93: #{forward.1} parent=1 // pred_fallthru
      _
    // Predicated region
    $region94: #{forward.1} parent=1 // pred_check
      _
    $region95: #{forward.1} parent=1 // pred_check_branch
      %224 = sbr.rel (0) target = $region97
    $region96: #{forward.1} parent=1 // pred_region
      _
    $region97: #{forward.1} parent=1 // pred_fallthru
      _
    // Predicated region
    $region98: #{forward.1} parent=1 // pred_check
      _
    $region99: #{forward.1} parent=1 // pred_check_branch
      %226 = sbr.rel (0) target = $region101
    $region100: #{forward.1} parent=1 // pred_region
      %s228 = ssub.s32 16, 16
      %229 = vsyncadd [#allocation27], %s228
      %s231 = sshll.u32 [#allocation26], 4
      %s232 = int_to_ptr.vmem [resolvable:$true] %s231
      %234 = dma.hbm_to_vmem [thread:$0]  %s24, 16, %s232, [#allocation27]
    $region101: #{forward.1} parent=1 // pred_fallthru
      _
    // Predicated region
    $region102: #{forward.1} parent=1 // pred_check
      _
    $region103: #{forward.1} parent=1 // pred_check_branch
      %236 = sbr.rel (0) target = $region105
    $region104: #{forward.1} parent=1 // pred_region
      %237 = dma.done [#allocation3], 32
    $region105: #{forward.1} parent=1 // pred_fallthru
      _
    // Predicated region
    $region106: #{forward.1} parent=1 // pred_check
      _
    $region107: #{forward.1} parent=1 // pred_check_branch
      %239 = sbr.rel (0) target = $region109
    $region108: #{forward.1} parent=1 // pred_region
      %240 = dma.done [#allocation6], 32
    $region109: #{forward.1} parent=1 // pred_fallthru
      _
    // Predicated region
    $region110: #{forward.1} parent=1 // pred_check
      _
    $region111: #{forward.1} parent=1 // pred_check_branch
      %242 = sbr.rel (0) target = $region113
    $region112: #{forward.1} parent=1 // pred_region
      %243 = dma.done [#allocation6], 16
    $region113: #{forward.1} parent=1 // pred_fallthru
      _
    // Predicated region
    $region114: #{forward.1} parent=1 // pred_check
      _
    $region115: #{forward.1} parent=1 // pred_check_branch
      %245 = sbr.rel (0) target = $region117
    $region116: #{forward.1} parent=1 // pred_region
      %246 = dma.done [#allocation9], 4096
    $region117: #{forward.1} parent=1 // pred_fallthru
      _
    // Predicated region
    $region118: #{forward.1} parent=1 // pred_check
      _
    $region119: #{forward.1} parent=1 // pred_check_branch
      %248 = sbr.rel (0) target = $region121
    $region120: #{forward.1} parent=1 // pred_region
      %249 = dma.done [#allocation9], 4096
    $region121: #{forward.1} parent=1 // pred_fallthru
      _
    // Predicated region
    $region122: #{forward.1} parent=1 // pred_check
      _
    $region123: #{forward.1} parent=1 // pred_check_branch
      %251 = sbr.rel (0) target = $region125
    $region124: #{forward.1} parent=1 // pred_region
      %252 = dma.done [#allocation12], 4096
    $region125: #{forward.1} parent=1 // pred_fallthru
      _
    // Predicated region
    $region126: #{forward.1} parent=1 // pred_check
      _
    $region127: #{forward.1} parent=1 // pred_check_branch
      %254 = sbr.rel (0) target = $region129
    $region128: #{forward.1} parent=1 // pred_region
      %255 = dma.done [#allocation12], 16
    $region129: #{forward.1} parent=1 // pred_fallthru
      _
    // Predicated region
    $region130: #{forward.1} parent=1 // pred_check
      _
    $region131: #{forward.1} parent=1 // pred_check_branch
      %257 = sbr.rel (0) target = $region133
    $region132: #{forward.1} parent=1 // pred_region
      %258 = dma.done [#allocation15], 1024
    $region133: #{forward.1} parent=1 // pred_fallthru
      _
    // Predicated region
    $region134: #{forward.1} parent=1 // pred_check
      _
    $region135: #{forward.1} parent=1 // pred_check_branch
      %260 = sbr.rel (0) target = $region137
    $region136: #{forward.1} parent=1 // pred_region
      %261 = dma.done [#allocation15], 1024
    $region137: #{forward.1} parent=1 // pred_fallthru
      _
    // Predicated region
    $region138: #{forward.1} parent=1 // pred_check
      _
    $region139: #{forward.1} parent=1 // pred_check_branch
      %263 = sbr.rel (0) target = $region141
    $region140: #{forward.1} parent=1 // pred_region
      %264 = dma.done [#allocation18], 16
    $region141: #{forward.1} parent=1 // pred_fallthru
      _
    // Predicated region
    $region142: #{forward.1} parent=1 // pred_check
      _
    $region143: #{forward.1} parent=1 // pred_check_branch
      %266 = sbr.rel (0) target = $region145
    $region144: #{forward.1} parent=1 // pred_region
      %267 = dma.done [#allocation18], 1024
    $region145: #{forward.1} parent=1 // pred_fallthru
      _
    // Predicated region
    $region146: #{forward.1} parent=1 // pred_check
      _
    $region147: #{forward.1} parent=1 // pred_check_branch
      %269 = sbr.rel (0) target = $region149
    $region148: #{forward.1} parent=1 // pred_region
      %270 = dma.done [#allocation21], 1024
    $region149: #{forward.1} parent=1 // pred_fallthru
      _
    // Predicated region
    $region150: #{forward.1} parent=1 // pred_check
      _
    $region151: #{forward.1} parent=1 // pred_check_branch
      %272 = sbr.rel (0) target = $region153
    $region152: #{forward.1} parent=1 // pred_region
      %273 = dma.done [#allocation21], 16
    $region153: #{forward.1} parent=1 // pred_fallthru
      _
    // Predicated region
    $region154: #{forward.1} parent=1 // pred_check
      _
    $region155: #{forward.1} parent=1 // pred_check_branch
      %275 = sbr.rel (0) target = $region157
    $region156: #{forward.1} parent=1 // pred_region
      %276 = dma.done [#allocation24], 16
    $region157: #{forward.1} parent=1 // pred_fallthru
      _
    // Predicated region
    $region158: #{forward.1} parent=1 // pred_check
      _
    $region159: #{forward.1} parent=1 // pred_check_branch
      %278 = sbr.rel (0) target = $region161
    $region160: #{forward.1} parent=1 // pred_region
      %279 = dma.done [#allocation24], 16
    $region161: #{forward.1} parent=1 // pred_fallthru
      _
    // Predicated region
    $region162: #{forward.1} parent=1 // pred_check
      _
    $region163: #{forward.1} parent=1 // pred_check_branch
      %281 = sbr.rel (0) target = $region165
    $region164: #{forward.1} parent=1 // pred_region
      %282 = dma.done [#allocation27], 16
    $region165: #{forward.1} parent=1 // pred_fallthru
      _
    %v284 = vld [vmem:[%s0] sm:$0xf]
    %v285 = vld [vmem:[%s0 + $0x4] sm:$0xf]
    %v286 = vld [vmem:[%s1] sm:$0xf]
    %v287 = vld [vmem:[%s1 + $0x4] sm:$0xf]
    %v288 = vlaneseq
    %v289 = vshrl.u32 %v288, 7
    %v290 = vadd.s32 %v289, 8
    %v291 = vcvt.s32.f32 %v289
    %v292 = vcvt.s32.f32 %v290
    %vm293 = vcmp.ge.s32.totalorder %v289, 0
    %vm294 = vcmp.ge.s32.totalorder %v290, 0
    %vm295 = vcmp.lt.s32.totalorder %v289, 8
    %vm296 = vcmp.lt.s32.totalorder %v290, 8
    %vm297 = vmand %vm293, %vm295
    %vm298 = vmand %vm294, %vm296
    %vm299 = vcmp.ge.s32.totalorder %v289, 8
    %vm300 = vcmp.ge.s32.totalorder %v290, 8
    %vm301 = vcmp.lt.s32.totalorder %v289, 16
    %vm302 = vcmp.lt.s32.totalorder %v290, 16
    %vm303 = vmand %vm299, %vm301
    %vm304 = vmand %vm300, %vm302
    %v307 = vunpack.c.l.b16 %v284
    %v308 = vunpack.c.l.b16 %v285
    %v309 = vpack.c.b16 %v308, %v307
    %v312 = vunpack.c.l.b16 %v286
    %v313 = vunpack.c.l.b16 %v287
    %v314 = vpack.c.b16 %v313, %v312
    %vm316 = vcmask 130048
    %v318 = vsel %vm316, %v309, 0
    %320 = vmatprep.subr.bf16.mxu0 0
    %321 = vmatpush1.bf16.msra.mxu0 %v314
    %322 = vmatprep.subr.bf16.mxu0 0
    %323 = vmatpush1.bf16.msra.mxu0 0
    %324 = vmatprep.subr.bf16.mxu0 0
    %325 = vmatpush1.bf16.msra.mxu0 0
    %326 = vmatprep.subr.bf16.mxu0 0
    %327 = vmatpush1.bf16.msra.mxu0 0
    %328 = vmatprep.subr.bf16.mxu0 0
    %329 = vmatpush1.bf16.msra.mxu0 0
    %330 = vmatprep.subr.bf16.mxu0 0
    %331 = vmatpush1.bf16.msra.mxu0 0
    %332 = vmatprep.subr.bf16.mxu0 0
    %333 = vmatpush1.bf16.msra.mxu0 0
    %334 = vmatprep.subr.bf16.mxu0 0
    %335 = vmatpush1.bf16.msra.mxu0 0
    %336 = vmatprep.subr.bf16.mxu0 0
    %337 = vmatpush1.bf16.msra.mxu0 0
    %338 = vmatprep.subr.bf16.mxu0 0
    %339 = vmatpush1.bf16.msra.mxu0 0
    %340 = vmatprep.subr.bf16.mxu0 0
    %341 = vmatpush1.bf16.msra.mxu0 0
    %342 = vmatprep.subr.bf16.mxu0 0
    %343 = vmatpush1.bf16.msra.mxu0 0
    %344 = vmatprep.subr.bf16.mxu0 0
    %345 = vmatpush1.bf16.msra.mxu0 0
    %346 = vmatprep.subr.bf16.mxu0 0
    %347 = vmatpush1.bf16.msra.mxu0 0
    %348 = vmatprep.subr.bf16.mxu0 0
    %349 = vmatpush1.bf16.msra.mxu0 0
    %350 = vmatprep.subr.bf16.mxu0 0
    %351 = vmatpush1.bf16.msra.mxu0 0
    %352 = vmatprep.mubr.bf16.mxu0 0
    %353 = vmatmul.mubr.bf16.gmra.mrb[0].mxu0 %v318
    %v354 = vpop.f32.mrb[0].mxu0
    %v355 = vadd.f32 0.0, %v354
    %v356 = vpop.f32.mrb[0].mxu0
    %v357 = vpop.f32.mrb[0].mxu0
    %v358 = vadd.f32 0.0, %v357
    %v359 = vpop.f32.mrb[0].mxu0
    %360 = vdwg.mxu0
    %v361 = vld [vmem:[#allocation2] sm:$0x3]
    %v362 = vpack.c.bf16 %v358, %v355
    %v363 = vld [vmem:[#allocation5] sm:$0x3]
    %vm364 = vcmask 31744
    %v366 = vsel %vm364, %v362, 0
    %vm368 = vcmask 1041408
    %v370 = vsel %vm368, %v363, 0
    %372 = vmatprep.subr.bf16.mxu0 0
    %373 = vmatpush1.bf16.msra.mxu0 %v370
    %374 = vmatprep.subr.bf16.mxu0 0
    %375 = vmatpush1.bf16.msra.mxu0 0
    %376 = vmatprep.subr.bf16.mxu0 0
    %377 = vmatpush1.bf16.msra.mxu0 0
    %378 = vmatprep.subr.bf16.mxu0 0
    %379 = vmatpush1.bf16.msra.mxu0 0
    %380 = vmatprep.subr.bf16.mxu0 0
    %381 = vmatpush1.bf16.msra.mxu0 0
    %382 = vmatprep.subr.bf16.mxu0 0
    %383 = vmatpush1.bf16.msra.mxu0 0
    %384 = vmatprep.subr.bf16.mxu0 0
    %385 = vmatpush1.bf16.msra.mxu0 0
    %386 = vmatprep.subr.bf16.mxu0 0
    %387 = vmatpush1.bf16.msra.mxu0 0
    %388 = vmatprep.subr.bf16.mxu0 0
    %389 = vmatpush1.bf16.msra.mxu0 0
    %390 = vmatprep.subr.bf16.mxu0 0
    %391 = vmatpush1.bf16.msra.mxu0 0
    %392 = vmatprep.subr.bf16.mxu0 0
    %393 = vmatpush1.bf16.msra.mxu0 0
    %394 = vmatprep.subr.bf16.mxu0 0
    %395 = vmatpush1.bf16.msra.mxu0 0
    %396 = vmatprep.subr.bf16.mxu0 0
    %397 = vmatpush1.bf16.msra.mxu0 0
    %398 = vmatprep.subr.bf16.mxu0 0
    %399 = vmatpush1.bf16.msra.mxu0 0
    %400 = vmatprep.subr.bf16.mxu0 0
    %401 = vmatpush1.bf16.msra.mxu0 0
    %402 = vmatprep.subr.bf16.mxu0 0
    %403 = vmatpush1.bf16.msra.mxu0 0
    %404 = vmatprep.mubr.bf16.mxu0 0
    %405 = vmatmul.mubr.bf16.gmra.mrb[0].mxu0 %v366
    %v406 = vpop.f32.mrb[0].mxu0
    %v407 = vadd.f32 0.0, %v406
    %v408 = vpop.f32.mrb[0].mxu0
    %v409 = vpop.f32.mrb[0].mxu0
    %v410 = vadd.f32 0.0, %v409
    %v411 = vpop.f32.mrb[0].mxu0
    %412 = vdwg.mxu0
    %v414 = vsel %vm364, %v314, 0
    %v417 = vsel %vm368, %v361, 0
    %419 = vmatprep.subr.bf16.mxu0 0
    %420 = vmatpush1.bf16.msra.mxu0 %v417
    %421 = vmatprep.subr.bf16.mxu0 0
    %422 = vmatpush1.bf16.msra.mxu0 0
    %423 = vmatprep.subr.bf16.mxu0 0
    %424 = vmatpush1.bf16.msra.mxu0 0
    %425 = vmatprep.subr.bf16.mxu0 0
    %426 = vmatpush1.bf16.msra.mxu0 0
    %427 = vmatprep.subr.bf16.mxu0 0
    %428 = vmatpush1.bf16.msra.mxu0 0
    %429 = vmatprep.subr.bf16.mxu0 0
    %430 = vmatpush1.bf16.msra.mxu0 0
    %431 = vmatprep.subr.bf16.mxu0 0
    %432 = vmatpush1.bf16.msra.mxu0 0
    %433 = vmatprep.subr.bf16.mxu0 0
    %434 = vmatpush1.bf16.msra.mxu0 0
    %435 = vmatprep.subr.bf16.mxu0 0
    %436 = vmatpush1.bf16.msra.mxu0 0
    %437 = vmatprep.subr.bf16.mxu0 0
    %438 = vmatpush1.bf16.msra.mxu0 0
    %439 = vmatprep.subr.bf16.mxu0 0
    %440 = vmatpush1.bf16.msra.mxu0 0
    %441 = vmatprep.subr.bf16.mxu0 0
    %442 = vmatpush1.bf16.msra.mxu0 0
    %443 = vmatprep.subr.bf16.mxu0 0
    %444 = vmatpush1.bf16.msra.mxu0 0
    %445 = vmatprep.subr.bf16.mxu0 0
    %446 = vmatpush1.bf16.msra.mxu0 0
    %447 = vmatprep.subr.bf16.mxu0 0
    %448 = vmatpush1.bf16.msra.mxu0 0
    %449 = vmatprep.subr.bf16.mxu0 0
    %450 = vmatpush1.bf16.msra.mxu0 0
    %451 = vmatprep.mubr.bf16.mxu0 0
    %452 = vmatmul.mubr.bf16.gmra.mrb[0].mxu0 %v414
    %v453 = vpop.f32.mrb[0].mxu0
    %v454 = vadd.f32 %v407, %v453
    %v455 = vpop.f32.mrb[0].mxu0
    %v456 = vpop.f32.mrb[0].mxu0
    %v457 = vadd.f32 %v410, %v456
    %v458 = vpop.f32.mrb[0].mxu0
    %459 = vdwg.mxu0
    %v460 = vld [vmem:[#allocation7] sm:$0x1]
    %v462 = vlaneseq
    %v463 = vshrl.u32 %v462, 7
    %v464 = vsub.s32 0, %v463
    %v465 = vrot.slane %v460, %v464
    %v467 = vadd.f32 %v454, %v465
    %v468 = vadd.f32 %v457, %v465
    %v469 = vmax.f32 %v467, 0.0
    %v470 = vmax.f32 %v468, 0.0
    %v471 = vpack.c.bf16 %v470, %v469
    %v472 = vld [vmem:[#allocation8] sm:$0xff]
    %v473 = vld [vmem:[#allocation8 + $0x8] sm:$0xff]
    %v474 = vld [vmem:[#allocation8 + $0x10] sm:$0xff]
    %v475 = vld [vmem:[#allocation8 + $0x18] sm:$0xff]
    %v476 = vld [vmem:[#allocation8 + $0x20] sm:$0xff]
    %v477 = vld [vmem:[#allocation8 + $0x28] sm:$0xff]
    %v478 = vld [vmem:[#allocation8 + $0x30] sm:$0xff]
    %v479 = vld [vmem:[#allocation8 + $0x38] sm:$0xff]
    %v480 = vld [vmem:[#allocation8 + $0x40] sm:$0xff]
    %v481 = vld [vmem:[#allocation8 + $0x48] sm:$0xff]
    %v482 = vld [vmem:[#allocation8 + $0x50] sm:$0xff]
    %v483 = vld [vmem:[#allocation8 + $0x58] sm:$0xff]
    %v484 = vld [vmem:[#allocation8 + $0x60] sm:$0xff]
    %v485 = vld [vmem:[#allocation8 + $0x68] sm:$0xff]
    %v486 = vld [vmem:[#allocation8 + $0x70] sm:$0xff]
    %v487 = vld [vmem:[#allocation8 + $0x78] sm:$0xff]
    %v488 = vld [vmem:[#allocation8 + $0x80] sm:$0xff]
    %v489 = vld [vmem:[#allocation8 + $0x88] sm:$0xff]
    %v490 = vld [vmem:[#allocation8 + $0x90] sm:$0xff]
    %v491 = vld [vmem:[#allocation8 + $0x98] sm:$0xff]
    %v492 = vld [vmem:[#allocation8 + $0xa0] sm:$0xff]
    %v493 = vld [vmem:[#allocation8 + $0xa8] sm:$0xff]
    %v494 = vld [vmem:[#allocation8 + $0xb0] sm:$0xff]
    %v495 = vld [vmem:[#allocation8 + $0xb8] sm:$0xff]
    %v496 = vld [vmem:[#allocation8 + $0xc0] sm:$0xff]
    %v497 = vld [vmem:[#allocation8 + $0xc8] sm:$0xff]
    %v498 = vld [vmem:[#allocation8 + $0xd0] sm:$0xff]
    %v499 = vld [vmem:[#allocation8 + $0xd8] sm:$0xff]
    %v500 = vld [vmem:[#allocation8 + $0xe0] sm:$0xff]
    %v501 = vld [vmem:[#allocation8 + $0xe8] sm:$0xff]
    %v502 = vld [vmem:[#allocation8 + $0xf0] sm:$0xff]
    %v503 = vld [vmem:[#allocation8 + $0xf8] sm:$0xff]
    %v536 = vunpack.c.l.b16 %v472
    %v537 = vunpack.c.h.b16 %v472
    %v538 = vunpack.c.l.b16 %v473
    %v539 = vunpack.c.h.b16 %v473
    %v540 = vunpack.c.l.b16 %v474
    %v541 = vunpack.c.h.b16 %v474
    %v542 = vunpack.c.l.b16 %v475
    %v543 = vunpack.c.h.b16 %v475
    %v544 = vunpack.c.l.b16 %v476
    %v545 = vunpack.c.h.b16 %v476
    %v546 = vunpack.c.l.b16 %v477
    %v547 = vunpack.c.h.b16 %v477
    %v548 = vunpack.c.l.b16 %v478
    %v549 = vunpack.c.h.b16 %v478
    %v550 = vunpack.c.l.b16 %v479
    %v551 = vunpack.c.h.b16 %v479
    %v552 = vunpack.c.l.b16 %v480
    %v553 = vunpack.c.h.b16 %v480
    %v554 = vunpack.c.l.b16 %v481
    %v555 = vunpack.c.h.b16 %v481
    %v556 = vunpack.c.l.b16 %v482
    %v557 = vunpack.c.h.b16 %v482
    %v558 = vunpack.c.l.b16 %v483
    %v559 = vunpack.c.h.b16 %v483
    %v560 = vunpack.c.l.b16 %v484
    %v561 = vunpack.c.h.b16 %v484
    %v562 = vunpack.c.l.b16 %v485
    %v563 = vunpack.c.h.b16 %v485
    %v564 = vunpack.c.l.b16 %v486
    %v565 = vunpack.c.h.b16 %v486
    %v566 = vunpack.c.l.b16 %v487
    %v567 = vunpack.c.h.b16 %v487
    %v568 = vunpack.c.l.b16 %v488
    %v569 = vunpack.c.h.b16 %v488
    %v570 = vunpack.c.l.b16 %v489
    %v571 = vunpack.c.h.b16 %v489
    %v572 = vunpack.c.l.b16 %v490
    %v573 = vunpack.c.h.b16 %v490
    %v574 = vunpack.c.l.b16 %v491
    %v575 = vunpack.c.h.b16 %v491
    %v576 = vunpack.c.l.b16 %v492
    %v577 = vunpack.c.h.b16 %v492
    %v578 = vunpack.c.l.b16 %v493
    %v579 = vunpack.c.h.b16 %v493
    %v580 = vunpack.c.l.b16 %v494
    %v581 = vunpack.c.h.b16 %v494
    %v582 = vunpack.c.l.b16 %v495
    %v583 = vunpack.c.h.b16 %v495
    %v584 = vunpack.c.l.b16 %v496
    %v585 = vunpack.c.h.b16 %v496
    %v586 = vunpack.c.l.b16 %v497
    %v587 = vunpack.c.h.b16 %v497
    %v588 = vunpack.c.l.b16 %v498
    %v589 = vunpack.c.h.b16 %v498
    %v590 = vunpack.c.l.b16 %v499
    %v591 = vunpack.c.h.b16 %v499
    %v592 = vunpack.c.l.b16 %v500
    %v593 = vunpack.c.h.b16 %v500
    %v594 = vunpack.c.l.b16 %v501
    %v595 = vunpack.c.h.b16 %v501
    %v596 = vunpack.c.l.b16 %v502
    %v597 = vunpack.c.h.b16 %v502
    %v598 = vunpack.c.l.b16 %v503
    %v599 = vunpack.c.h.b16 %v503
    %v600 = vpack.c.b16 %v540, %v536
    %v601 = vpack.c.b16 %v541, %v537
    %v602 = vpack.c.b16 %v542, %v538
    %v603 = vpack.c.b16 %v543, %v539
    %v604 = vpack.c.b16 %v548, %v544
    %v605 = vpack.c.b16 %v549, %v545
    %v606 = vpack.c.b16 %v550, %v546
    %v607 = vpack.c.b16 %v551, %v547
    %v608 = vpack.c.b16 %v556, %v552
    %v609 = vpack.c.b16 %v557, %v553
    %v610 = vpack.c.b16 %v558, %v554
    %v611 = vpack.c.b16 %v559, %v555
    %v612 = vpack.c.b16 %v564, %v560
    %v613 = vpack.c.b16 %v565, %v561
    %v614 = vpack.c.b16 %v566, %v562
    %v615 = vpack.c.b16 %v567, %v563
    %v616 = vpack.c.b16 %v572, %v568
    %v617 = vpack.c.b16 %v573, %v569
    %v618 = vpack.c.b16 %v574, %v570
    %v619 = vpack.c.b16 %v575, %v571
    %v620 = vpack.c.b16 %v580, %v576
    %v621 = vpack.c.b16 %v581, %v577
    %v622 = vpack.c.b16 %v582, %v578
    %v623 = vpack.c.b16 %v583, %v579
    %v624 = vpack.c.b16 %v588, %v584
    %v625 = vpack.c.b16 %v589, %v585
    %v626 = vpack.c.b16 %v590, %v586
    %v627 = vpack.c.b16 %v591, %v587
    %v628 = vpack.c.b16 %v596, %v592
    %v629 = vpack.c.b16 %v597, %v593
    %v630 = vpack.c.b16 %v598, %v594
    %v631 = vpack.c.b16 %v599, %v595
    %664 = vmatprep.subr.bf16.mxu0 %v601
    %665 = vmatpush1.bf16.msra.mxu0 %v600
    %666 = vmatprep.subr.bf16.mxu0 %v605
    %667 = vmatpush1.bf16.msra.mxu0 %v604
    %668 = vmatprep.subr.bf16.mxu0 %v609
    %669 = vmatpush1.bf16.msra.mxu0 %v608
    %670 = vmatprep.subr.bf16.mxu0 %v613
    %671 = vmatpush1.bf16.msra.mxu0 %v612
    %672 = vmatprep.subr.bf16.mxu0 %v617
    %673 = vmatpush1.bf16.msra.mxu0 %v616
    %674 = vmatprep.subr.bf16.mxu0 %v621
    %675 = vmatpush1.bf16.msra.mxu0 %v620
    %676 = vmatprep.subr.bf16.mxu0 %v625
    %677 = vmatpush1.bf16.msra.mxu0 %v624
    %678 = vmatprep.subr.bf16.mxu0 %v629
    %679 = vmatpush1.bf16.msra.mxu0 %v628
    %680 = vmatprep.subr.bf16.mxu0 0
    %681 = vmatpush1.bf16.msra.mxu0 0
    %682 = vmatprep.subr.bf16.mxu0 0
    %683 = vmatpush1.bf16.msra.mxu0 0
    %684 = vmatprep.subr.bf16.mxu0 0
    %685 = vmatpush1.bf16.msra.mxu0 0
    %686 = vmatprep.subr.bf16.mxu0 0
    %687 = vmatpush1.bf16.msra.mxu0 0
    %688 = vmatprep.subr.bf16.mxu0 0
    %689 = vmatpush1.bf16.msra.mxu0 0
    %690 = vmatprep.subr.bf16.mxu0 0
    %691 = vmatpush1.bf16.msra.mxu0 0
    %692 = vmatprep.subr.bf16.mxu0 0
    %693 = vmatpush1.bf16.msra.mxu0 0
    %694 = vmatprep.subr.bf16.mxu0 0
    %695 = vmatpush1.bf16.msra.mxu0 0
    %696 = vmatprep.mubr.bf16.mxu0 0
    %697 = vmatmul.mubr.bf16.gmra.mrb[0].mxu0 %v471
    %v698 = vpop.f32.mrb[0].mxu0
    %v699 = vadd.f32 0.0, %v698
    %v700 = vpop.f32.mrb[0].mxu0
    %v701 = vadd.f32 0.0, %v700
    %v702 = vpop.f32.mrb[0].mxu0
    %v703 = vadd.f32 0.0, %v702
    %v704 = vpop.f32.mrb[0].mxu0
    %v705 = vadd.f32 0.0, %v704
    %706 = vdwg.mxu0
    %707 = vmatprep.subr.bf16.mxu0 %v603
    %708 = vmatpush1.bf16.msra.mxu0 %v602
    %709 = vmatprep.subr.bf16.mxu0 %v607
    %710 = vmatpush1.bf16.msra.mxu0 %v606
    %711 = vmatprep.subr.bf16.mxu0 %v611
    %712 = vmatpush1.bf16.msra.mxu0 %v610
    %713 = vmatprep.subr.bf16.mxu0 %v615
    %714 = vmatpush1.bf16.msra.mxu0 %v614
    %715 = vmatprep.subr.bf16.mxu0 %v619
    %716 = vmatpush1.bf16.msra.mxu0 %v618
    %717 = vmatprep.subr.bf16.mxu0 %v623
    %718 = vmatpush1.bf16.msra.mxu0 %v622
    %719 = vmatprep.subr.bf16.mxu0 %v627
    %720 = vmatpush1.bf16.msra.mxu0 %v626
    %721 = vmatprep.subr.bf16.mxu0 %v631
    %722 = vmatpush1.bf16.msra.mxu0 %v630
    %723 = vmatprep.subr.bf16.mxu0 0
    %724 = vmatpush1.bf16.msra.mxu0 0
    %725 = vmatprep.subr.bf16.mxu0 0
    %726 = vmatpush1.bf16.msra.mxu0 0
    %727 = vmatprep.subr.bf16.mxu0 0
    %728 = vmatpush1.bf16.msra.mxu0 0
    %729 = vmatprep.subr.bf16.mxu0 0
    %730 = vmatpush1.bf16.msra.mxu0 0
    %731 = vmatprep.subr.bf16.mxu0 0
    %732 = vmatpush1.bf16.msra.mxu0 0
    %733 = vmatprep.subr.bf16.mxu0 0
    %734 = vmatpush1.bf16.msra.mxu0 0
    %735 = vmatprep.subr.bf16.mxu0 0
    %736 = vmatpush1.bf16.msra.mxu0 0
    %737 = vmatprep.subr.bf16.mxu0 0
    %738 = vmatpush1.bf16.msra.mxu0 0
    %739 = vmatprep.mubr.bf16.mxu0 0
    %740 = vmatmul.mubr.bf16.gmra.mrb[0].mxu0 %v471
    %v741 = vpop.f32.mrb[0].mxu0
    %v742 = vadd.f32 0.0, %v741
    %v743 = vpop.f32.mrb[0].mxu0
    %v744 = vadd.f32 0.0, %v743
    %v745 = vpop.f32.mrb[0].mxu0
    %v746 = vadd.f32 0.0, %v745
    %v747 = vpop.f32.mrb[0].mxu0
    %v748 = vadd.f32 0.0, %v747
    %749 = vdwg.mxu0
    %v750 = vmul.f32 %v469, %v469
    %v751 = vmul.f32 %v470, %v470
    %752 = vadd.xlane.f32.xlu0 %v750
    %v753 = vpop.xlane.xlu0 %752
    %754 = vadd.xlane.f32.xlu0 %v751
    %v755 = vpop.xlane.xlu0 %754
    %v756 = vlaneseq
    %v757 = vand.u32 %v756, 127
    %v758 = vadd.s32 %v757, 128
    %v759 = vadd.s32 %v757, 256
    %v760 = vadd.s32 %v757, 384
    %vm761 = vcmp.lt.s32.totalorder %v757, 500
    %vm762 = vcmp.lt.s32.totalorder %v758, 500
    %vm763 = vcmp.lt.s32.totalorder %v759, 500
    %vm764 = vcmp.lt.s32.totalorder %v760, 500
    %v765 = vld [vmem:[%s6] sm:$0xf]
    %v767 = vlaneseq
    %v768 = vshrl.u32 %v767, 7
    %v769 = vsub.s32 0, %v768
    %v770 = vrot.slane %v765, %v769
    %v771 = vlaneseq
    %v772 = vshrl.u32 %v771, 7
    %v773 = vsub.s32 1, %v772
    %v774 = vrot.slane %v765, %v773
    %v775 = vlaneseq
    %v776 = vshrl.u32 %v775, 7
    %v777 = vsub.s32 2, %v776
    %v778 = vrot.slane %v765, %v777
    %v779 = vlaneseq
    %v780 = vshrl.u32 %v779, 7
    %v781 = vsub.s32 3, %v780
    %v782 = vrot.slane %v765, %v781
    %v787 = vadd.f32 %v753, %v770
    %v788 = vadd.f32 %v753, %v774
    %v789 = vadd.f32 %v753, %v778
    %v790 = vadd.f32 %v753, %v782
    %v791 = vadd.f32 %v755, %v770
    %v792 = vadd.f32 %v755, %v774
    %v793 = vadd.f32 %v755, %v778
    %v794 = vadd.f32 %v755, %v782
    %v795 = vmul.f32 %v699, 2.0
    %v796 = vmul.f32 %v701, 2.0
    %v797 = vmul.f32 %v742, 2.0
    %v798 = vmul.f32 %v744, 2.0
    %v799 = vmul.f32 %v703, 2.0
    %v800 = vmul.f32 %v705, 2.0
    %v801 = vmul.f32 %v746, 2.0
    %v802 = vmul.f32 %v748, 2.0
    %v803 = vsub.f32 %v787, %v795
    %v804 = vsub.f32 %v788, %v796
    %v805 = vsub.f32 %v789, %v797
    %v806 = vsub.f32 %v790, %v798
    %v807 = vsub.f32 %v791, %v799
    %v808 = vsub.f32 %v792, %v800
    %v809 = vsub.f32 %v793, %v801
    %v810 = vsub.f32 %v794, %v802
    %v811 = vmax.f32 %v803, 0.0
    %v812 = vmax.f32 %v804, 0.0
    %v813 = vmax.f32 %v805, 0.0
    %v814 = vmax.f32 %v806, 0.0
    %v815 = vmax.f32 %v807, 0.0
    %v816 = vmax.f32 %v808, 0.0
    %v817 = vmax.f32 %v809, 0.0
    %v818 = vmax.f32 %v810, 0.0
    %v819 = vadd.f32 %v811, 1.0
    %v820 = vadd.f32 %v812, 1.0
    %v821 = vadd.f32 %v813, 1.0
    %v822 = vadd.f32 %v814, 1.0
    %v823 = vadd.f32 %v815, 1.0
    %v824 = vadd.f32 %v816, 1.0
    %v825 = vadd.f32 %v817, 1.0
    %v826 = vadd.f32 %v818, 1.0
    %v827 = vrcp.pop %v819
    %v828 = vmul.f32 1.0, %v827
    %v829 = vrcp.pop %v820
    %v830 = vmul.f32 1.0, %v829
    %v831 = vrcp.pop %v821
    %v832 = vmul.f32 1.0, %v831
    %v833 = vrcp.pop %v822
    %v834 = vmul.f32 1.0, %v833
    %v835 = vrcp.pop %v823
    %v836 = vmul.f32 1.0, %v835
    %v837 = vrcp.pop %v824
    %v838 = vmul.f32 1.0, %v837
    %v839 = vrcp.pop %v825
    %v840 = vmul.f32 1.0, %v839
    %v841 = vrcp.pop %v826
    %v842 = vmul.f32 1.0, %v841
    %v843 = vsel %vm761, 1, 0
    %v844 = vsel %vm762, 1, 0
    %v845 = vsel %vm763, 1, 0
    %v846 = vsel %vm764, 1, 0
    %vm847 = vcmp.eq.s32.totalorder %v843, 1
    %vm848 = vcmp.eq.s32.totalorder %v844, 1
    %vm849 = vcmp.eq.s32.totalorder %v845, 1
    %vm850 = vcmp.eq.s32.totalorder %v846, 1
    %v851 = vsel %vm847, %v828, 0.0
    %v852 = vsel %vm848, %v830, 0.0
    %v853 = vsel %vm849, %v832, 0.0
    %v854 = vsel %vm850, %v834, 0.0
    %v855 = vsel %vm847, %v836, 0.0
    %v856 = vsel %vm848, %v838, 0.0
    %v857 = vsel %vm849, %v840, 0.0
    %v858 = vsel %vm850, %v842, 0.0
    %v859 = vadd.f32 %v851, %v852
    %v860 = vadd.f32 %v859, %v853
    %v861 = vadd.f32 %v860, %v854
    %862 = vadd.xlane.f32.xlu0 %v861
    %v863 = vpop.xlane.xlu0 %862
    %v864 = vadd.f32 %v855, %v856
    %v865 = vadd.f32 %v864, %v857
    %v866 = vadd.f32 %v865, %v858
    %867 = vadd.xlane.f32.xlu0 %v866
    %v868 = vpop.xlane.xlu0 %867
    %v869 = vrcp.pop %v863
    %v870 = vmul.f32 %v851, %v869
    %v871 = vmul.f32 %v852, %v869
    %v872 = vmul.f32 %v853, %v869
    %v873 = vmul.f32 %v854, %v869
    %v874 = vrcp.pop %v868
    %v875 = vmul.f32 %v855, %v874
    %v876 = vmul.f32 %v856, %v874
    %v877 = vmul.f32 %v857, %v874
    %v878 = vmul.f32 %v858, %v874
    %v879 = vadd.f32 %v870, %v875
    %v880 = vrot.slane %v879, 4
    %v881 = vadd.f32 %v879, %v880
    %v882 = vrot.slane %v881, 2
    %v883 = vadd.f32 %v881, %v882
    %v884 = vrot.slane %v883, 1
    %v885 = vadd.f32 %v883, %v884
    %v886 = vadd.f32 %v871, %v876
    %v887 = vrot.slane %v886, 4
    %v888 = vadd.f32 %v886, %v887
    %v889 = vrot.slane %v888, 2
    %v890 = vadd.f32 %v888, %v889
    %v891 = vrot.slane %v890, 1
    %v892 = vadd.f32 %v890, %v891
    %v893 = vadd.f32 %v872, %v877
    %v894 = vrot.slane %v893, 4
    %v895 = vadd.f32 %v893, %v894
    %v896 = vrot.slane %v895, 2
    %v897 = vadd.f32 %v895, %v896
    %v898 = vrot.slane %v897, 1
    %v899 = vadd.f32 %v897, %v898
    %v900 = vadd.f32 %v873, %v878
    %v901 = vrot.slane %v900, 4
    %v902 = vadd.f32 %v900, %v901
    %v903 = vrot.slane %v902, 2
    %v904 = vadd.f32 %v902, %v903
    %v905 = vrot.slane %v904, 1
    %v906 = vadd.f32 %v904, %v905
    %v907 = vsel %vm761, %v885, 1.0
    %v908 = vsel %vm762, %v892, 1.0
    %v909 = vsel %vm763, %v899, 1.0
    %v910 = vsel %vm764, %v906, 1.0
    %v911 = vmul.f32 %v870, %v870
    %v912 = vmul.f32 %v871, %v871
    %v913 = vmul.f32 %v872, %v872
    %v914 = vmul.f32 %v873, %v873
    %v915 = vmul.f32 %v875, %v875
    %v916 = vmul.f32 %v876, %v876
    %v917 = vmul.f32 %v877, %v877
    %v918 = vmul.f32 %v878, %v878
    %v919 = vrcp.pop %v907
    %v920 = vmul.f32 %v911, %v919
    %v921 = vrcp.pop %v908
    %v922 = vmul.f32 %v912, %v921
    %v923 = vrcp.pop %v909
    %v924 = vmul.f32 %v913, %v923
    %v925 = vrcp.pop %v910
    %v926 = vmul.f32 %v914, %v925
    %v927 = vmul.f32 %v915, %v919
    %v928 = vmul.f32 %v916, %v921
    %v929 = vmul.f32 %v917, %v923
    %v930 = vmul.f32 %v918, %v925
    %v931 = vadd.f32 %v920, %v922
    %v932 = vadd.f32 %v931, %v924
    %v933 = vadd.f32 %v932, %v926
    %934 = vadd.xlane.f32.xlu0 %v933
    %v935 = vpop.xlane.xlu0 %934
    %v936 = vadd.f32 %v927, %v928
    %v937 = vadd.f32 %v936, %v929
    %v938 = vadd.f32 %v937, %v930
    %939 = vadd.xlane.f32.xlu0 %v938
    %v940 = vpop.xlane.xlu0 %939
    %v941 = vrcp.pop %v935
    %v942 = vmul.f32 %v920, %v941
    %v943 = vmul.f32 %v922, %v941
    %v944 = vmul.f32 %v924, %v941
    %v945 = vmul.f32 %v926, %v941
    %v946 = vrcp.pop %v940
    %v947 = vmul.f32 %v927, %v946
    %v948 = vmul.f32 %v928, %v946
    %v949 = vmul.f32 %v929, %v946
    %v950 = vmul.f32 %v930, %v946
    %v951 = vsel %vm847, %v870, 1.0
    %v952 = vsel %vm848, %v871, 1.0
    %v953 = vsel %vm849, %v872, 1.0
    %v954 = vsel %vm850, %v873, 1.0
    %v955 = vsel %vm847, %v875, 1.0
    %v956 = vsel %vm848, %v876, 1.0
    %v957 = vsel %vm849, %v877, 1.0
    %v958 = vsel %vm850, %v878, 1.0
    %v959 = vlog2.pop %v951
    %v960 = vmul.f32 %v959, 0.6931472
    %v961 = vlog2.pop %v952
    %v962 = vmul.f32 %v961, 0.6931472
    %v963 = vlog2.pop %v953
    %v964 = vmul.f32 %v963, 0.6931472
    %v965 = vlog2.pop %v954
    %v966 = vmul.f32 %v965, 0.6931472
    %v967 = vlog2.pop %v955
    %v968 = vmul.f32 %v967, 0.6931472
    %v969 = vlog2.pop %v956
    %v970 = vmul.f32 %v969, 0.6931472
    %v971 = vlog2.pop %v957
    %v972 = vmul.f32 %v971, 0.6931472
    %v973 = vlog2.pop %v958
    %v974 = vmul.f32 %v973, 0.6931472
    %v975 = vlog2.pop %v907
    %v976 = vmul.f32 %v975, 0.6931472
    %v977 = vlog2.pop %v908
    %v978 = vmul.f32 %v977, 0.6931472
    %v979 = vlog2.pop %v909
    %v980 = vmul.f32 %v979, 0.6931472
    %v981 = vlog2.pop %v910
    %v982 = vmul.f32 %v981, 0.6931472
    %v983 = vsub.f32 %v960, %v976
    %v984 = vsub.f32 %v962, %v978
    %v985 = vsub.f32 %v964, %v980
    %v986 = vsub.f32 %v966, %v982
    %v987 = vsub.f32 %v968, %v976
    %v988 = vsub.f32 %v970, %v978
    %v989 = vsub.f32 %v972, %v980
    %v990 = vsub.f32 %v974, %v982
    %v991 = vlog2.pop %v935
    %v992 = vmul.f32 %v991, 0.6931472
    %v993 = vlog2.pop %v940
    %v994 = vmul.f32 %v993, 0.6931472
    %v995 = vsub.f32 %v983, %v992
    %v996 = vsub.f32 %v984, %v992
    %v997 = vsub.f32 %v985, %v992
    %v998 = vsub.f32 %v986, %v992
    %v999 = vsub.f32 %v987, %v994
    %v1000 = vsub.f32 %v988, %v994
    %v1001 = vsub.f32 %v989, %v994
    %v1002 = vsub.f32 %v990, %v994
    %v1003 = vmul.f32 %v942, %v995
    %v1004 = vmul.f32 %v943, %v996
    %v1005 = vmul.f32 %v944, %v997
    %v1006 = vmul.f32 %v945, %v998
    %v1007 = vmul.f32 %v947, %v999
    %v1008 = vmul.f32 %v948, %v1000
    %v1009 = vmul.f32 %v949, %v1001
    %v1010 = vmul.f32 %v950, %v1002
    %v1011 = vadd.f32 %v1003, %v1004
    %v1012 = vadd.f32 %v1011, %v1005
    %v1013 = vadd.f32 %v1012, %v1006
    %1014 = vadd.xlane.f32.xlu0 %v1013
    %v1015 = vpop.xlane.xlu0 %1014
    %v1016 = vadd.f32 %v1007, %v1008
    %v1017 = vadd.f32 %v1016, %v1009
    %v1018 = vadd.f32 %v1017, %v1010
    %1019 = vadd.xlane.f32.xlu0 %v1018
    %v1020 = vpop.xlane.xlu0 %1019
    %v1021 = vadd.f32 %v1015, %v1020
    %v1022 = vrot.slane %v1021, 4
    %v1023 = vadd.f32 %v1021, %v1022
    %v1024 = vrot.slane %v1023, 2
    %v1025 = vadd.f32 %v1023, %v1024
    %v1026 = vrot.slane %v1025, 1
    %v1027 = vadd.f32 %v1025, %v1026
    %v1028 = vadd.f32 %v1027, 0.0
    %1029 = vst [vmem:[#allocation29] sm:$0x1] %v1028
    %v1030 = vpack.c.bf16 %v875, %v870
    %v1031 = vpack.c.bf16 %v876, %v871
    %v1032 = vpack.c.bf16 %v877, %v872
    %v1033 = vpack.c.bf16 %v878, %v873
    %1034 = vmatprep.subr.bf16.mxu0 %v1031
    %1035 = vmatpush1.bf16.msra.mxu0 %v1030
    %1036 = vmatprep.subr.bf16.mxu0 0
    %1037 = vmatpush1.bf16.msra.mxu0 0
    %1038 = vmatprep.subr.bf16.mxu0 0
    %1039 = vmatpush1.bf16.msra.mxu0 0
    %1040 = vmatprep.subr.bf16.mxu0 0
    %1041 = vmatpush1.bf16.msra.mxu0 0
    %1042 = vmatprep.subr.bf16.mxu0 0
    %1043 = vmatpush1.bf16.msra.mxu0 0
    %1044 = vmatprep.subr.bf16.mxu0 0
    %1045 = vmatpush1.bf16.msra.mxu0 0
    %1046 = vmatprep.subr.bf16.mxu0 0
    %1047 = vmatpush1.bf16.msra.mxu0 0
    %1048 = vmatprep.subr.bf16.mxu0 0
    %1049 = vmatpush1.bf16.msra.mxu0 0
    %1050 = vmatprep.subr.bf16.mxu0 0
    %1051 = vmatpush1.bf16.msra.mxu0 0
    %1052 = vmatprep.subr.bf16.mxu0 0
    %1053 = vmatpush1.bf16.msra.mxu0 0
    %1054 = vmatprep.subr.bf16.mxu0 0
    %1055 = vmatpush1.bf16.msra.mxu0 0
    %1056 = vmatprep.subr.bf16.mxu0 0
    %1057 = vmatpush1.bf16.msra.mxu0 0
    %1058 = vmatprep.subr.bf16.mxu0 0
    %1059 = vmatpush1.bf16.msra.mxu0 0
    %1060 = vmatprep.subr.bf16.mxu0 0
    %1061 = vmatpush1.bf16.msra.mxu0 0
    %1062 = vmatprep.subr.bf16.mxu0 0
    %1063 = vmatpush1.bf16.msra.mxu0 0
    %1064 = vmatprep.subr.bf16.mxu0 0
    %1065 = vmatpush1.bf16.msra.mxu0 0
    %1066 = vmatprep.mubr.bf16.mxu0 0
    %1067 = vmatmul.mubr.bf16.gmra.mrb[0].mxu0 %v318
    %v1068 = vpop.f32.mrb[0].mxu0
    %v1069 = vadd.f32 0.0, %v1068
    %v1070 = vpop.f32.mrb[0].mxu0
    %v1071 = vadd.f32 0.0, %v1070
    %v1072 = vpop.f32.mrb[0].mxu0
    %v1073 = vadd.f32 0.0, %v1072
    %v1074 = vpop.f32.mrb[0].mxu0
    %v1075 = vadd.f32 0.0, %v1074
    %1076 = vdwg.mxu0
    %1077 = vmatprep.subr.bf16.mxu0 %v1033
    %1078 = vmatpush1.bf16.msra.mxu0 %v1032
    %1079 = vmatprep.subr.bf16.mxu0 0
    %1080 = vmatpush1.bf16.msra.mxu0 0
    %1081 = vmatprep.subr.bf16.mxu0 0
    %1082 = vmatpush1.bf16.msra.mxu0 0
    %1083 = vmatprep.subr.bf16.mxu0 0
    %1084 = vmatpush1.bf16.msra.mxu0 0
    %1085 = vmatprep.subr.bf16.mxu0 0
    %1086 = vmatpush1.bf16.msra.mxu0 0
    %1087 = vmatprep.subr.bf16.mxu0 0
    %1088 = vmatpush1.bf16.msra.mxu0 0
    %1089 = vmatprep.subr.bf16.mxu0 0
    %1090 = vmatpush1.bf16.msra.mxu0 0
    %1091 = vmatprep.subr.bf16.mxu0 0
    %1092 = vmatpush1.bf16.msra.mxu0 0
    %1093 = vmatprep.subr.bf16.mxu0 0
    %1094 = vmatpush1.bf16.msra.mxu0 0
    %1095 = vmatprep.subr.bf16.mxu0 0
    %1096 = vmatpush1.bf16.msra.mxu0 0
    %1097 = vmatprep.subr.bf16.mxu0 0
    %1098 = vmatpush1.bf16.msra.mxu0 0
    %1099 = vmatprep.subr.bf16.mxu0 0
    %1100 = vmatpush1.bf16.msra.mxu0 0
    %1101 = vmatprep.subr.bf16.mxu0 0
    %1102 = vmatpush1.bf16.msra.mxu0 0
    %1103 = vmatprep.subr.bf16.mxu0 0
    %1104 = vmatpush1.bf16.msra.mxu0 0
    %1105 = vmatprep.subr.bf16.mxu0 0
    %1106 = vmatpush1.bf16.msra.mxu0 0
    %1107 = vmatprep.subr.bf16.mxu0 0
    %1108 = vmatpush1.bf16.msra.mxu0 0
    %1109 = vmatprep.mubr.bf16.mxu0 0
    %1110 = vmatmul.mubr.bf16.gmra.mrb[0].mxu0 %v318
    %v1111 = vpop.f32.mrb[0].mxu0
    %v1112 = vadd.f32 0.0, %v1111
    %v1113 = vpop.f32.mrb[0].mxu0
    %v1114 = vadd.f32 0.0, %v1113
    %v1115 = vpop.f32.mrb[0].mxu0
    %v1116 = vadd.f32 0.0, %v1115
    %v1117 = vpop.f32.mrb[0].mxu0
    %v1118 = vadd.f32 0.0, %v1117
    %1119 = vdwg.mxu0
    %v1120 = vld [vmem:[#allocation10] sm:$0xf]
    %v1121 = vld [vmem:[#allocation10 + $0x4] sm:$0xf]
    %v1122 = vld [vmem:[#allocation10 + $0x8] sm:$0xf]
    %v1123 = vld [vmem:[#allocation10 + $0xc] sm:$0xf]
    %v1124 = vld [vmem:[#allocation10 + $0x10] sm:$0xf]
    %v1125 = vld [vmem:[#allocation10 + $0x14] sm:$0xf]
    %v1126 = vld [vmem:[#allocation10 + $0x18] sm:$0xf]
    %v1127 = vld [vmem:[#allocation10 + $0x1c] sm:$0xf]
    %v1128 = vld [vmem:[#allocation10 + $0x20] sm:$0xf]
    %v1129 = vld [vmem:[#allocation10 + $0x24] sm:$0xf]
    %v1130 = vld [vmem:[#allocation10 + $0x28] sm:$0xf]
    %v1131 = vld [vmem:[#allocation10 + $0x2c] sm:$0xf]
    %v1132 = vld [vmem:[#allocation10 + $0x30] sm:$0xf]
    %v1133 = vld [vmem:[#allocation10 + $0x34] sm:$0xf]
    %v1134 = vld [vmem:[#allocation10 + $0x38] sm:$0xf]
    %v1135 = vld [vmem:[#allocation10 + $0x3c] sm:$0xf]
    %v1136 = vld [vmem:[#allocation10 + $0x40] sm:$0xf]
    %v1137 = vld [vmem:[#allocation10 + $0x44] sm:$0xf]
    %v1138 = vld [vmem:[#allocation10 + $0x48] sm:$0xf]
    %v1139 = vld [vmem:[#allocation10 + $0x4c] sm:$0xf]
    %v1140 = vld [vmem:[#allocation10 + $0x50] sm:$0xf]
    %v1141 = vld [vmem:[#allocation10 + $0x54] sm:$0xf]
    %v1142 = vld [vmem:[#allocation10 + $0x58] sm:$0xf]
    %v1143 = vld [vmem:[#allocation10 + $0x5c] sm:$0xf]
    %v1144 = vld [vmem:[#allocation10 + $0x60] sm:$0xf]
    %v1145 = vld [vmem:[#allocation10 + $0x64] sm:$0xf]
    %v1146 = vld [vmem:[#allocation10 + $0x68] sm:$0xf]
    %v1147 = vld [vmem:[#allocation10 + $0x6c] sm:$0xf]
    %v1148 = vld [vmem:[#allocation10 + $0x70] sm:$0xf]
    %v1149 = vld [vmem:[#allocation10 + $0x74] sm:$0xf]
    %v1150 = vld [vmem:[#allocation10 + $0x78] sm:$0xf]
    %v1151 = vld [vmem:[#allocation10 + $0x7c] sm:$0xf]
    %v1152 = vld [vmem:[#allocation10 + $0x80] sm:$0xf]
    %v1153 = vld [vmem:[#allocation10 + $0x84] sm:$0xf]
    %v1154 = vld [vmem:[#allocation10 + $0x88] sm:$0xf]
    %v1155 = vld [vmem:[#allocation10 + $0x8c] sm:$0xf]
    %v1156 = vld [vmem:[#allocation10 + $0x90] sm:$0xf]
    %v1157 = vld [vmem:[#allocation10 + $0x94] sm:$0xf]
    %v1158 = vld [vmem:[#allocation10 + $0x98] sm:$0xf]
    %v1159 = vld [vmem:[#allocation10 + $0x9c] sm:$0xf]
    %v1160 = vld [vmem:[#allocation10 + $0xa0] sm:$0xf]
    %v1161 = vld [vmem:[#allocation10 + $0xa4] sm:$0xf]
    %v1162 = vld [vmem:[#allocation10 + $0xa8] sm:$0xf]
    %v1163 = vld [vmem:[#allocation10 + $0xac] sm:$0xf]
    %v1164 = vld [vmem:[#allocation10 + $0xb0] sm:$0xf]
    %v1165 = vld [vmem:[#allocation10 + $0xb4] sm:$0xf]
    %v1166 = vld [vmem:[#allocation10 + $0xb8] sm:$0xf]
    %v1167 = vld [vmem:[#allocation10 + $0xbc] sm:$0xf]
    %v1168 = vld [vmem:[#allocation10 + $0xc0] sm:$0xf]
    %v1169 = vld [vmem:[#allocation10 + $0xc4] sm:$0xf]
    %v1170 = vld [vmem:[#allocation10 + $0xc8] sm:$0xf]
    %v1171 = vld [vmem:[#allocation10 + $0xcc] sm:$0xf]
    %v1172 = vld [vmem:[#allocation10 + $0xd0] sm:$0xf]
    %v1173 = vld [vmem:[#allocation10 + $0xd4] sm:$0xf]
    %v1174 = vld [vmem:[#allocation10 + $0xd8] sm:$0xf]
    %v1175 = vld [vmem:[#allocation10 + $0xdc] sm:$0xf]
    %v1176 = vld [vmem:[#allocation10 + $0xe0] sm:$0xf]
    %v1177 = vld [vmem:[#allocation10 + $0xe4] sm:$0xf]
    %v1178 = vld [vmem:[#allocation10 + $0xe8] sm:$0xf]
    %v1179 = vld [vmem:[#allocation10 + $0xec] sm:$0xf]
    %v1180 = vld [vmem:[#allocation10 + $0xf0] sm:$0xf]
    %v1181 = vld [vmem:[#allocation10 + $0xf4] sm:$0xf]
    %v1182 = vld [vmem:[#allocation10 + $0xf8] sm:$0xf]
    %v1183 = vld [vmem:[#allocation10 + $0xfc] sm:$0xf]
    %v1184 = vpack.c.bf16 %v1073, %v1069
    %v1185 = vpack.c.bf16 %v1075, %v1071
    %v1186 = vpack.c.bf16 %v1116, %v1112
    %v1187 = vpack.c.bf16 %v1118, %v1114
    %v1188 = vld [vmem:[#allocation11] sm:$0xf]
    %v1189 = vld [vmem:[#allocation11 + $0x4] sm:$0xf]
    %v1190 = vld [vmem:[#allocation11 + $0x8] sm:$0xf]
    %v1191 = vld [vmem:[#allocation11 + $0xc] sm:$0xf]
    %v1192 = vld [vmem:[#allocation11 + $0x10] sm:$0xf]
    %v1193 = vld [vmem:[#allocation11 + $0x14] sm:$0xf]
    %v1194 = vld [vmem:[#allocation11 + $0x18] sm:$0xf]
    %v1195 = vld [vmem:[#allocation11 + $0x1c] sm:$0xf]
    %v1196 = vld [vmem:[#allocation11 + $0x20] sm:$0xf]
    %v1197 = vld [vmem:[#allocation11 + $0x24] sm:$0xf]
    %v1198 = vld [vmem:[#allocation11 + $0x28] sm:$0xf]
    %v1199 = vld [vmem:[#allocation11 + $0x2c] sm:$0xf]
    %v1200 = vld [vmem:[#allocation11 + $0x30] sm:$0xf]
    %v1201 = vld [vmem:[#allocation11 + $0x34] sm:$0xf]
    %v1202 = vld [vmem:[#allocation11 + $0x38] sm:$0xf]
    %v1203 = vld [vmem:[#allocation11 + $0x3c] sm:$0xf]
    %v1204 = vld [vmem:[#allocation11 + $0x40] sm:$0xf]
    %v1205 = vld [vmem:[#allocation11 + $0x44] sm:$0xf]
    %v1206 = vld [vmem:[#allocation11 + $0x48] sm:$0xf]
    %v1207 = vld [vmem:[#allocation11 + $0x4c] sm:$0xf]
    %v1208 = vld [vmem:[#allocation11 + $0x50] sm:$0xf]
    %v1209 = vld [vmem:[#allocation11 + $0x54] sm:$0xf]
    %v1210 = vld [vmem:[#allocation11 + $0x58] sm:$0xf]
    %v1211 = vld [vmem:[#allocation11 + $0x5c] sm:$0xf]
    %v1212 = vld [vmem:[#allocation11 + $0x60] sm:$0xf]
    %v1213 = vld [vmem:[#allocation11 + $0x64] sm:$0xf]
    %v1214 = vld [vmem:[#allocation11 + $0x68] sm:$0xf]
    %v1215 = vld [vmem:[#allocation11 + $0x6c] sm:$0xf]
    %v1216 = vld [vmem:[#allocation11 + $0x70] sm:$0xf]
    %v1217 = vld [vmem:[#allocation11 + $0x74] sm:$0xf]
    %v1218 = vld [vmem:[#allocation11 + $0x78] sm:$0xf]
    %v1219 = vld [vmem:[#allocation11 + $0x7c] sm:$0xf]
    %v1220 = vld [vmem:[#allocation11 + $0x80] sm:$0xf]
    %v1221 = vld [vmem:[#allocation11 + $0x84] sm:$0xf]
    %v1222 = vld [vmem:[#allocation11 + $0x88] sm:$0xf]
    %v1223 = vld [vmem:[#allocation11 + $0x8c] sm:$0xf]
    %v1224 = vld [vmem:[#allocation11 + $0x90] sm:$0xf]
    %v1225 = vld [vmem:[#allocation11 + $0x94] sm:$0xf]
    %v1226 = vld [vmem:[#allocation11 + $0x98] sm:$0xf]
    %v1227 = vld [vmem:[#allocation11 + $0x9c] sm:$0xf]
    %v1228 = vld [vmem:[#allocation11 + $0xa0] sm:$0xf]
    %v1229 = vld [vmem:[#allocation11 + $0xa4] sm:$0xf]
    %v1230 = vld [vmem:[#allocation11 + $0xa8] sm:$0xf]
    %v1231 = vld [vmem:[#allocation11 + $0xac] sm:$0xf]
    %v1232 = vld [vmem:[#allocation11 + $0xb0] sm:$0xf]
    %v1233 = vld [vmem:[#allocation11 + $0xb4] sm:$0xf]
    %v1234 = vld [vmem:[#allocation11 + $0xb8] sm:$0xf]
    %v1235 = vld [vmem:[#allocation11 + $0xbc] sm:$0xf]
    %v1236 = vld [vmem:[#allocation11 + $0xc0] sm:$0xf]
    %v1237 = vld [vmem:[#allocation11 + $0xc4] sm:$0xf]
    %v1238 = vld [vmem:[#allocation11 + $0xc8] sm:$0xf]
    %v1239 = vld [vmem:[#allocation11 + $0xcc] sm:$0xf]
    %v1240 = vld [vmem:[#allocation11 + $0xd0] sm:$0xf]
    %v1241 = vld [vmem:[#allocation11 + $0xd4] sm:$0xf]
    %v1242 = vld [vmem:[#allocation11 + $0xd8] sm:$0xf]
    %v1243 = vld [vmem:[#allocation11 + $0xdc] sm:$0xf]
    %v1244 = vld [vmem:[#allocation11 + $0xe0] sm:$0xf]
    %v1245 = vld [vmem:[#allocation11 + $0xe4] sm:$0xf]
    %v1246 = vld [vmem:[#allocation11 + $0xe8] sm:$0xf]
    %v1247 = vld [vmem:[#allocation11 + $0xec] sm:$0xf]
    %v1248 = vld [vmem:[#allocation11 + $0xf0] sm:$0xf]
    %v1249 = vld [vmem:[#allocation11 + $0xf4] sm:$0xf]
    %v1250 = vld [vmem:[#allocation11 + $0xf8] sm:$0xf]
    %v1251 = vld [vmem:[#allocation11 + $0xfc] sm:$0xf]
    %v1316 = vunpack.c.l.b16 %v1188
    %v1317 = vunpack.c.l.b16 %v1189
    %v1318 = vunpack.c.l.b16 %v1190
    %v1319 = vunpack.c.l.b16 %v1191
    %v1320 = vunpack.c.l.b16 %v1192
    %v1321 = vunpack.c.l.b16 %v1193
    %v1322 = vunpack.c.l.b16 %v1194
    %v1323 = vunpack.c.l.b16 %v1195
    %v1324 = vunpack.c.l.b16 %v1196
    %v1325 = vunpack.c.l.b16 %v1197
    %v1326 = vunpack.c.l.b16 %v1198
    %v1327 = vunpack.c.l.b16 %v1199
    %v1328 = vunpack.c.l.b16 %v1200
    %v1329 = vunpack.c.l.b16 %v1201
    %v1330 = vunpack.c.l.b16 %v1202
    %v1331 = vunpack.c.l.b16 %v1203
    %v1332 = vunpack.c.l.b16 %v1204
    %v1333 = vunpack.c.l.b16 %v1205
    %v1334 = vunpack.c.l.b16 %v1206
    %v1335 = vunpack.c.l.b16 %v1207
    %v1336 = vunpack.c.l.b16 %v1208
    %v1337 = vunpack.c.l.b16 %v1209
    %v1338 = vunpack.c.l.b16 %v1210
    %v1339 = vunpack.c.l.b16 %v1211
    %v1340 = vunpack.c.l.b16 %v1212
    %v1341 = vunpack.c.l.b16 %v1213
    %v1342 = vunpack.c.l.b16 %v1214
    %v1343 = vunpack.c.l.b16 %v1215
    %v1344 = vunpack.c.l.b16 %v1216
    %v1345 = vunpack.c.l.b16 %v1217
    %v1346 = vunpack.c.l.b16 %v1218
    %v1347 = vunpack.c.l.b16 %v1219
    %v1348 = vunpack.c.l.b16 %v1220
    %v1349 = vunpack.c.l.b16 %v1221
    %v1350 = vunpack.c.l.b16 %v1222
    %v1351 = vunpack.c.l.b16 %v1223
    %v1352 = vunpack.c.l.b16 %v1224
    %v1353 = vunpack.c.l.b16 %v1225
    %v1354 = vunpack.c.l.b16 %v1226
    %v1355 = vunpack.c.l.b16 %v1227
    %v1356 = vunpack.c.l.b16 %v1228
    %v1357 = vunpack.c.l.b16 %v1229
    %v1358 = vunpack.c.l.b16 %v1230
    %v1359 = vunpack.c.l.b16 %v1231
    %v1360 = vunpack.c.l.b16 %v1232
    %v1361 = vunpack.c.l.b16 %v1233
    %v1362 = vunpack.c.l.b16 %v1234
    %v1363 = vunpack.c.l.b16 %v1235
    %v1364 = vunpack.c.l.b16 %v1236
    %v1365 = vunpack.c.l.b16 %v1237
    %v1366 = vunpack.c.l.b16 %v1238
    %v1367 = vunpack.c.l.b16 %v1239
    %v1368 = vunpack.c.l.b16 %v1240
    %v1369 = vunpack.c.l.b16 %v1241
    %v1370 = vunpack.c.l.b16 %v1242
    %v1371 = vunpack.c.l.b16 %v1243
    %v1372 = vunpack.c.l.b16 %v1244
    %v1373 = vunpack.c.l.b16 %v1245
    %v1374 = vunpack.c.l.b16 %v1246
    %v1375 = vunpack.c.l.b16 %v1247
    %v1376 = vunpack.c.l.b16 %v1248
    %v1377 = vunpack.c.l.b16 %v1249
    %v1378 = vunpack.c.l.b16 %v1250
    %v1379 = vunpack.c.l.b16 %v1251
    %v1380 = vpack.c.b16 %v1317, %v1316
    %v1381 = vpack.c.b16 %v1319, %v1318
    %v1382 = vpack.c.b16 %v1321, %v1320
    %v1383 = vpack.c.b16 %v1323, %v1322
    %v1384 = vpack.c.b16 %v1325, %v1324
    %v1385 = vpack.c.b16 %v1327, %v1326
    %v1386 = vpack.c.b16 %v1329, %v1328
    %v1387 = vpack.c.b16 %v1331, %v1330
    %v1388 = vpack.c.b16 %v1333, %v1332
    %v1389 = vpack.c.b16 %v1335, %v1334
    %v1390 = vpack.c.b16 %v1337, %v1336
    %v1391 = vpack.c.b16 %v1339, %v1338
    %v1392 = vpack.c.b16 %v1341, %v1340
    %v1393 = vpack.c.b16 %v1343, %v1342
    %v1394 = vpack.c.b16 %v1345, %v1344
    %v1395 = vpack.c.b16 %v1347, %v1346
    %v1396 = vpack.c.b16 %v1349, %v1348
    %v1397 = vpack.c.b16 %v1351, %v1350
    %v1398 = vpack.c.b16 %v1353, %v1352
    %v1399 = vpack.c.b16 %v1355, %v1354
    %v1400 = vpack.c.b16 %v1357, %v1356
    %v1401 = vpack.c.b16 %v1359, %v1358
    %v1402 = vpack.c.b16 %v1361, %v1360
    %v1403 = vpack.c.b16 %v1363, %v1362
    %v1404 = vpack.c.b16 %v1365, %v1364
    %v1405 = vpack.c.b16 %v1367, %v1366
    %v1406 = vpack.c.b16 %v1369, %v1368
    %v1407 = vpack.c.b16 %v1371, %v1370
    %v1408 = vpack.c.b16 %v1373, %v1372
    %v1409 = vpack.c.b16 %v1375, %v1374
    %v1410 = vpack.c.b16 %v1377, %v1376
    %v1411 = vpack.c.b16 %v1379, %v1378
    %1444 = vmatprep.subr.bf16.mxu0 0
    %1445 = vmatpush1.bf16.msra.mxu0 %v1380
    %1446 = vmatprep.subr.bf16.mxu0 0
    %1447 = vmatpush1.bf16.msra.mxu0 %v1381
    %1448 = vmatprep.subr.bf16.mxu0 0
    %1449 = vmatpush1.bf16.msra.mxu0 %v1382
    %1450 = vmatprep.subr.bf16.mxu0 0
    %1451 = vmatpush1.bf16.msra.mxu0 %v1383
    %1452 = vmatprep.subr.bf16.mxu0 0
    %1453 = vmatpush1.bf16.msra.mxu0 %v1384
    %1454 = vmatprep.subr.bf16.mxu0 0
    %1455 = vmatpush1.bf16.msra.mxu0 %v1385
    %1456 = vmatprep.subr.bf16.mxu0 0
    %1457 = vmatpush1.bf16.msra.mxu0 %v1386
    %1458 = vmatprep.subr.bf16.mxu0 0
    %1459 = vmatpush1.bf16.msra.mxu0 %v1387
    %1460 = vmatprep.subr.bf16.mxu0 0
    %1461 = vmatpush1.bf16.msra.mxu0 %v1388
    %1462 = vmatprep.subr.bf16.mxu0 0
    %1463 = vmatpush1.bf16.msra.mxu0 %v1389
    %1464 = vmatprep.subr.bf16.mxu0 0
    %1465 = vmatpush1.bf16.msra.mxu0 %v1390
    %1466 = vmatprep.subr.bf16.mxu0 0
    %1467 = vmatpush1.bf16.msra.mxu0 %v1391
    %1468 = vmatprep.subr.bf16.mxu0 0
    %1469 = vmatpush1.bf16.msra.mxu0 %v1392
    %1470 = vmatprep.subr.bf16.mxu0 0
    %1471 = vmatpush1.bf16.msra.mxu0 %v1393
    %1472 = vmatprep.subr.bf16.mxu0 0
    %1473 = vmatpush1.bf16.msra.mxu0 %v1394
    %1474 = vmatprep.subr.bf16.mxu0 0
    %1475 = vmatpush1.bf16.msra.mxu0 %v1395
    %1476 = vmatprep.mubr.bf16.mxu0 %v1185
    %1477 = vmatmul.mubr.bf16.gmra.mrb[0].mxu0 %v1184
    %v1478 = vpop.f32.mrb[0].mxu0
    %v1479 = vadd.f32 0.0, %v1478
    %v1480 = vpop.f32.mrb[0].mxu0
    %v1481 = vpop.f32.mrb[0].mxu0
    %v1482 = vadd.f32 0.0, %v1481
    %v1483 = vpop.f32.mrb[0].mxu0
    %1484 = vdwg.mxu0
    %1485 = vmatprep.subr.bf16.mxu0 0
    %1486 = vmatpush1.bf16.msra.mxu0 %v1396
    %1487 = vmatprep.subr.bf16.mxu0 0
    %1488 = vmatpush1.bf16.msra.mxu0 %v1397
    %1489 = vmatprep.subr.bf16.mxu0 0
    %1490 = vmatpush1.bf16.msra.mxu0 %v1398
    %1491 = vmatprep.subr.bf16.mxu0 0
    %1492 = vmatpush1.bf16.msra.mxu0 %v1399
    %1493 = vmatprep.subr.bf16.mxu0 0
    %1494 = vmatpush1.bf16.msra.mxu0 %v1400
    %1495 = vmatprep.subr.bf16.mxu0 0
    %1496 = vmatpush1.bf16.msra.mxu0 %v1401
    %1497 = vmatprep.subr.bf16.mxu0 0
    %1498 = vmatpush1.bf16.msra.mxu0 %v1402
    %1499 = vmatprep.subr.bf16.mxu0 0
    %1500 = vmatpush1.bf16.msra.mxu0 %v1403
    %1501 = vmatprep.subr.bf16.mxu0 0
    %1502 = vmatpush1.bf16.msra.mxu0 %v1404
    %1503 = vmatprep.subr.bf16.mxu0 0
    %1504 = vmatpush1.bf16.msra.mxu0 %v1405
    %1505 = vmatprep.subr.bf16.mxu0 0
    %1506 = vmatpush1.bf16.msra.mxu0 %v1406
    %1507 = vmatprep.subr.bf16.mxu0 0
    %1508 = vmatpush1.bf16.msra.mxu0 %v1407
    %1509 = vmatprep.subr.bf16.mxu0 0
    %1510 = vmatpush1.bf16.msra.mxu0 %v1408
    %1511 = vmatprep.subr.bf16.mxu0 0
    %1512 = vmatpush1.bf16.msra.mxu0 %v1409
    %1513 = vmatprep.subr.bf16.mxu0 0
    %1514 = vmatpush1.bf16.msra.mxu0 %v1410
    %1515 = vmatprep.subr.bf16.mxu0 0
    %1516 = vmatpush1.bf16.msra.mxu0 %v1411
    %1517 = vmatprep.mubr.bf16.mxu0 %v1187
    %1518 = vmatmul.mubr.bf16.gmra.mrb[0].mxu0 %v1186
    %v1519 = vpop.f32.mrb[0].mxu0
    %v1520 = vadd.f32 %v1479, %v1519
    %v1521 = vpop.f32.mrb[0].mxu0
    %v1522 = vpop.f32.mrb[0].mxu0
    %v1523 = vadd.f32 %v1482, %v1522
    %v1524 = vpop.f32.mrb[0].mxu0
    %1525 = vdwg.mxu0
    %v1590 = vunpack.c.l.b16 %v1120
    %v1591 = vunpack.c.l.b16 %v1121
    %v1592 = vunpack.c.l.b16 %v1122
    %v1593 = vunpack.c.l.b16 %v1123
    %v1594 = vunpack.c.l.b16 %v1124
    %v1595 = vunpack.c.l.b16 %v1125
    %v1596 = vunpack.c.l.b16 %v1126
    %v1597 = vunpack.c.l.b16 %v1127
    %v1598 = vunpack.c.l.b16 %v1128
    %v1599 = vunpack.c.l.b16 %v1129
    %v1600 = vunpack.c.l.b16 %v1130
    %v1601 = vunpack.c.l.b16 %v1131
    %v1602 = vunpack.c.l.b16 %v1132
    %v1603 = vunpack.c.l.b16 %v1133
    %v1604 = vunpack.c.l.b16 %v1134
    %v1605 = vunpack.c.l.b16 %v1135
    %v1606 = vunpack.c.l.b16 %v1136
    %v1607 = vunpack.c.l.b16 %v1137
    %v1608 = vunpack.c.l.b16 %v1138
    %v1609 = vunpack.c.l.b16 %v1139
    %v1610 = vunpack.c.l.b16 %v1140
    %v1611 = vunpack.c.l.b16 %v1141
    %v1612 = vunpack.c.l.b16 %v1142
    %v1613 = vunpack.c.l.b16 %v1143
    %v1614 = vunpack.c.l.b16 %v1144
    %v1615 = vunpack.c.l.b16 %v1145
    %v1616 = vunpack.c.l.b16 %v1146
    %v1617 = vunpack.c.l.b16 %v1147
    %v1618 = vunpack.c.l.b16 %v1148
    %v1619 = vunpack.c.l.b16 %v1149
    %v1620 = vunpack.c.l.b16 %v1150
    %v1621 = vunpack.c.l.b16 %v1151
    %v1622 = vunpack.c.l.b16 %v1152
    %v1623 = vunpack.c.l.b16 %v1153
    %v1624 = vunpack.c.l.b16 %v1154
    %v1625 = vunpack.c.l.b16 %v1155
    %v1626 = vunpack.c.l.b16 %v1156
    %v1627 = vunpack.c.l.b16 %v1157
    %v1628 = vunpack.c.l.b16 %v1158
    %v1629 = vunpack.c.l.b16 %v1159
    %v1630 = vunpack.c.l.b16 %v1160
    %v1631 = vunpack.c.l.b16 %v1161
    %v1632 = vunpack.c.l.b16 %v1162
    %v1633 = vunpack.c.l.b16 %v1163
    %v1634 = vunpack.c.l.b16 %v1164
    %v1635 = vunpack.c.l.b16 %v1165
    %v1636 = vunpack.c.l.b16 %v1166
    %v1637 = vunpack.c.l.b16 %v1167
    %v1638 = vunpack.c.l.b16 %v1168
    %v1639 = vunpack.c.l.b16 %v1169
    %v1640 = vunpack.c.l.b16 %v1170
    %v1641 = vunpack.c.l.b16 %v1171
    %v1642 = vunpack.c.l.b16 %v1172
    %v1643 = vunpack.c.l.b16 %v1173
    %v1644 = vunpack.c.l.b16 %v1174
    %v1645 = vunpack.c.l.b16 %v1175
    %v1646 = vunpack.c.l.b16 %v1176
    %v1647 = vunpack.c.l.b16 %v1177
    %v1648 = vunpack.c.l.b16 %v1178
    %v1649 = vunpack.c.l.b16 %v1179
    %v1650 = vunpack.c.l.b16 %v1180
    %v1651 = vunpack.c.l.b16 %v1181
    %v1652 = vunpack.c.l.b16 %v1182
    %v1653 = vunpack.c.l.b16 %v1183
    %v1654 = vpack.c.b16 %v1591, %v1590
    %v1655 = vpack.c.b16 %v1593, %v1592
    %v1656 = vpack.c.b16 %v1595, %v1594
    %v1657 = vpack.c.b16 %v1597, %v1596
    %v1658 = vpack.c.b16 %v1599, %v1598
    %v1659 = vpack.c.b16 %v1601, %v1600
    %v1660 = vpack.c.b16 %v1603, %v1602
    %v1661 = vpack.c.b16 %v1605, %v1604
    %v1662 = vpack.c.b16 %v1607, %v1606
    %v1663 = vpack.c.b16 %v1609, %v1608
    %v1664 = vpack.c.b16 %v1611, %v1610
    %v1665 = vpack.c.b16 %v1613, %v1612
    %v1666 = vpack.c.b16 %v1615, %v1614
    %v1667 = vpack.c.b16 %v1617, %v1616
    %v1668 = vpack.c.b16 %v1619, %v1618
    %v1669 = vpack.c.b16 %v1621, %v1620
    %v1670 = vpack.c.b16 %v1623, %v1622
    %v1671 = vpack.c.b16 %v1625, %v1624
    %v1672 = vpack.c.b16 %v1627, %v1626
    %v1673 = vpack.c.b16 %v1629, %v1628
    %v1674 = vpack.c.b16 %v1631, %v1630
    %v1675 = vpack.c.b16 %v1633, %v1632
    %v1676 = vpack.c.b16 %v1635, %v1634
    %v1677 = vpack.c.b16 %v1637, %v1636
    %v1678 = vpack.c.b16 %v1639, %v1638
    %v1679 = vpack.c.b16 %v1641, %v1640
    %v1680 = vpack.c.b16 %v1643, %v1642
    %v1681 = vpack.c.b16 %v1645, %v1644
    %v1682 = vpack.c.b16 %v1647, %v1646
    %v1683 = vpack.c.b16 %v1649, %v1648
    %v1684 = vpack.c.b16 %v1651, %v1650
    %v1685 = vpack.c.b16 %v1653, %v1652
    %1718 = vmatprep.subr.bf16.mxu0 0
    %1719 = vmatpush1.bf16.msra.mxu0 %v1654
    %1720 = vmatprep.subr.bf16.mxu0 0
    %1721 = vmatpush1.bf16.msra.mxu0 %v1655
    %1722 = vmatprep.subr.bf16.mxu0 0
    %1723 = vmatpush1.bf16.msra.mxu0 %v1656
    %1724 = vmatprep.subr.bf16.mxu0 0
    %1725 = vmatpush1.bf16.msra.mxu0 %v1657
    %1726 = vmatprep.subr.bf16.mxu0 0
    %1727 = vmatpush1.bf16.msra.mxu0 %v1658
    %1728 = vmatprep.subr.bf16.mxu0 0
    %1729 = vmatpush1.bf16.msra.mxu0 %v1659
    %1730 = vmatprep.subr.bf16.mxu0 0
    %1731 = vmatpush1.bf16.msra.mxu0 %v1660
    %1732 = vmatprep.subr.bf16.mxu0 0
    %1733 = vmatpush1.bf16.msra.mxu0 %v1661
    %1734 = vmatprep.subr.bf16.mxu0 0
    %1735 = vmatpush1.bf16.msra.mxu0 %v1662
    %1736 = vmatprep.subr.bf16.mxu0 0
    %1737 = vmatpush1.bf16.msra.mxu0 %v1663
    %1738 = vmatprep.subr.bf16.mxu0 0
    %1739 = vmatpush1.bf16.msra.mxu0 %v1664
    %1740 = vmatprep.subr.bf16.mxu0 0
    %1741 = vmatpush1.bf16.msra.mxu0 %v1665
    %1742 = vmatprep.subr.bf16.mxu0 0
    %1743 = vmatpush1.bf16.msra.mxu0 %v1666
    %1744 = vmatprep.subr.bf16.mxu0 0
    %1745 = vmatpush1.bf16.msra.mxu0 %v1667
    %1746 = vmatprep.subr.bf16.mxu0 0
    %1747 = vmatpush1.bf16.msra.mxu0 %v1668
    %1748 = vmatprep.subr.bf16.mxu0 0
    %1749 = vmatpush1.bf16.msra.mxu0 %v1669
    %1750 = vmatprep.mubr.bf16.mxu0 %v1031
    %1751 = vmatmul.mubr.bf16.gmra.mrb[0].mxu0 %v1030
    %v1752 = vpop.f32.mrb[0].mxu0
    %v1753 = vadd.f32 %v1520, %v1752
    %v1754 = vpop.f32.mrb[0].mxu0
    %v1755 = vpop.f32.mrb[0].mxu0
    %v1756 = vadd.f32 %v1523, %v1755
    %v1757 = vpop.f32.mrb[0].mxu0
    %1758 = vdwg.mxu0
    %1759 = vmatprep.subr.bf16.mxu0 0
    %1760 = vmatpush1.bf16.msra.mxu0 %v1670
    %1761 = vmatprep.subr.bf16.mxu0 0
    %1762 = vmatpush1.bf16.msra.mxu0 %v1671
    %1763 = vmatprep.subr.bf16.mxu0 0
    %1764 = vmatpush1.bf16.msra.mxu0 %v1672
    %1765 = vmatprep.subr.bf16.mxu0 0
    %1766 = vmatpush1.bf16.msra.mxu0 %v1673
    %1767 = vmatprep.subr.bf16.mxu0 0
    %1768 = vmatpush1.bf16.msra.mxu0 %v1674
    %1769 = vmatprep.subr.bf16.mxu0 0
    %1770 = vmatpush1.bf16.msra.mxu0 %v1675
    %1771 = vmatprep.subr.bf16.mxu0 0
    %1772 = vmatpush1.bf16.msra.mxu0 %v1676
    %1773 = vmatprep.subr.bf16.mxu0 0
    %1774 = vmatpush1.bf16.msra.mxu0 %v1677
    %1775 = vmatprep.subr.bf16.mxu0 0
    %1776 = vmatpush1.bf16.msra.mxu0 %v1678
    %1777 = vmatprep.subr.bf16.mxu0 0
    %1778 = vmatpush1.bf16.msra.mxu0 %v1679
    %1779 = vmatprep.subr.bf16.mxu0 0
    %1780 = vmatpush1.bf16.msra.mxu0 %v1680
    %1781 = vmatprep.subr.bf16.mxu0 0
    %1782 = vmatpush1.bf16.msra.mxu0 %v1681
    %1783 = vmatprep.subr.bf16.mxu0 0
    %1784 = vmatpush1.bf16.msra.mxu0 %v1682
    %1785 = vmatprep.subr.bf16.mxu0 0
    %1786 = vmatpush1.bf16.msra.mxu0 %v1683
    %1787 = vmatprep.subr.bf16.mxu0 0
    %1788 = vmatpush1.bf16.msra.mxu0 %v1684
    %1789 = vmatprep.subr.bf16.mxu0 0
    %1790 = vmatpush1.bf16.msra.mxu0 %v1685
    %1791 = vmatprep.mubr.bf16.mxu0 %v1033
    %1792 = vmatmul.mubr.bf16.gmra.mrb[0].mxu0 %v1032
    %v1793 = vpop.f32.mrb[0].mxu0
    %v1794 = vadd.f32 %v1753, %v1793
    %v1795 = vpop.f32.mrb[0].mxu0
    %v1796 = vpop.f32.mrb[0].mxu0
    %v1797 = vadd.f32 %v1756, %v1796
    %v1798 = vpop.f32.mrb[0].mxu0
    %1799 = vdwg.mxu0
    %v1800 = vld [vmem:[#allocation13] sm:$0x1]
    %v1802 = vlaneseq
    %v1803 = vshrl.u32 %v1802, 7
    %v1804 = vsub.s32 0, %v1803
    %v1805 = vrot.slane %v1800, %v1804
    %v1807 = vadd.f32 %v1794, %v1805
    %v1808 = vadd.f32 %v1797, %v1805
    %v1809 = vmax.f32 %v1807, 0.0
    %v1810 = vmax.f32 %v1808, 0.0
    %v1811 = vld [vmem:[%s10] sm:$0x1]
    %v1813 = vlaneseq
    %v1814 = vshrl.u32 %v1813, 7
    %v1815 = vsub.s32 0, %v1814
    %v1816 = vrot.slane %v1811, %v1815
    %v1818 = vmul.f32 %v1809, %v1816
    %v1819 = vmul.f32 %v1810, %v1816
    %1820 = vadd.xlane.f32.xlu0 %v1818
    %v1821 = vpop.xlane.xlu0 %1820
    %1822 = vadd.xlane.f32.xlu0 %v1819
    %v1823 = vpop.xlane.xlu0 %1822
    %v1824 = vtanh.pop %v1821
    %v1825 = vtanh.pop %v1823
    %vm1826 = vcmp.gt.f32.partialorder 1.0, 0.5
    %vm1827 = vmand %vm297, %vm1826
    %vm1828 = vmand %vm298, %vm1826
    %v1829 = vsel %vm1827, %v1824, -1e+30
    %v1830 = vsel %vm1828, %v1825, -1e+30
    %v1831 = vmax.f32 %v1829, %v1830
    %v1832 = vrot.slane %v1831, 4
    %v1833 = vmax.f32 %v1831, %v1832
    %v1834 = vrot.slane %v1833, 2
    %v1835 = vmax.f32 %v1833, %v1834
    %v1836 = vrot.slane %v1835, 1
    %v1837 = vmax.f32 %v1835, %v1836
    %vm1838 = vcmp.ge.f32.partialorder %v1829, %v1837
    %vm1839 = vcmp.ge.f32.partialorder %v1830, %v1837
    %v1840 = vsel %vm1838, %v291, 16.0
    %v1841 = vsel %vm1839, %v292, 16.0
    %v1842 = vmin.f32 %v1840, %v1841
    %v1843 = vrot.slane %v1842, 4
    %v1844 = vmin.f32 %v1842, %v1843
    %v1845 = vrot.slane %v1844, 2
    %v1846 = vmin.f32 %v1844, %v1845
    %v1847 = vrot.slane %v1846, 1
    %v1848 = vmin.f32 %v1846, %v1847
    %vm1849 = vcmp.eq.f32.partialorder %v291, %v1848
    %vm1850 = vcmp.eq.f32.partialorder %v292, %v1848
    %v1851 = vsel %vm1849, 1, 0
    %v1852 = vsel %vm1850, 1, 0
    %v1853 = vcvt.s32.f32 %v1851
    %v1854 = vcvt.s32.f32 %v1852
    %v1855 = vadd.f32 %v1853, 0.0
    %v1856 = vadd.f32 %v1854, 0.0
    %v1857 = vsel %vm1849, -1e+30, %v1829
    %v1858 = vsel %vm1850, -1e+30, %v1830
    %v1859 = vmax.f32 %v1857, %v1858
    %v1860 = vrot.slane %v1859, 4
    %v1861 = vmax.f32 %v1859, %v1860
    %v1862 = vrot.slane %v1861, 2
    %v1863 = vmax.f32 %v1861, %v1862
    %v1864 = vrot.slane %v1863, 1
    %v1865 = vmax.f32 %v1863, %v1864
    %vm1866 = vcmp.ge.f32.partialorder %v1857, %v1865
    %vm1867 = vcmp.ge.f32.partialorder %v1858, %v1865
    %v1868 = vsel %vm1866, %v291, 16.0
    %v1869 = vsel %vm1867, %v292, 16.0
    %v1870 = vmin.f32 %v1868, %v1869
    %v1871 = vrot.slane %v1870, 4
    %v1872 = vmin.f32 %v1870, %v1871
    %v1873 = vrot.slane %v1872, 2
    %v1874 = vmin.f32 %v1872, %v1873
    %v1875 = vrot.slane %v1874, 1
    %v1876 = vmin.f32 %v1874, %v1875
    %vm1877 = vcmp.eq.f32.partialorder %v291, %v1876
    %vm1878 = vcmp.eq.f32.partialorder %v292, %v1876
    %v1879 = vsel %vm1877, 1, 0
    %v1880 = vsel %vm1878, 1, 0
    %v1881 = vcvt.s32.f32 %v1879
    %v1882 = vcvt.s32.f32 %v1880
    %v1883 = vadd.f32 %v1855, %v1881
    %v1884 = vadd.f32 %v1856, %v1882
    %v1885 = vsel %vm1877, -1e+30, %v1857
    %v1886 = vsel %vm1878, -1e+30, %v1858
    %v1887 = vmax.f32 %v1885, %v1886
    %v1888 = vrot.slane %v1887, 4
    %v1889 = vmax.f32 %v1887, %v1888
    %v1890 = vrot.slane %v1889, 2
    %v1891 = vmax.f32 %v1889, %v1890
    %v1892 = vrot.slane %v1891, 1
    %v1893 = vmax.f32 %v1891, %v1892
    %vm1894 = vcmp.ge.f32.partialorder %v1885, %v1893
    %vm1895 = vcmp.ge.f32.partialorder %v1886, %v1893
    %v1896 = vsel %vm1894, %v291, 16.0
    %v1897 = vsel %vm1895, %v292, 16.0
    %v1898 = vmin.f32 %v1896, %v1897
    %v1899 = vrot.slane %v1898, 4
    %v1900 = vmin.f32 %v1898, %v1899
    %v1901 = vrot.slane %v1900, 2
    %v1902 = vmin.f32 %v1900, %v1901
    %v1903 = vrot.slane %v1902, 1
    %v1904 = vmin.f32 %v1902, %v1903
    %vm1905 = vcmp.eq.f32.partialorder %v291, %v1904
    %vm1906 = vcmp.eq.f32.partialorder %v292, %v1904
    %v1907 = vsel %vm1905, 1, 0
    %v1908 = vsel %vm1906, 1, 0
    %v1909 = vcvt.s32.f32 %v1907
    %v1910 = vcvt.s32.f32 %v1908
    %v1911 = vadd.f32 %v1883, %v1909
    %v1912 = vadd.f32 %v1884, %v1910
    %v1913 = vsel %vm1905, -1e+30, %v1885
    %v1914 = vsel %vm1906, -1e+30, %v1886
    %v1915 = vmax.f32 %v1913, %v1914
    %v1916 = vrot.slane %v1915, 4
    %v1917 = vmax.f32 %v1915, %v1916
    %v1918 = vrot.slane %v1917, 2
    %v1919 = vmax.f32 %v1917, %v1918
    %v1920 = vrot.slane %v1919, 1
    %v1921 = vmax.f32 %v1919, %v1920
    %vm1922 = vcmp.ge.f32.partialorder %v1913, %v1921
    %vm1923 = vcmp.ge.f32.partialorder %v1914, %v1921
    %v1924 = vsel %vm1922, %v291, 16.0
    %v1925 = vsel %vm1923, %v292, 16.0
    %v1926 = vmin.f32 %v1924, %v1925
    %v1927 = vrot.slane %v1926, 4
    %v1928 = vmin.f32 %v1926, %v1927
    %v1929 = vrot.slane %v1928, 2
    %v1930 = vmin.f32 %v1928, %v1929
    %v1931 = vrot.slane %v1930, 1
    %v1932 = vmin.f32 %v1930, %v1931
    %vm1933 = vcmp.eq.f32.partialorder %v291, %v1932
    %vm1934 = vcmp.eq.f32.partialorder %v292, %v1932
    %v1935 = vsel %vm1933, 1, 0
    %v1936 = vsel %vm1934, 1, 0
    %v1937 = vcvt.s32.f32 %v1935
    %v1938 = vcvt.s32.f32 %v1936
    %v1939 = vadd.f32 %v1911, %v1937
    %v1940 = vadd.f32 %v1912, %v1938
    %v1941 = vsel %vm1933, -1e+30, %v1913
    %v1942 = vsel %vm1934, -1e+30, %v1914
    %v1943 = vmax.f32 %v1941, %v1942
    %v1944 = vrot.slane %v1943, 4
    %v1945 = vmax.f32 %v1943, %v1944
    %v1946 = vrot.slane %v1945, 2
    %v1947 = vmax.f32 %v1945, %v1946
    %v1948 = vrot.slane %v1947, 1
    %v1949 = vmax.f32 %v1947, %v1948
    %vm1950 = vcmp.ge.f32.partialorder %v1941, %v1949
    %vm1951 = vcmp.ge.f32.partialorder %v1942, %v1949
    %v1952 = vsel %vm1950, %v291, 16.0
    %v1953 = vsel %vm1951, %v292, 16.0
    %v1954 = vmin.f32 %v1952, %v1953
    %v1955 = vrot.slane %v1954, 4
    %v1956 = vmin.f32 %v1954, %v1955
    %v1957 = vrot.slane %v1956, 2
    %v1958 = vmin.f32 %v1956, %v1957
    %v1959 = vrot.slane %v1958, 1
    %v1960 = vmin.f32 %v1958, %v1959
    %vm1961 = vcmp.eq.f32.partialorder %v291, %v1960
    %vm1962 = vcmp.eq.f32.partialorder %v292, %v1960
    %v1963 = vsel %vm1961, 1, 0
    %v1964 = vsel %vm1962, 1, 0
    %v1965 = vcvt.s32.f32 %v1963
    %v1966 = vcvt.s32.f32 %v1964
    %v1967 = vadd.f32 %v1939, %v1965
    %v1968 = vadd.f32 %v1940, %v1966
    %v1969 = vsel %vm1961, -1e+30, %v1941
    %v1970 = vsel %vm1962, -1e+30, %v1942
    %v1971 = vmax.f32 %v1969, %v1970
    %v1972 = vrot.slane %v1971, 4
    %v1973 = vmax.f32 %v1971, %v1972
    %v1974 = vrot.slane %v1973, 2
    %v1975 = vmax.f32 %v1973, %v1974
    %v1976 = vrot.slane %v1975, 1
    %v1977 = vmax.f32 %v1975, %v1976
    %vm1978 = vcmp.ge.f32.partialorder %v1969, %v1977
    %vm1979 = vcmp.ge.f32.partialorder %v1970, %v1977
    %v1980 = vsel %vm1978, %v291, 16.0
    %v1981 = vsel %vm1979, %v292, 16.0
    %v1982 = vmin.f32 %v1980, %v1981
    %v1983 = vrot.slane %v1982, 4
    %v1984 = vmin.f32 %v1982, %v1983
    %v1985 = vrot.slane %v1984, 2
    %v1986 = vmin.f32 %v1984, %v1985
    %v1987 = vrot.slane %v1986, 1
    %v1988 = vmin.f32 %v1986, %v1987
    %vm1989 = vcmp.eq.f32.partialorder %v291, %v1988
    %vm1990 = vcmp.eq.f32.partialorder %v292, %v1988
    %v1991 = vsel %vm1989, 1, 0
    %v1992 = vsel %vm1990, 1, 0
    %v1993 = vcvt.s32.f32 %v1991
    %v1994 = vcvt.s32.f32 %v1992
    %v1995 = vadd.f32 %v1967, %v1993
    %v1996 = vadd.f32 %v1968, %v1994
    %v1997 = vsel %vm1989, -1e+30, %v1969
    %v1998 = vsel %vm1990, -1e+30, %v1970
    %v1999 = vmax.f32 %v1997, %v1998
    %v2000 = vrot.slane %v1999, 4
    %v2001 = vmax.f32 %v1999, %v2000
    %v2002 = vrot.slane %v2001, 2
    %v2003 = vmax.f32 %v2001, %v2002
    %v2004 = vrot.slane %v2003, 1
    %v2005 = vmax.f32 %v2003, %v2004
    %vm2006 = vcmp.ge.f32.partialorder %v1997, %v2005
    %vm2007 = vcmp.ge.f32.partialorder %v1998, %v2005
    %v2008 = vsel %vm2006, %v291, 16.0
    %v2009 = vsel %vm2007, %v292, 16.0
    %v2010 = vmin.f32 %v2008, %v2009
    %v2011 = vrot.slane %v2010, 4
    %v2012 = vmin.f32 %v2010, %v2011
    %v2013 = vrot.slane %v2012, 2
    %v2014 = vmin.f32 %v2012, %v2013
    %v2015 = vrot.slane %v2014, 1
    %v2016 = vmin.f32 %v2014, %v2015
    %vm2017 = vcmp.eq.f32.partialorder %v291, %v2016
    %vm2018 = vcmp.eq.f32.partialorder %v292, %v2016
    %v2019 = vsel %vm2017, 1, 0
    %v2020 = vsel %vm2018, 1, 0
    %v2021 = vcvt.s32.f32 %v2019
    %v2022 = vcvt.s32.f32 %v2020
    %v2023 = vadd.f32 %v1995, %v2021
    %v2024 = vadd.f32 %v1996, %v2022
    %vm2025 = vmand %vm303, %vm1826
    %vm2026 = vmand %vm304, %vm1826
    %v2027 = vsel %vm2025, %v1824, -1e+30
    %v2028 = vsel %vm2026, %v1825, -1e+30
    %v2029 = vmax.f32 %v2027, %v2028
    %v2030 = vrot.slane %v2029, 4
    %v2031 = vmax.f32 %v2029, %v2030
    %v2032 = vrot.slane %v2031, 2
    %v2033 = vmax.f32 %v2031, %v2032
    %v2034 = vrot.slane %v2033, 1
    %v2035 = vmax.f32 %v2033, %v2034
    %vm2036 = vcmp.ge.f32.partialorder %v2027, %v2035
    %vm2037 = vcmp.ge.f32.partialorder %v2028, %v2035
    %v2038 = vsel %vm2036, %v291, 16.0
    %v2039 = vsel %vm2037, %v292, 16.0
    %v2040 = vmin.f32 %v2038, %v2039
    %v2041 = vrot.slane %v2040, 4
    %v2042 = vmin.f32 %v2040, %v2041
    %v2043 = vrot.slane %v2042, 2
    %v2044 = vmin.f32 %v2042, %v2043
    %v2045 = vrot.slane %v2044, 1
    %v2046 = vmin.f32 %v2044, %v2045
    %vm2047 = vcmp.eq.f32.partialorder %v291, %v2046
    %vm2048 = vcmp.eq.f32.partialorder %v292, %v2046
    %v2049 = vsel %vm2047, 1, 0
    %v2050 = vsel %vm2048, 1, 0
    %v2051 = vcvt.s32.f32 %v2049
    %v2052 = vcvt.s32.f32 %v2050
    %v2053 = vadd.f32 %v2023, %v2051
    %v2054 = vadd.f32 %v2024, %v2052
    %v2055 = vsel %vm2047, -1e+30, %v2027
    %v2056 = vsel %vm2048, -1e+30, %v2028
    %v2057 = vmax.f32 %v2055, %v2056
    %v2058 = vrot.slane %v2057, 4
    %v2059 = vmax.f32 %v2057, %v2058
    %v2060 = vrot.slane %v2059, 2
    %v2061 = vmax.f32 %v2059, %v2060
    %v2062 = vrot.slane %v2061, 1
    %v2063 = vmax.f32 %v2061, %v2062
    %vm2064 = vcmp.ge.f32.partialorder %v2055, %v2063
    %vm2065 = vcmp.ge.f32.partialorder %v2056, %v2063
    %v2066 = vsel %vm2064, %v291, 16.0
    %v2067 = vsel %vm2065, %v292, 16.0
    %v2068 = vmin.f32 %v2066, %v2067
    %v2069 = vrot.slane %v2068, 4
    %v2070 = vmin.f32 %v2068, %v2069
    %v2071 = vrot.slane %v2070, 2
    %v2072 = vmin.f32 %v2070, %v2071
    %v2073 = vrot.slane %v2072, 1
    %v2074 = vmin.f32 %v2072, %v2073
    %vm2075 = vcmp.eq.f32.partialorder %v291, %v2074
    %vm2076 = vcmp.eq.f32.partialorder %v292, %v2074
    %v2077 = vsel %vm2075, 1, 0
    %v2078 = vsel %vm2076, 1, 0
    %v2079 = vcvt.s32.f32 %v2077
    %v2080 = vcvt.s32.f32 %v2078
    %v2081 = vadd.f32 %v2053, %v2079
    %v2082 = vadd.f32 %v2054, %v2080
    %v2083 = vsel %vm2075, -1e+30, %v2055
    %v2084 = vsel %vm2076, -1e+30, %v2056
    %v2085 = vmax.f32 %v2083, %v2084
    %v2086 = vrot.slane %v2085, 4
    %v2087 = vmax.f32 %v2085, %v2086
    %v2088 = vrot.slane %v2087, 2
    %v2089 = vmax.f32 %v2087, %v2088
    %v2090 = vrot.slane %v2089, 1
    %v2091 = vmax.f32 %v2089, %v2090
    %vm2092 = vcmp.ge.f32.partialorder %v2083, %v2091
    %vm2093 = vcmp.ge.f32.partialorder %v2084, %v2091
    %v2094 = vsel %vm2092, %v291, 16.0
    %v2095 = vsel %vm2093, %v292, 16.0
    %v2096 = vmin.f32 %v2094, %v2095
    %v2097 = vrot.slane %v2096, 4
    %v2098 = vmin.f32 %v2096, %v2097
    %v2099 = vrot.slane %v2098, 2
    %v2100 = vmin.f32 %v2098, %v2099
    %v2101 = vrot.slane %v2100, 1
    %v2102 = vmin.f32 %v2100, %v2101
    %vm2103 = vcmp.eq.f32.partialorder %v291, %v2102
    %vm2104 = vcmp.eq.f32.partialorder %v292, %v2102
    %v2105 = vsel %vm2103, 1, 0
    %v2106 = vsel %vm2104, 1, 0
    %v2107 = vcvt.s32.f32 %v2105
    %v2108 = vcvt.s32.f32 %v2106
    %v2109 = vadd.f32 %v2081, %v2107
    %v2110 = vadd.f32 %v2082, %v2108
    %v2111 = vsel %vm2103, -1e+30, %v2083
    %v2112 = vsel %vm2104, -1e+30, %v2084
    %v2113 = vmax.f32 %v2111, %v2112
    %v2114 = vrot.slane %v2113, 4
    %v2115 = vmax.f32 %v2113, %v2114
    %v2116 = vrot.slane %v2115, 2
    %v2117 = vmax.f32 %v2115, %v2116
    %v2118 = vrot.slane %v2117, 1
    %v2119 = vmax.f32 %v2117, %v2118
    %vm2120 = vcmp.ge.f32.partialorder %v2111, %v2119
    %vm2121 = vcmp.ge.f32.partialorder %v2112, %v2119
    %v2122 = vsel %vm2120, %v291, 16.0
    %v2123 = vsel %vm2121, %v292, 16.0
    %v2124 = vmin.f32 %v2122, %v2123
    %v2125 = vrot.slane %v2124, 4
    %v2126 = vmin.f32 %v2124, %v2125
    %v2127 = vrot.slane %v2126, 2
    %v2128 = vmin.f32 %v2126, %v2127
    %v2129 = vrot.slane %v2128, 1
    %v2130 = vmin.f32 %v2128, %v2129
    %vm2131 = vcmp.eq.f32.partialorder %v291, %v2130
    %vm2132 = vcmp.eq.f32.partialorder %v292, %v2130
    %v2133 = vsel %vm2131, 1, 0
    %v2134 = vsel %vm2132, 1, 0
    %v2135 = vcvt.s32.f32 %v2133
    %v2136 = vcvt.s32.f32 %v2134
    %v2137 = vadd.f32 %v2109, %v2135
    %v2138 = vadd.f32 %v2110, %v2136
    %v2139 = vsel %vm2131, -1e+30, %v2111
    %v2140 = vsel %vm2132, -1e+30, %v2112
    %v2141 = vmax.f32 %v2139, %v2140
    %v2142 = vrot.slane %v2141, 4
    %v2143 = vmax.f32 %v2141, %v2142
    %v2144 = vrot.slane %v2143, 2
    %v2145 = vmax.f32 %v2143, %v2144
    %v2146 = vrot.slane %v2145, 1
    %v2147 = vmax.f32 %v2145, %v2146
    %vm2148 = vcmp.ge.f32.partialorder %v2139, %v2147
    %vm2149 = vcmp.ge.f32.partialorder %v2140, %v2147
    %v2150 = vsel %vm2148, %v291, 16.0
    %v2151 = vsel %vm2149, %v292, 16.0
    %v2152 = vmin.f32 %v2150, %v2151
    %v2153 = vrot.slane %v2152, 4
    %v2154 = vmin.f32 %v2152, %v2153
    %v2155 = vrot.slane %v2154, 2
    %v2156 = vmin.f32 %v2154, %v2155
    %v2157 = vrot.slane %v2156, 1
    %v2158 = vmin.f32 %v2156, %v2157
    %vm2159 = vcmp.eq.f32.partialorder %v291, %v2158
    %vm2160 = vcmp.eq.f32.partialorder %v292, %v2158
    %v2161 = vsel %vm2159, 1, 0
    %v2162 = vsel %vm2160, 1, 0
    %v2163 = vcvt.s32.f32 %v2161
    %v2164 = vcvt.s32.f32 %v2162
    %v2165 = vadd.f32 %v2137, %v2163
    %v2166 = vadd.f32 %v2138, %v2164
    %v2167 = vsel %vm2159, -1e+30, %v2139
    %v2168 = vsel %vm2160, -1e+30, %v2140
    %v2169 = vmax.f32 %v2167, %v2168
    %v2170 = vrot.slane %v2169, 4
    %v2171 = vmax.f32 %v2169, %v2170
    %v2172 = vrot.slane %v2171, 2
    %v2173 = vmax.f32 %v2171, %v2172
    %v2174 = vrot.slane %v2173, 1
    %v2175 = vmax.f32 %v2173, %v2174
    %vm2176 = vcmp.ge.f32.partialorder %v2167, %v2175
    %vm2177 = vcmp.ge.f32.partialorder %v2168, %v2175
    %v2178 = vsel %vm2176, %v291, 16.0
    %v2179 = vsel %vm2177, %v292, 16.0
    %v2180 = vmin.f32 %v2178, %v2179
    %v2181 = vrot.slane %v2180, 4
    %v2182 = vmin.f32 %v2180, %v2181
    %v2183 = vrot.slane %v2182, 2
    %v2184 = vmin.f32 %v2182, %v2183
    %v2185 = vrot.slane %v2184, 1
    %v2186 = vmin.f32 %v2184, %v2185
    %vm2187 = vcmp.eq.f32.partialorder %v291, %v2186
    %vm2188 = vcmp.eq.f32.partialorder %v292, %v2186
    %v2189 = vsel %vm2187, 1, 0
    %v2190 = vsel %vm2188, 1, 0
    %v2191 = vcvt.s32.f32 %v2189
    %v2192 = vcvt.s32.f32 %v2190
    %v2193 = vadd.f32 %v2165, %v2191
    %v2194 = vadd.f32 %v2166, %v2192
    %v2195 = vsel %vm2187, -1e+30, %v2167
    %v2196 = vsel %vm2188, -1e+30, %v2168
    %v2197 = vmax.f32 %v2195, %v2196
    %v2198 = vrot.slane %v2197, 4
    %v2199 = vmax.f32 %v2197, %v2198
    %v2200 = vrot.slane %v2199, 2
    %v2201 = vmax.f32 %v2199, %v2200
    %v2202 = vrot.slane %v2201, 1
    %v2203 = vmax.f32 %v2201, %v2202
    %vm2204 = vcmp.ge.f32.partialorder %v2195, %v2203
    %vm2205 = vcmp.ge.f32.partialorder %v2196, %v2203
    %v2206 = vsel %vm2204, %v291, 16.0
    %v2207 = vsel %vm2205, %v292, 16.0
    %v2208 = vmin.f32 %v2206, %v2207
    %v2209 = vrot.slane %v2208, 4
    %v2210 = vmin.f32 %v2208, %v2209
    %v2211 = vrot.slane %v2210, 2
    %v2212 = vmin.f32 %v2210, %v2211
    %v2213 = vrot.slane %v2212, 1
    %v2214 = vmin.f32 %v2212, %v2213
    %vm2215 = vcmp.eq.f32.partialorder %v291, %v2214
    %vm2216 = vcmp.eq.f32.partialorder %v292, %v2214
    %v2217 = vsel %vm2215, 1, 0
    %v2218 = vsel %vm2216, 1, 0
    %v2219 = vcvt.s32.f32 %v2217
    %v2220 = vcvt.s32.f32 %v2218
    %v2221 = vadd.f32 %v2193, %v2219
    %v2222 = vadd.f32 %v2194, %v2220
    %v2223 = vmul.f32 %v1809, %v1824
    %v2224 = vmul.f32 %v1810, %v1825
    %v2225 = vmul.f32 %v2223, %v2221
    %v2226 = vmul.f32 %v2224, %v2222
    %vm2227 = vcmp.gt.f32.partialorder %v2221, 0.5
    %v2228 = vsel %vm2227, 1, 0
    %vm2229 = vcmp.eq.s32.totalorder %v2228, 1
    %v2230 = vsel %vm2229, %v2225, -1e+30
    %v2231 = vrot.slane %v2230, 4
    %v2232 = vmax.f32 %v2230, %v2231
    %v2233 = vrot.slane %v2232, 2
    %v2234 = vmax.f32 %v2232, %v2233
    %v2235 = vrot.slane %v2234, 1
    %v2236 = vmax.f32 %v2234, %v2235
    %v2237 = vrot.slane %v2225, 4
    %v2238 = vadd.f32 %v2225, %v2237
    %v2239 = vrot.slane %v2238, 2
    %v2240 = vadd.f32 %v2238, %v2239
    %v2241 = vrot.slane %v2240, 1
    %v2242 = vadd.f32 %v2240, %v2241
    %v2243 = vmul.f32 %v2242, 0.14285715
    %vm2244 = vcmp.gt.f32.partialorder %v2222, 0.5
    %v2245 = vsel %vm2244, 1, 0
    %vm2246 = vcmp.eq.s32.totalorder %v2245, 1
    %v2247 = vsel %vm2246, %v2226, -1e+30
    %v2248 = vrot.slane %v2247, 4
    %v2249 = vmax.f32 %v2247, %v2248
    %v2250 = vrot.slane %v2249, 2
    %v2251 = vmax.f32 %v2249, %v2250
    %v2252 = vrot.slane %v2251, 1
    %v2253 = vmax.f32 %v2251, %v2252
    %v2254 = vrot.slane %v2226, 4
    %v2255 = vadd.f32 %v2226, %v2254
    %v2256 = vrot.slane %v2255, 2
    %v2257 = vadd.f32 %v2255, %v2256
    %v2258 = vrot.slane %v2257, 1
    %v2259 = vadd.f32 %v2257, %v2258
    %v2260 = vmul.f32 %v2259, 0.14285715
    %vm2261 = vcmask 1040384
    %v2262 = vsel %vm2261, %v2236, %v2253
    %v2263 = vsel %vm2261, %v2243, %v2260
    %v2264 = vpack.c.bf16 %v2226, %v2225
    %2265 = vmatprep.subr.bf16.mxu0 0
    %2266 = vmatpush1.bf16.msra.mxu0 %v2264
    %2267 = vmatprep.subr.bf16.mxu0 0
    %2268 = vmatpush1.bf16.msra.mxu0 0
    %2269 = vmatprep.subr.bf16.mxu0 0
    %2270 = vmatpush1.bf16.msra.mxu0 0
    %2271 = vmatprep.subr.bf16.mxu0 0
    %2272 = vmatpush1.bf16.msra.mxu0 0
    %2273 = vmatprep.subr.bf16.mxu0 0
    %2274 = vmatpush1.bf16.msra.mxu0 0
    %2275 = vmatprep.subr.bf16.mxu0 0
    %2276 = vmatpush1.bf16.msra.mxu0 0
    %2277 = vmatprep.subr.bf16.mxu0 0
    %2278 = vmatpush1.bf16.msra.mxu0 0
    %2279 = vmatprep.subr.bf16.mxu0 0
    %2280 = vmatpush1.bf16.msra.mxu0 0
    %2281 = vmatprep.subr.bf16.mxu0 0
    %2282 = vmatpush1.bf16.msra.mxu0 0
    %2283 = vmatprep.subr.bf16.mxu0 0
    %2284 = vmatpush1.bf16.msra.mxu0 0
    %2285 = vmatprep.subr.bf16.mxu0 0
    %2286 = vmatpush1.bf16.msra.mxu0 0
    %2287 = vmatprep.subr.bf16.mxu0 0
    %2288 = vmatpush1.bf16.msra.mxu0 0
    %2289 = vmatprep.subr.bf16.mxu0 0
    %2290 = vmatpush1.bf16.msra.mxu0 0
    %2291 = vmatprep.subr.bf16.mxu0 0
    %2292 = vmatpush1.bf16.msra.mxu0 0
    %2293 = vmatprep.subr.bf16.mxu0 0
    %2294 = vmatpush1.bf16.msra.mxu0 0
    %2295 = vmatprep.subr.bf16.mxu0 0
    %2296 = vmatpush1.bf16.msra.mxu0 0
    %2297 = vmatprep.mubr.bf16.mxu0 0
    %2298 = vmatmul.mubr.bf16.gmra.mrb[0].mxu0 %v318
    %v2299 = vpop.f32.mrb[0].mxu0
    %v2300 = vadd.f32 0.0, %v2299
    %v2301 = vpop.f32.mrb[0].mxu0
    %v2302 = vpop.f32.mrb[0].mxu0
    %v2303 = vadd.f32 0.0, %v2302
    %v2304 = vpop.f32.mrb[0].mxu0
    %2305 = vdwg.mxu0
    %v2306 = vld [vmem:[#allocation14] sm:$0xf]
    %v2307 = vld [vmem:[#allocation14 + $0x4] sm:$0xf]
    %v2308 = vld [vmem:[#allocation14 + $0x8] sm:$0xf]
    %v2309 = vld [vmem:[#allocation14 + $0xc] sm:$0xf]
    %v2310 = vld [vmem:[#allocation14 + $0x10] sm:$0xf]
    %v2311 = vld [vmem:[#allocation14 + $0x14] sm:$0xf]
    %v2312 = vld [vmem:[#allocation14 + $0x18] sm:$0xf]
    %v2313 = vld [vmem:[#allocation14 + $0x1c] sm:$0xf]
    %v2314 = vld [vmem:[#allocation14 + $0x20] sm:$0xf]
    %v2315 = vld [vmem:[#allocation14 + $0x24] sm:$0xf]
    %v2316 = vld [vmem:[#allocation14 + $0x28] sm:$0xf]
    %v2317 = vld [vmem:[#allocation14 + $0x2c] sm:$0xf]
    %v2318 = vld [vmem:[#allocation14 + $0x30] sm:$0xf]
    %v2319 = vld [vmem:[#allocation14 + $0x34] sm:$0xf]
    %v2320 = vld [vmem:[#allocation14 + $0x38] sm:$0xf]
    %v2321 = vld [vmem:[#allocation14 + $0x3c] sm:$0xf]
    %v2322 = vpack.c.bf16 %v2303, %v2300
    %v2323 = vld [vmem:[#allocation16] sm:$0xf]
    %v2324 = vld [vmem:[#allocation16 + $0x4] sm:$0xf]
    %v2325 = vld [vmem:[#allocation16 + $0x8] sm:$0xf]
    %v2326 = vld [vmem:[#allocation16 + $0xc] sm:$0xf]
    %v2327 = vld [vmem:[#allocation16 + $0x10] sm:$0xf]
    %v2328 = vld [vmem:[#allocation16 + $0x14] sm:$0xf]
    %v2329 = vld [vmem:[#allocation16 + $0x18] sm:$0xf]
    %v2330 = vld [vmem:[#allocation16 + $0x1c] sm:$0xf]
    %v2331 = vld [vmem:[#allocation16 + $0x20] sm:$0xf]
    %v2332 = vld [vmem:[#allocation16 + $0x24] sm:$0xf]
    %v2333 = vld [vmem:[#allocation16 + $0x28] sm:$0xf]
    %v2334 = vld [vmem:[#allocation16 + $0x2c] sm:$0xf]
    %v2335 = vld [vmem:[#allocation16 + $0x30] sm:$0xf]
    %v2336 = vld [vmem:[#allocation16 + $0x34] sm:$0xf]
    %v2337 = vld [vmem:[#allocation16 + $0x38] sm:$0xf]
    %v2338 = vld [vmem:[#allocation16 + $0x3c] sm:$0xf]
    %v2355 = vunpack.c.l.b16 %v2323
    %v2356 = vunpack.c.l.b16 %v2324
    %v2357 = vunpack.c.l.b16 %v2325
    %v2358 = vunpack.c.l.b16 %v2326
    %v2359 = vunpack.c.l.b16 %v2327
    %v2360 = vunpack.c.l.b16 %v2328
    %v2361 = vunpack.c.l.b16 %v2329
    %v2362 = vunpack.c.l.b16 %v2330
    %v2363 = vunpack.c.l.b16 %v2331
    %v2364 = vunpack.c.l.b16 %v2332
    %v2365 = vunpack.c.l.b16 %v2333
    %v2366 = vunpack.c.l.b16 %v2334
    %v2367 = vunpack.c.l.b16 %v2335
    %v2368 = vunpack.c.l.b16 %v2336
    %v2369 = vunpack.c.l.b16 %v2337
    %v2370 = vunpack.c.l.b16 %v2338
    %v2371 = vpack.c.b16 %v2356, %v2355
    %v2372 = vpack.c.b16 %v2358, %v2357
    %v2373 = vpack.c.b16 %v2360, %v2359
    %v2374 = vpack.c.b16 %v2362, %v2361
    %v2375 = vpack.c.b16 %v2364, %v2363
    %v2376 = vpack.c.b16 %v2366, %v2365
    %v2377 = vpack.c.b16 %v2368, %v2367
    %v2378 = vpack.c.b16 %v2370, %v2369
    %2387 = vmatprep.subr.bf16.mxu0 0
    %2388 = vmatpush1.bf16.msra.mxu0 %v2371
    %2389 = vmatprep.subr.bf16.mxu0 0
    %2390 = vmatpush1.bf16.msra.mxu0 %v2372
    %2391 = vmatprep.subr.bf16.mxu0 0
    %2392 = vmatpush1.bf16.msra.mxu0 %v2373
    %2393 = vmatprep.subr.bf16.mxu0 0
    %2394 = vmatpush1.bf16.msra.mxu0 %v2374
    %2395 = vmatprep.subr.bf16.mxu0 0
    %2396 = vmatpush1.bf16.msra.mxu0 %v2375
    %2397 = vmatprep.subr.bf16.mxu0 0
    %2398 = vmatpush1.bf16.msra.mxu0 %v2376
    %2399 = vmatprep.subr.bf16.mxu0 0
    %2400 = vmatpush1.bf16.msra.mxu0 %v2377
    %2401 = vmatprep.subr.bf16.mxu0 0
    %2402 = vmatpush1.bf16.msra.mxu0 %v2378
    %2403 = vmatprep.subr.bf16.mxu0 0
    %2404 = vmatpush1.bf16.msra.mxu0 0
    %2405 = vmatprep.subr.bf16.mxu0 0
    %2406 = vmatpush1.bf16.msra.mxu0 0
    %2407 = vmatprep.subr.bf16.mxu0 0
    %2408 = vmatpush1.bf16.msra.mxu0 0
    %2409 = vmatprep.subr.bf16.mxu0 0
    %2410 = vmatpush1.bf16.msra.mxu0 0
    %2411 = vmatprep.subr.bf16.mxu0 0
    %2412 = vmatpush1.bf16.msra.mxu0 0
    %2413 = vmatprep.subr.bf16.mxu0 0
    %2414 = vmatpush1.bf16.msra.mxu0 0
    %2415 = vmatprep.subr.bf16.mxu0 0
    %2416 = vmatpush1.bf16.msra.mxu0 0
    %2417 = vmatprep.subr.bf16.mxu0 0
    %2418 = vmatpush1.bf16.msra.mxu0 0
    %2419 = vmatprep.mubr.bf16.mxu0 0
    %2420 = vmatmul.mubr.bf16.gmra.mrb[0].mxu0 %v2322
    %v2421 = vpop.f32.mrb[0].mxu0
    %v2422 = vadd.f32 0.0, %v2421
    %v2423 = vpop.f32.mrb[0].mxu0
    %v2424 = vpop.f32.mrb[0].mxu0
    %v2425 = vadd.f32 0.0, %v2424
    %v2426 = vpop.f32.mrb[0].mxu0
    %2427 = vdwg.mxu0
    %v2444 = vunpack.c.l.b16 %v2306
    %v2445 = vunpack.c.l.b16 %v2307
    %v2446 = vunpack.c.l.b16 %v2308
    %v2447 = vunpack.c.l.b16 %v2309
    %v2448 = vunpack.c.l.b16 %v2310
    %v2449 = vunpack.c.l.b16 %v2311
    %v2450 = vunpack.c.l.b16 %v2312
    %v2451 = vunpack.c.l.b16 %v2313
    %v2452 = vunpack.c.l.b16 %v2314
    %v2453 = vunpack.c.l.b16 %v2315
    %v2454 = vunpack.c.l.b16 %v2316
    %v2455 = vunpack.c.l.b16 %v2317
    %v2456 = vunpack.c.l.b16 %v2318
    %v2457 = vunpack.c.l.b16 %v2319
    %v2458 = vunpack.c.l.b16 %v2320
    %v2459 = vunpack.c.l.b16 %v2321
    %v2460 = vpack.c.b16 %v2445, %v2444
    %v2461 = vpack.c.b16 %v2447, %v2446
    %v2462 = vpack.c.b16 %v2449, %v2448
    %v2463 = vpack.c.b16 %v2451, %v2450
    %v2464 = vpack.c.b16 %v2453, %v2452
    %v2465 = vpack.c.b16 %v2455, %v2454
    %v2466 = vpack.c.b16 %v2457, %v2456
    %v2467 = vpack.c.b16 %v2459, %v2458
    %2476 = vmatprep.subr.bf16.mxu0 0
    %2477 = vmatpush1.bf16.msra.mxu0 %v2460
    %2478 = vmatprep.subr.bf16.mxu0 0
    %2479 = vmatpush1.bf16.msra.mxu0 %v2461
    %2480 = vmatprep.subr.bf16.mxu0 0
    %2481 = vmatpush1.bf16.msra.mxu0 %v2462
    %2482 = vmatprep.subr.bf16.mxu0 0
    %2483 = vmatpush1.bf16.msra.mxu0 %v2463
    %2484 = vmatprep.subr.bf16.mxu0 0
    %2485 = vmatpush1.bf16.msra.mxu0 %v2464
    %2486 = vmatprep.subr.bf16.mxu0 0
    %2487 = vmatpush1.bf16.msra.mxu0 %v2465
    %2488 = vmatprep.subr.bf16.mxu0 0
    %2489 = vmatpush1.bf16.msra.mxu0 %v2466
    %2490 = vmatprep.subr.bf16.mxu0 0
    %2491 = vmatpush1.bf16.msra.mxu0 %v2467
    %2492 = vmatprep.subr.bf16.mxu0 0
    %2493 = vmatpush1.bf16.msra.mxu0 0
    %2494 = vmatprep.subr.bf16.mxu0 0
    %2495 = vmatpush1.bf16.msra.mxu0 0
    %2496 = vmatprep.subr.bf16.mxu0 0
    %2497 = vmatpush1.bf16.msra.mxu0 0
    %2498 = vmatprep.subr.bf16.mxu0 0
    %2499 = vmatpush1.bf16.msra.mxu0 0
    %2500 = vmatprep.subr.bf16.mxu0 0
    %2501 = vmatpush1.bf16.msra.mxu0 0
    %2502 = vmatprep.subr.bf16.mxu0 0
    %2503 = vmatpush1.bf16.msra.mxu0 0
    %2504 = vmatprep.subr.bf16.mxu0 0
    %2505 = vmatpush1.bf16.msra.mxu0 0
    %2506 = vmatprep.subr.bf16.mxu0 0
    %2507 = vmatpush1.bf16.msra.mxu0 0
    %2508 = vmatprep.mubr.bf16.mxu0 0
    %2509 = vmatmul.mubr.bf16.gmra.mrb[0].mxu0 %v2264
    %v2510 = vpop.f32.mrb[0].mxu0
    %v2511 = vadd.f32 %v2422, %v2510
    %v2512 = vpop.f32.mrb[0].mxu0
    %v2513 = vpop.f32.mrb[0].mxu0
    %v2514 = vadd.f32 %v2425, %v2513
    %v2515 = vpop.f32.mrb[0].mxu0
    %2516 = vdwg.mxu0
    %v2517 = vld [vmem:[#allocation17] sm:$0x1]
    %v2519 = vlaneseq
    %v2520 = vshrl.u32 %v2519, 7
    %v2521 = vsub.s32 0, %v2520
    %v2522 = vrot.slane %v2517, %v2521
    %v2524 = vadd.f32 %v2511, %v2522
    %v2525 = vadd.f32 %v2514, %v2522
    %v2526 = vmax.f32 %v2524, 0.0
    %v2527 = vmax.f32 %v2525, 0.0
    %v2528 = vld [vmem:[%s14] sm:$0x1]
    %v2530 = vlaneseq
    %v2531 = vshrl.u32 %v2530, 7
    %v2532 = vsub.s32 0, %v2531
    %v2533 = vrot.slane %v2528, %v2532
    %v2535 = vmul.f32 %v2526, %v2533
    %v2536 = vmul.f32 %v2527, %v2533
    %2537 = vadd.xlane.f32.xlu0 %v2535
    %v2538 = vpop.xlane.xlu0 %2537
    %2539 = vadd.xlane.f32.xlu0 %v2536
    %v2540 = vpop.xlane.xlu0 %2539
    %v2541 = vtanh.pop %v2538
    %v2542 = vtanh.pop %v2540
    %vm2543 = vmand %vm297, %vm2227
    %vm2544 = vmand %vm298, %vm2244
    %v2545 = vsel %vm2543, %v2541, -1e+30
    %v2546 = vsel %vm2544, %v2542, -1e+30
    %v2547 = vmax.f32 %v2545, %v2546
    %v2548 = vrot.slane %v2547, 4
    %v2549 = vmax.f32 %v2547, %v2548
    %v2550 = vrot.slane %v2549, 2
    %v2551 = vmax.f32 %v2549, %v2550
    %v2552 = vrot.slane %v2551, 1
    %v2553 = vmax.f32 %v2551, %v2552
    %vm2554 = vcmp.ge.f32.partialorder %v2545, %v2553
    %vm2555 = vcmp.ge.f32.partialorder %v2546, %v2553
    %v2556 = vsel %vm2554, %v291, 16.0
    %v2557 = vsel %vm2555, %v292, 16.0
    %v2558 = vmin.f32 %v2556, %v2557
    %v2559 = vrot.slane %v2558, 4
    %v2560 = vmin.f32 %v2558, %v2559
    %v2561 = vrot.slane %v2560, 2
    %v2562 = vmin.f32 %v2560, %v2561
    %v2563 = vrot.slane %v2562, 1
    %v2564 = vmin.f32 %v2562, %v2563
    %vm2565 = vcmp.eq.f32.partialorder %v291, %v2564
    %vm2566 = vcmp.eq.f32.partialorder %v292, %v2564
    %v2567 = vsel %vm2565, 1, 0
    %v2568 = vsel %vm2566, 1, 0
    %v2569 = vcvt.s32.f32 %v2567
    %v2570 = vcvt.s32.f32 %v2568
    %v2571 = vadd.f32 %v2569, 0.0
    %v2572 = vadd.f32 %v2570, 0.0
    %v2573 = vsel %vm2565, -1e+30, %v2545
    %v2574 = vsel %vm2566, -1e+30, %v2546
    %v2575 = vmax.f32 %v2573, %v2574
    %v2576 = vrot.slane %v2575, 4
    %v2577 = vmax.f32 %v2575, %v2576
    %v2578 = vrot.slane %v2577, 2
    %v2579 = vmax.f32 %v2577, %v2578
    %v2580 = vrot.slane %v2579, 1
    %v2581 = vmax.f32 %v2579, %v2580
    %vm2582 = vcmp.ge.f32.partialorder %v2573, %v2581
    %vm2583 = vcmp.ge.f32.partialorder %v2574, %v2581
    %v2584 = vsel %vm2582, %v291, 16.0
    %v2585 = vsel %vm2583, %v292, 16.0
    %v2586 = vmin.f32 %v2584, %v2585
    %v2587 = vrot.slane %v2586, 4
    %v2588 = vmin.f32 %v2586, %v2587
    %v2589 = vrot.slane %v2588, 2
    %v2590 = vmin.f32 %v2588, %v2589
    %v2591 = vrot.slane %v2590, 1
    %v2592 = vmin.f32 %v2590, %v2591
    %vm2593 = vcmp.eq.f32.partialorder %v291, %v2592
    %vm2594 = vcmp.eq.f32.partialorder %v292, %v2592
    %v2595 = vsel %vm2593, 1, 0
    %v2596 = vsel %vm2594, 1, 0
    %v2597 = vcvt.s32.f32 %v2595
    %v2598 = vcvt.s32.f32 %v2596
    %v2599 = vadd.f32 %v2571, %v2597
    %v2600 = vadd.f32 %v2572, %v2598
    %v2601 = vsel %vm2593, -1e+30, %v2573
    %v2602 = vsel %vm2594, -1e+30, %v2574
    %v2603 = vmax.f32 %v2601, %v2602
    %v2604 = vrot.slane %v2603, 4
    %v2605 = vmax.f32 %v2603, %v2604
    %v2606 = vrot.slane %v2605, 2
    %v2607 = vmax.f32 %v2605, %v2606
    %v2608 = vrot.slane %v2607, 1
    %v2609 = vmax.f32 %v2607, %v2608
    %vm2610 = vcmp.ge.f32.partialorder %v2601, %v2609
    %vm2611 = vcmp.ge.f32.partialorder %v2602, %v2609
    %v2612 = vsel %vm2610, %v291, 16.0
    %v2613 = vsel %vm2611, %v292, 16.0
    %v2614 = vmin.f32 %v2612, %v2613
    %v2615 = vrot.slane %v2614, 4
    %v2616 = vmin.f32 %v2614, %v2615
    %v2617 = vrot.slane %v2616, 2
    %v2618 = vmin.f32 %v2616, %v2617
    %v2619 = vrot.slane %v2618, 1
    %v2620 = vmin.f32 %v2618, %v2619
    %vm2621 = vcmp.eq.f32.partialorder %v291, %v2620
    %vm2622 = vcmp.eq.f32.partialorder %v292, %v2620
    %v2623 = vsel %vm2621, 1, 0
    %v2624 = vsel %vm2622, 1, 0
    %v2625 = vcvt.s32.f32 %v2623
    %v2626 = vcvt.s32.f32 %v2624
    %v2627 = vadd.f32 %v2599, %v2625
    %v2628 = vadd.f32 %v2600, %v2626
    %v2629 = vsel %vm2621, -1e+30, %v2601
    %v2630 = vsel %vm2622, -1e+30, %v2602
    %v2631 = vmax.f32 %v2629, %v2630
    %v2632 = vrot.slane %v2631, 4
    %v2633 = vmax.f32 %v2631, %v2632
    %v2634 = vrot.slane %v2633, 2
    %v2635 = vmax.f32 %v2633, %v2634
    %v2636 = vrot.slane %v2635, 1
    %v2637 = vmax.f32 %v2635, %v2636
    %vm2638 = vcmp.ge.f32.partialorder %v2629, %v2637
    %vm2639 = vcmp.ge.f32.partialorder %v2630, %v2637
    %v2640 = vsel %vm2638, %v291, 16.0
    %v2641 = vsel %vm2639, %v292, 16.0
    %v2642 = vmin.f32 %v2640, %v2641
    %v2643 = vrot.slane %v2642, 4
    %v2644 = vmin.f32 %v2642, %v2643
    %v2645 = vrot.slane %v2644, 2
    %v2646 = vmin.f32 %v2644, %v2645
    %v2647 = vrot.slane %v2646, 1
    %v2648 = vmin.f32 %v2646, %v2647
    %vm2649 = vcmp.eq.f32.partialorder %v291, %v2648
    %vm2650 = vcmp.eq.f32.partialorder %v292, %v2648
    %v2651 = vsel %vm2649, 1, 0
    %v2652 = vsel %vm2650, 1, 0
    %v2653 = vcvt.s32.f32 %v2651
    %v2654 = vcvt.s32.f32 %v2652
    %v2655 = vadd.f32 %v2627, %v2653
    %v2656 = vadd.f32 %v2628, %v2654
    %v2657 = vsel %vm2649, -1e+30, %v2629
    %v2658 = vsel %vm2650, -1e+30, %v2630
    %v2659 = vmax.f32 %v2657, %v2658
    %v2660 = vrot.slane %v2659, 4
    %v2661 = vmax.f32 %v2659, %v2660
    %v2662 = vrot.slane %v2661, 2
    %v2663 = vmax.f32 %v2661, %v2662
    %v2664 = vrot.slane %v2663, 1
    %v2665 = vmax.f32 %v2663, %v2664
    %vm2666 = vcmp.ge.f32.partialorder %v2657, %v2665
    %vm2667 = vcmp.ge.f32.partialorder %v2658, %v2665
    %v2668 = vsel %vm2666, %v291, 16.0
    %v2669 = vsel %vm2667, %v292, 16.0
    %v2670 = vmin.f32 %v2668, %v2669
    %v2671 = vrot.slane %v2670, 4
    %v2672 = vmin.f32 %v2670, %v2671
    %v2673 = vrot.slane %v2672, 2
    %v2674 = vmin.f32 %v2672, %v2673
    %v2675 = vrot.slane %v2674, 1
    %v2676 = vmin.f32 %v2674, %v2675
    %vm2677 = vcmp.eq.f32.partialorder %v291, %v2676
    %vm2678 = vcmp.eq.f32.partialorder %v292, %v2676
    %v2679 = vsel %vm2677, 1, 0
    %v2680 = vsel %vm2678, 1, 0
    %v2681 = vcvt.s32.f32 %v2679
    %v2682 = vcvt.s32.f32 %v2680
    %v2683 = vadd.f32 %v2655, %v2681
    %v2684 = vadd.f32 %v2656, %v2682
    %v2685 = vsel %vm2677, -1e+30, %v2657
    %v2686 = vsel %vm2678, -1e+30, %v2658
    %v2687 = vmax.f32 %v2685, %v2686
    %v2688 = vrot.slane %v2687, 4
    %v2689 = vmax.f32 %v2687, %v2688
    %v2690 = vrot.slane %v2689, 2
    %v2691 = vmax.f32 %v2689, %v2690
    %v2692 = vrot.slane %v2691, 1
    %v2693 = vmax.f32 %v2691, %v2692
    %vm2694 = vcmp.ge.f32.partialorder %v2685, %v2693
    %vm2695 = vcmp.ge.f32.partialorder %v2686, %v2693
    %v2696 = vsel %vm2694, %v291, 16.0
    %v2697 = vsel %vm2695, %v292, 16.0
    %v2698 = vmin.f32 %v2696, %v2697
    %v2699 = vrot.slane %v2698, 4
    %v2700 = vmin.f32 %v2698, %v2699
    %v2701 = vrot.slane %v2700, 2
    %v2702 = vmin.f32 %v2700, %v2701
    %v2703 = vrot.slane %v2702, 1
    %v2704 = vmin.f32 %v2702, %v2703
    %vm2705 = vcmp.eq.f32.partialorder %v291, %v2704
    %vm2706 = vcmp.eq.f32.partialorder %v292, %v2704
    %v2707 = vsel %vm2705, 1, 0
    %v2708 = vsel %vm2706, 1, 0
    %v2709 = vcvt.s32.f32 %v2707
    %v2710 = vcvt.s32.f32 %v2708
    %v2711 = vadd.f32 %v2683, %v2709
    %v2712 = vadd.f32 %v2684, %v2710
    %vm2713 = vmand %vm303, %vm2227
    %vm2714 = vmand %vm304, %vm2244
    %v2715 = vsel %vm2713, %v2541, -1e+30
    %v2716 = vsel %vm2714, %v2542, -1e+30
    %v2717 = vmax.f32 %v2715, %v2716
    %v2718 = vrot.slane %v2717, 4
    %v2719 = vmax.f32 %v2717, %v2718
    %v2720 = vrot.slane %v2719, 2
    %v2721 = vmax.f32 %v2719, %v2720
    %v2722 = vrot.slane %v2721, 1
    %v2723 = vmax.f32 %v2721, %v2722
    %vm2724 = vcmp.ge.f32.partialorder %v2715, %v2723
    %vm2725 = vcmp.ge.f32.partialorder %v2716, %v2723
    %v2726 = vsel %vm2724, %v291, 16.0
    %v2727 = vsel %vm2725, %v292, 16.0
    %v2728 = vmin.f32 %v2726, %v2727
    %v2729 = vrot.slane %v2728, 4
    %v2730 = vmin.f32 %v2728, %v2729
    %v2731 = vrot.slane %v2730, 2
    %v2732 = vmin.f32 %v2730, %v2731
    %v2733 = vrot.slane %v2732, 1
    %v2734 = vmin.f32 %v2732, %v2733
    %vm2735 = vcmp.eq.f32.partialorder %v291, %v2734
    %vm2736 = vcmp.eq.f32.partialorder %v292, %v2734
    %v2737 = vsel %vm2735, 1, 0
    %v2738 = vsel %vm2736, 1, 0
    %v2739 = vcvt.s32.f32 %v2737
    %v2740 = vcvt.s32.f32 %v2738
    %v2741 = vadd.f32 %v2711, %v2739
    %v2742 = vadd.f32 %v2712, %v2740
    %v2743 = vsel %vm2735, -1e+30, %v2715
    %v2744 = vsel %vm2736, -1e+30, %v2716
    %v2745 = vmax.f32 %v2743, %v2744
    %v2746 = vrot.slane %v2745, 4
    %v2747 = vmax.f32 %v2745, %v2746
    %v2748 = vrot.slane %v2747, 2
    %v2749 = vmax.f32 %v2747, %v2748
    %v2750 = vrot.slane %v2749, 1
    %v2751 = vmax.f32 %v2749, %v2750
    %vm2752 = vcmp.ge.f32.partialorder %v2743, %v2751
    %vm2753 = vcmp.ge.f32.partialorder %v2744, %v2751
    %v2754 = vsel %vm2752, %v291, 16.0
    %v2755 = vsel %vm2753, %v292, 16.0
    %v2756 = vmin.f32 %v2754, %v2755
    %v2757 = vrot.slane %v2756, 4
    %v2758 = vmin.f32 %v2756, %v2757
    %v2759 = vrot.slane %v2758, 2
    %v2760 = vmin.f32 %v2758, %v2759
    %v2761 = vrot.slane %v2760, 1
    %v2762 = vmin.f32 %v2760, %v2761
    %vm2763 = vcmp.eq.f32.partialorder %v291, %v2762
    %vm2764 = vcmp.eq.f32.partialorder %v292, %v2762
    %v2765 = vsel %vm2763, 1, 0
    %v2766 = vsel %vm2764, 1, 0
    %v2767 = vcvt.s32.f32 %v2765
    %v2768 = vcvt.s32.f32 %v2766
    %v2769 = vadd.f32 %v2741, %v2767
    %v2770 = vadd.f32 %v2742, %v2768
    %v2771 = vsel %vm2763, -1e+30, %v2743
    %v2772 = vsel %vm2764, -1e+30, %v2744
    %v2773 = vmax.f32 %v2771, %v2772
    %v2774 = vrot.slane %v2773, 4
    %v2775 = vmax.f32 %v2773, %v2774
    %v2776 = vrot.slane %v2775, 2
    %v2777 = vmax.f32 %v2775, %v2776
    %v2778 = vrot.slane %v2777, 1
    %v2779 = vmax.f32 %v2777, %v2778
    %vm2780 = vcmp.ge.f32.partialorder %v2771, %v2779
    %vm2781 = vcmp.ge.f32.partialorder %v2772, %v2779
    %v2782 = vsel %vm2780, %v291, 16.0
    %v2783 = vsel %vm2781, %v292, 16.0
    %v2784 = vmin.f32 %v2782, %v2783
    %v2785 = vrot.slane %v2784, 4
    %v2786 = vmin.f32 %v2784, %v2785
    %v2787 = vrot.slane %v2786, 2
    %v2788 = vmin.f32 %v2786, %v2787
    %v2789 = vrot.slane %v2788, 1
    %v2790 = vmin.f32 %v2788, %v2789
    %vm2791 = vcmp.eq.f32.partialorder %v291, %v2790
    %vm2792 = vcmp.eq.f32.partialorder %v292, %v2790
    %v2793 = vsel %vm2791, 1, 0
    %v2794 = vsel %vm2792, 1, 0
    %v2795 = vcvt.s32.f32 %v2793
    %v2796 = vcvt.s32.f32 %v2794
    %v2797 = vadd.f32 %v2769, %v2795
    %v2798 = vadd.f32 %v2770, %v2796
    %v2799 = vsel %vm2791, -1e+30, %v2771
    %v2800 = vsel %vm2792, -1e+30, %v2772
    %v2801 = vmax.f32 %v2799, %v2800
    %v2802 = vrot.slane %v2801, 4
    %v2803 = vmax.f32 %v2801, %v2802
    %v2804 = vrot.slane %v2803, 2
    %v2805 = vmax.f32 %v2803, %v2804
    %v2806 = vrot.slane %v2805, 1
    %v2807 = vmax.f32 %v2805, %v2806
    %vm2808 = vcmp.ge.f32.partialorder %v2799, %v2807
    %vm2809 = vcmp.ge.f32.partialorder %v2800, %v2807
    %v2810 = vsel %vm2808, %v291, 16.0
    %v2811 = vsel %vm2809, %v292, 16.0
    %v2812 = vmin.f32 %v2810, %v2811
    %v2813 = vrot.slane %v2812, 4
    %v2814 = vmin.f32 %v2812, %v2813
    %v2815 = vrot.slane %v2814, 2
    %v2816 = vmin.f32 %v2814, %v2815
    %v2817 = vrot.slane %v2816, 1
    %v2818 = vmin.f32 %v2816, %v2817
    %vm2819 = vcmp.eq.f32.partialorder %v291, %v2818
    %vm2820 = vcmp.eq.f32.partialorder %v292, %v2818
    %v2821 = vsel %vm2819, 1, 0
    %v2822 = vsel %vm2820, 1, 0
    %v2823 = vcvt.s32.f32 %v2821
    %v2824 = vcvt.s32.f32 %v2822
    %v2825 = vadd.f32 %v2797, %v2823
    %v2826 = vadd.f32 %v2798, %v2824
    %v2827 = vsel %vm2819, -1e+30, %v2799
    %v2828 = vsel %vm2820, -1e+30, %v2800
    %v2829 = vmax.f32 %v2827, %v2828
    %v2830 = vrot.slane %v2829, 4
    %v2831 = vmax.f32 %v2829, %v2830
    %v2832 = vrot.slane %v2831, 2
    %v2833 = vmax.f32 %v2831, %v2832
    %v2834 = vrot.slane %v2833, 1
    %v2835 = vmax.f32 %v2833, %v2834
    %vm2836 = vcmp.ge.f32.partialorder %v2827, %v2835
    %vm2837 = vcmp.ge.f32.partialorder %v2828, %v2835
    %v2838 = vsel %vm2836, %v291, 16.0
    %v2839 = vsel %vm2837, %v292, 16.0
    %v2840 = vmin.f32 %v2838, %v2839
    %v2841 = vrot.slane %v2840, 4
    %v2842 = vmin.f32 %v2840, %v2841
    %v2843 = vrot.slane %v2842, 2
    %v2844 = vmin.f32 %v2842, %v2843
    %v2845 = vrot.slane %v2844, 1
    %v2846 = vmin.f32 %v2844, %v2845
    %vm2847 = vcmp.eq.f32.partialorder %v291, %v2846
    %vm2848 = vcmp.eq.f32.partialorder %v292, %v2846
    %v2849 = vsel %vm2847, 1, 0
    %v2850 = vsel %vm2848, 1, 0
    %v2851 = vcvt.s32.f32 %v2849
    %v2852 = vcvt.s32.f32 %v2850
    %v2853 = vadd.f32 %v2825, %v2851
    %v2854 = vadd.f32 %v2826, %v2852
    %v2855 = vsel %vm2847, -1e+30, %v2827
    %v2856 = vsel %vm2848, -1e+30, %v2828
    %v2857 = vmax.f32 %v2855, %v2856
    %v2858 = vrot.slane %v2857, 4
    %v2859 = vmax.f32 %v2857, %v2858
    %v2860 = vrot.slane %v2859, 2
    %v2861 = vmax.f32 %v2859, %v2860
    %v2862 = vrot.slane %v2861, 1
    %v2863 = vmax.f32 %v2861, %v2862
    %vm2864 = vcmp.ge.f32.partialorder %v2855, %v2863
    %vm2865 = vcmp.ge.f32.partialorder %v2856, %v2863
    %v2866 = vsel %vm2864, %v291, 16.0
    %v2867 = vsel %vm2865, %v292, 16.0
    %v2868 = vmin.f32 %v2866, %v2867
    %v2869 = vrot.slane %v2868, 4
    %v2870 = vmin.f32 %v2868, %v2869
    %v2871 = vrot.slane %v2870, 2
    %v2872 = vmin.f32 %v2870, %v2871
    %v2873 = vrot.slane %v2872, 1
    %v2874 = vmin.f32 %v2872, %v2873
    %vm2875 = vcmp.eq.f32.partialorder %v291, %v2874
    %vm2876 = vcmp.eq.f32.partialorder %v292, %v2874
    %v2877 = vsel %vm2875, 1, 0
    %v2878 = vsel %vm2876, 1, 0
    %v2879 = vcvt.s32.f32 %v2877
    %v2880 = vcvt.s32.f32 %v2878
    %v2881 = vadd.f32 %v2853, %v2879
    %v2882 = vadd.f32 %v2854, %v2880
    %v2883 = vmul.f32 %v2526, %v2541
    %v2884 = vmul.f32 %v2527, %v2542
    %v2885 = vmul.f32 %v2883, %v2881
    %v2886 = vmul.f32 %v2884, %v2882
    %vm2887 = vcmp.gt.f32.partialorder %v2881, 0.5
    %v2888 = vsel %vm2887, 1, 0
    %vm2889 = vcmp.eq.s32.totalorder %v2888, 1
    %v2890 = vsel %vm2889, %v2885, -1e+30
    %v2891 = vrot.slane %v2890, 4
    %v2892 = vmax.f32 %v2890, %v2891
    %v2893 = vrot.slane %v2892, 2
    %v2894 = vmax.f32 %v2892, %v2893
    %v2895 = vrot.slane %v2894, 1
    %v2896 = vmax.f32 %v2894, %v2895
    %v2897 = vrot.slane %v2885, 4
    %v2898 = vadd.f32 %v2885, %v2897
    %v2899 = vrot.slane %v2898, 2
    %v2900 = vadd.f32 %v2898, %v2899
    %v2901 = vrot.slane %v2900, 1
    %v2902 = vadd.f32 %v2900, %v2901
    %v2903 = vmul.f32 %v2902, 0.16666667
    %vm2904 = vcmp.gt.f32.partialorder %v2882, 0.5
    %v2905 = vsel %vm2904, 1, 0
    %vm2906 = vcmp.eq.s32.totalorder %v2905, 1
    %v2907 = vsel %vm2906, %v2886, -1e+30
    %v2908 = vrot.slane %v2907, 4
    %v2909 = vmax.f32 %v2907, %v2908
    %v2910 = vrot.slane %v2909, 2
    %v2911 = vmax.f32 %v2909, %v2910
    %v2912 = vrot.slane %v2911, 1
    %v2913 = vmax.f32 %v2911, %v2912
    %v2914 = vrot.slane %v2886, 4
    %v2915 = vadd.f32 %v2886, %v2914
    %v2916 = vrot.slane %v2915, 2
    %v2917 = vadd.f32 %v2915, %v2916
    %v2918 = vrot.slane %v2917, 1
    %v2919 = vadd.f32 %v2917, %v2918
    %v2920 = vmul.f32 %v2919, 0.16666667
    %v2921 = vsel %vm2261, %v2896, %v2913
    %v2922 = vsel %vm2261, %v2903, %v2920
    %v2923 = vpack.c.bf16 %v2886, %v2885
    %2924 = vmatprep.subr.bf16.mxu0 0
    %2925 = vmatpush1.bf16.msra.mxu0 %v2923
    %2926 = vmatprep.subr.bf16.mxu0 0
    %2927 = vmatpush1.bf16.msra.mxu0 0
    %2928 = vmatprep.subr.bf16.mxu0 0
    %2929 = vmatpush1.bf16.msra.mxu0 0
    %2930 = vmatprep.subr.bf16.mxu0 0
    %2931 = vmatpush1.bf16.msra.mxu0 0
    %2932 = vmatprep.subr.bf16.mxu0 0
    %2933 = vmatpush1.bf16.msra.mxu0 0
    %2934 = vmatprep.subr.bf16.mxu0 0
    %2935 = vmatpush1.bf16.msra.mxu0 0
    %2936 = vmatprep.subr.bf16.mxu0 0
    %2937 = vmatpush1.bf16.msra.mxu0 0
    %2938 = vmatprep.subr.bf16.mxu0 0
    %2939 = vmatpush1.bf16.msra.mxu0 0
    %2940 = vmatprep.subr.bf16.mxu0 0
    %2941 = vmatpush1.bf16.msra.mxu0 0
    %2942 = vmatprep.subr.bf16.mxu0 0
    %2943 = vmatpush1.bf16.msra.mxu0 0
    %2944 = vmatprep.subr.bf16.mxu0 0
    %2945 = vmatpush1.bf16.msra.mxu0 0
    %2946 = vmatprep.subr.bf16.mxu0 0
    %2947 = vmatpush1.bf16.msra.mxu0 0
    %2948 = vmatprep.subr.bf16.mxu0 0
    %2949 = vmatpush1.bf16.msra.mxu0 0
    %2950 = vmatprep.subr.bf16.mxu0 0
    %2951 = vmatpush1.bf16.msra.mxu0 0
    %2952 = vmatprep.subr.bf16.mxu0 0
    %2953 = vmatpush1.bf16.msra.mxu0 0
    %2954 = vmatprep.subr.bf16.mxu0 0
    %2955 = vmatpush1.bf16.msra.mxu0 0
    %2956 = vmatprep.mubr.bf16.mxu0 0
    %2957 = vmatmul.mubr.bf16.gmra.mrb[0].mxu0 %v318
    %v2958 = vpop.f32.mrb[0].mxu0
    %v2959 = vadd.f32 0.0, %v2958
    %v2960 = vpop.f32.mrb[0].mxu0
    %v2961 = vpop.f32.mrb[0].mxu0
    %v2962 = vadd.f32 0.0, %v2961
    %v2963 = vpop.f32.mrb[0].mxu0
    %2964 = vdwg.mxu0
    %v2965 = vld [vmem:[#allocation19] sm:$0xf]
    %v2966 = vld [vmem:[#allocation19 + $0x4] sm:$0xf]
    %v2967 = vld [vmem:[#allocation19 + $0x8] sm:$0xf]
    %v2968 = vld [vmem:[#allocation19 + $0xc] sm:$0xf]
    %v2969 = vld [vmem:[#allocation19 + $0x10] sm:$0xf]
    %v2970 = vld [vmem:[#allocation19 + $0x14] sm:$0xf]
    %v2971 = vld [vmem:[#allocation19 + $0x18] sm:$0xf]
    %v2972 = vld [vmem:[#allocation19 + $0x1c] sm:$0xf]
    %v2973 = vld [vmem:[#allocation19 + $0x20] sm:$0xf]
    %v2974 = vld [vmem:[#allocation19 + $0x24] sm:$0xf]
    %v2975 = vld [vmem:[#allocation19 + $0x28] sm:$0xf]
    %v2976 = vld [vmem:[#allocation19 + $0x2c] sm:$0xf]
    %v2977 = vld [vmem:[#allocation19 + $0x30] sm:$0xf]
    %v2978 = vld [vmem:[#allocation19 + $0x34] sm:$0xf]
    %v2979 = vld [vmem:[#allocation19 + $0x38] sm:$0xf]
    %v2980 = vld [vmem:[#allocation19 + $0x3c] sm:$0xf]
    %v2981 = vpack.c.bf16 %v2962, %v2959
    %v2982 = vld [vmem:[#allocation20] sm:$0xf]
    %v2983 = vld [vmem:[#allocation20 + $0x4] sm:$0xf]
    %v2984 = vld [vmem:[#allocation20 + $0x8] sm:$0xf]
    %v2985 = vld [vmem:[#allocation20 + $0xc] sm:$0xf]
    %v2986 = vld [vmem:[#allocation20 + $0x10] sm:$0xf]
    %v2987 = vld [vmem:[#allocation20 + $0x14] sm:$0xf]
    %v2988 = vld [vmem:[#allocation20 + $0x18] sm:$0xf]
    %v2989 = vld [vmem:[#allocation20 + $0x1c] sm:$0xf]
    %v2990 = vld [vmem:[#allocation20 + $0x20] sm:$0xf]
    %v2991 = vld [vmem:[#allocation20 + $0x24] sm:$0xf]
    %v2992 = vld [vmem:[#allocation20 + $0x28] sm:$0xf]
    %v2993 = vld [vmem:[#allocation20 + $0x2c] sm:$0xf]
    %v2994 = vld [vmem:[#allocation20 + $0x30] sm:$0xf]
    %v2995 = vld [vmem:[#allocation20 + $0x34] sm:$0xf]
    %v2996 = vld [vmem:[#allocation20 + $0x38] sm:$0xf]
    %v2997 = vld [vmem:[#allocation20 + $0x3c] sm:$0xf]
    %v3014 = vunpack.c.l.b16 %v2982
    %v3015 = vunpack.c.l.b16 %v2983
    %v3016 = vunpack.c.l.b16 %v2984
    %v3017 = vunpack.c.l.b16 %v2985
    %v3018 = vunpack.c.l.b16 %v2986
    %v3019 = vunpack.c.l.b16 %v2987
    %v3020 = vunpack.c.l.b16 %v2988
    %v3021 = vunpack.c.l.b16 %v2989
    %v3022 = vunpack.c.l.b16 %v2990
    %v3023 = vunpack.c.l.b16 %v2991
    %v3024 = vunpack.c.l.b16 %v2992
    %v3025 = vunpack.c.l.b16 %v2993
    %v3026 = vunpack.c.l.b16 %v2994
    %v3027 = vunpack.c.l.b16 %v2995
    %v3028 = vunpack.c.l.b16 %v2996
    %v3029 = vunpack.c.l.b16 %v2997
    %v3030 = vpack.c.b16 %v3015, %v3014
    %v3031 = vpack.c.b16 %v3017, %v3016
    %v3032 = vpack.c.b16 %v3019, %v3018
    %v3033 = vpack.c.b16 %v3021, %v3020
    %v3034 = vpack.c.b16 %v3023, %v3022
    %v3035 = vpack.c.b16 %v3025, %v3024
    %v3036 = vpack.c.b16 %v3027, %v3026
    %v3037 = vpack.c.b16 %v3029, %v3028
    %3046 = vmatprep.subr.bf16.mxu0 0
    %3047 = vmatpush1.bf16.msra.mxu0 %v3030
    %3048 = vmatprep.subr.bf16.mxu0 0
    %3049 = vmatpush1.bf16.msra.mxu0 %v3031
    %3050 = vmatprep.subr.bf16.mxu0 0
    %3051 = vmatpush1.bf16.msra.mxu0 %v3032
    %3052 = vmatprep.subr.bf16.mxu0 0
    %3053 = vmatpush1.bf16.msra.mxu0 %v3033
    %3054 = vmatprep.subr.bf16.mxu0 0
    %3055 = vmatpush1.bf16.msra.mxu0 %v3034
    %3056 = vmatprep.subr.bf16.mxu0 0
    %3057 = vmatpush1.bf16.msra.mxu0 %v3035
    %3058 = vmatprep.subr.bf16.mxu0 0
    %3059 = vmatpush1.bf16.msra.mxu0 %v3036
    %3060 = vmatprep.subr.bf16.mxu0 0
    %3061 = vmatpush1.bf16.msra.mxu0 %v3037
    %3062 = vmatprep.subr.bf16.mxu0 0
    %3063 = vmatpush1.bf16.msra.mxu0 0
    %3064 = vmatprep.subr.bf16.mxu0 0
    %3065 = vmatpush1.bf16.msra.mxu0 0
    %3066 = vmatprep.subr.bf16.mxu0 0
    %3067 = vmatpush1.bf16.msra.mxu0 0
    %3068 = vmatprep.subr.bf16.mxu0 0
    %3069 = vmatpush1.bf16.msra.mxu0 0
    %3070 = vmatprep.subr.bf16.mxu0 0
    %3071 = vmatpush1.bf16.msra.mxu0 0
    %3072 = vmatprep.subr.bf16.mxu0 0
    %3073 = vmatpush1.bf16.msra.mxu0 0
    %3074 = vmatprep.subr.bf16.mxu0 0
    %3075 = vmatpush1.bf16.msra.mxu0 0
    %3076 = vmatprep.subr.bf16.mxu0 0
    %3077 = vmatpush1.bf16.msra.mxu0 0
    %3078 = vmatprep.mubr.bf16.mxu0 0
    %3079 = vmatmul.mubr.bf16.gmra.mrb[0].mxu0 %v2981
    %v3080 = vpop.f32.mrb[0].mxu0
    %v3081 = vadd.f32 0.0, %v3080
    %v3082 = vpop.f32.mrb[0].mxu0
    %v3083 = vpop.f32.mrb[0].mxu0
    %v3084 = vadd.f32 0.0, %v3083
    %v3085 = vpop.f32.mrb[0].mxu0
    %3086 = vdwg.mxu0
    %v3103 = vunpack.c.l.b16 %v2965
    %v3104 = vunpack.c.l.b16 %v2966
    %v3105 = vunpack.c.l.b16 %v2967
    %v3106 = vunpack.c.l.b16 %v2968
    %v3107 = vunpack.c.l.b16 %v2969
    %v3108 = vunpack.c.l.b16 %v2970
    %v3109 = vunpack.c.l.b16 %v2971
    %v3110 = vunpack.c.l.b16 %v2972
    %v3111 = vunpack.c.l.b16 %v2973
    %v3112 = vunpack.c.l.b16 %v2974
    %v3113 = vunpack.c.l.b16 %v2975
    %v3114 = vunpack.c.l.b16 %v2976
    %v3115 = vunpack.c.l.b16 %v2977
    %v3116 = vunpack.c.l.b16 %v2978
    %v3117 = vunpack.c.l.b16 %v2979
    %v3118 = vunpack.c.l.b16 %v2980
    %v3119 = vpack.c.b16 %v3104, %v3103
    %v3120 = vpack.c.b16 %v3106, %v3105
    %v3121 = vpack.c.b16 %v3108, %v3107
    %v3122 = vpack.c.b16 %v3110, %v3109
    %v3123 = vpack.c.b16 %v3112, %v3111
    %v3124 = vpack.c.b16 %v3114, %v3113
    %v3125 = vpack.c.b16 %v3116, %v3115
    %v3126 = vpack.c.b16 %v3118, %v3117
    %3135 = vmatprep.subr.bf16.mxu0 0
    %3136 = vmatpush1.bf16.msra.mxu0 %v3119
    %3137 = vmatprep.subr.bf16.mxu0 0
    %3138 = vmatpush1.bf16.msra.mxu0 %v3120
    %3139 = vmatprep.subr.bf16.mxu0 0
    %3140 = vmatpush1.bf16.msra.mxu0 %v3121
    %3141 = vmatprep.subr.bf16.mxu0 0
    %3142 = vmatpush1.bf16.msra.mxu0 %v3122
    %3143 = vmatprep.subr.bf16.mxu0 0
    %3144 = vmatpush1.bf16.msra.mxu0 %v3123
    %3145 = vmatprep.subr.bf16.mxu0 0
    %3146 = vmatpush1.bf16.msra.mxu0 %v3124
    %3147 = vmatprep.subr.bf16.mxu0 0
    %3148 = vmatpush1.bf16.msra.mxu0 %v3125
    %3149 = vmatprep.subr.bf16.mxu0 0
    %3150 = vmatpush1.bf16.msra.mxu0 %v3126
    %3151 = vmatprep.subr.bf16.mxu0 0
    %3152 = vmatpush1.bf16.msra.mxu0 0
    %3153 = vmatprep.subr.bf16.mxu0 0
    %3154 = vmatpush1.bf16.msra.mxu0 0
    %3155 = vmatprep.subr.bf16.mxu0 0
    %3156 = vmatpush1.bf16.msra.mxu0 0
    %3157 = vmatprep.subr.bf16.mxu0 0
    %3158 = vmatpush1.bf16.msra.mxu0 0
    %3159 = vmatprep.subr.bf16.mxu0 0
    %3160 = vmatpush1.bf16.msra.mxu0 0
    %3161 = vmatprep.subr.bf16.mxu0 0
    %3162 = vmatpush1.bf16.msra.mxu0 0
    %3163 = vmatprep.subr.bf16.mxu0 0
    %3164 = vmatpush1.bf16.msra.mxu0 0
    %3165 = vmatprep.subr.bf16.mxu0 0
    %3166 = vmatpush1.bf16.msra.mxu0 0
    %3167 = vmatprep.mubr.bf16.mxu0 0
    %3168 = vmatmul.mubr.bf16.gmra.mrb[0].mxu0 %v2923
    %v3169 = vpop.f32.mrb[0].mxu0
    %v3170 = vadd.f32 %v3081, %v3169
    %v3171 = vpop.f32.mrb[0].mxu0
    %v3172 = vpop.f32.mrb[0].mxu0
    %v3173 = vadd.f32 %v3084, %v3172
    %v3174 = vpop.f32.mrb[0].mxu0
    %3175 = vdwg.mxu0
    %v3176 = vld [vmem:[#allocation22] sm:$0x1]
    %v3178 = vlaneseq
    %v3179 = vshrl.u32 %v3178, 7
    %v3180 = vsub.s32 0, %v3179
    %v3181 = vrot.slane %v3176, %v3180
    %v3183 = vadd.f32 %v3170, %v3181
    %v3184 = vadd.f32 %v3173, %v3181
    %v3185 = vmax.f32 %v3183, 0.0
    %v3186 = vmax.f32 %v3184, 0.0
    %v3187 = vld [vmem:[%s18] sm:$0x1]
    %v3189 = vlaneseq
    %v3190 = vshrl.u32 %v3189, 7
    %v3191 = vsub.s32 0, %v3190
    %v3192 = vrot.slane %v3187, %v3191
    %v3194 = vmul.f32 %v3185, %v3192
    %v3195 = vmul.f32 %v3186, %v3192
    %3196 = vadd.xlane.f32.xlu0 %v3194
    %v3197 = vpop.xlane.xlu0 %3196
    %3198 = vadd.xlane.f32.xlu0 %v3195
    %v3199 = vpop.xlane.xlu0 %3198
    %v3200 = vtanh.pop %v3197
    %v3201 = vtanh.pop %v3199
    %vm3202 = vmand %vm297, %vm2887
    %vm3203 = vmand %vm298, %vm2904
    %v3204 = vsel %vm3202, %v3200, -1e+30
    %v3205 = vsel %vm3203, %v3201, -1e+30
    %v3206 = vmax.f32 %v3204, %v3205
    %v3207 = vrot.slane %v3206, 4
    %v3208 = vmax.f32 %v3206, %v3207
    %v3209 = vrot.slane %v3208, 2
    %v3210 = vmax.f32 %v3208, %v3209
    %v3211 = vrot.slane %v3210, 1
    %v3212 = vmax.f32 %v3210, %v3211
    %vm3213 = vcmp.ge.f32.partialorder %v3204, %v3212
    %vm3214 = vcmp.ge.f32.partialorder %v3205, %v3212
    %v3215 = vsel %vm3213, %v291, 16.0
    %v3216 = vsel %vm3214, %v292, 16.0
    %v3217 = vmin.f32 %v3215, %v3216
    %v3218 = vrot.slane %v3217, 4
    %v3219 = vmin.f32 %v3217, %v3218
    %v3220 = vrot.slane %v3219, 2
    %v3221 = vmin.f32 %v3219, %v3220
    %v3222 = vrot.slane %v3221, 1
    %v3223 = vmin.f32 %v3221, %v3222
    %vm3224 = vcmp.eq.f32.partialorder %v291, %v3223
    %vm3225 = vcmp.eq.f32.partialorder %v292, %v3223
    %v3226 = vsel %vm3224, 1, 0
    %v3227 = vsel %vm3225, 1, 0
    %v3228 = vcvt.s32.f32 %v3226
    %v3229 = vcvt.s32.f32 %v3227
    %v3230 = vadd.f32 %v3228, 0.0
    %v3231 = vadd.f32 %v3229, 0.0
    %v3232 = vsel %vm3224, -1e+30, %v3204
    %v3233 = vsel %vm3225, -1e+30, %v3205
    %v3234 = vmax.f32 %v3232, %v3233
    %v3235 = vrot.slane %v3234, 4
    %v3236 = vmax.f32 %v3234, %v3235
    %v3237 = vrot.slane %v3236, 2
    %v3238 = vmax.f32 %v3236, %v3237
    %v3239 = vrot.slane %v3238, 1
    %v3240 = vmax.f32 %v3238, %v3239
    %vm3241 = vcmp.ge.f32.partialorder %v3232, %v3240
    %vm3242 = vcmp.ge.f32.partialorder %v3233, %v3240
    %v3243 = vsel %vm3241, %v291, 16.0
    %v3244 = vsel %vm3242, %v292, 16.0
    %v3245 = vmin.f32 %v3243, %v3244
    %v3246 = vrot.slane %v3245, 4
    %v3247 = vmin.f32 %v3245, %v3246
    %v3248 = vrot.slane %v3247, 2
    %v3249 = vmin.f32 %v3247, %v3248
    %v3250 = vrot.slane %v3249, 1
    %v3251 = vmin.f32 %v3249, %v3250
    %vm3252 = vcmp.eq.f32.partialorder %v291, %v3251
    %vm3253 = vcmp.eq.f32.partialorder %v292, %v3251
    %v3254 = vsel %vm3252, 1, 0
    %v3255 = vsel %vm3253, 1, 0
    %v3256 = vcvt.s32.f32 %v3254
    %v3257 = vcvt.s32.f32 %v3255
    %v3258 = vadd.f32 %v3230, %v3256
    %v3259 = vadd.f32 %v3231, %v3257
    %v3260 = vsel %vm3252, -1e+30, %v3232
    %v3261 = vsel %vm3253, -1e+30, %v3233
    %v3262 = vmax.f32 %v3260, %v3261
    %v3263 = vrot.slane %v3262, 4
    %v3264 = vmax.f32 %v3262, %v3263
    %v3265 = vrot.slane %v3264, 2
    %v3266 = vmax.f32 %v3264, %v3265
    %v3267 = vrot.slane %v3266, 1
    %v3268 = vmax.f32 %v3266, %v3267
    %vm3269 = vcmp.ge.f32.partialorder %v3260, %v3268
    %vm3270 = vcmp.ge.f32.partialorder %v3261, %v3268
    %v3271 = vsel %vm3269, %v291, 16.0
    %v3272 = vsel %vm3270, %v292, 16.0
    %v3273 = vmin.f32 %v3271, %v3272
    %v3274 = vrot.slane %v3273, 4
    %v3275 = vmin.f32 %v3273, %v3274
    %v3276 = vrot.slane %v3275, 2
    %v3277 = vmin.f32 %v3275, %v3276
    %v3278 = vrot.slane %v3277, 1
    %v3279 = vmin.f32 %v3277, %v3278
    %vm3280 = vcmp.eq.f32.partialorder %v291, %v3279
    %vm3281 = vcmp.eq.f32.partialorder %v292, %v3279
    %v3282 = vsel %vm3280, 1, 0
    %v3283 = vsel %vm3281, 1, 0
    %v3284 = vcvt.s32.f32 %v3282
    %v3285 = vcvt.s32.f32 %v3283
    %v3286 = vadd.f32 %v3258, %v3284
    %v3287 = vadd.f32 %v3259, %v3285
    %v3288 = vsel %vm3280, -1e+30, %v3260
    %v3289 = vsel %vm3281, -1e+30, %v3261
    %v3290 = vmax.f32 %v3288, %v3289
    %v3291 = vrot.slane %v3290, 4
    %v3292 = vmax.f32 %v3290, %v3291
    %v3293 = vrot.slane %v3292, 2
    %v3294 = vmax.f32 %v3292, %v3293
    %v3295 = vrot.slane %v3294, 1
    %v3296 = vmax.f32 %v3294, %v3295
    %vm3297 = vcmp.ge.f32.partialorder %v3288, %v3296
    %vm3298 = vcmp.ge.f32.partialorder %v3289, %v3296
    %v3299 = vsel %vm3297, %v291, 16.0
    %v3300 = vsel %vm3298, %v292, 16.0
    %v3301 = vmin.f32 %v3299, %v3300
    %v3302 = vrot.slane %v3301, 4
    %v3303 = vmin.f32 %v3301, %v3302
    %v3304 = vrot.slane %v3303, 2
    %v3305 = vmin.f32 %v3303, %v3304
    %v3306 = vrot.slane %v3305, 1
    %v3307 = vmin.f32 %v3305, %v3306
    %vm3308 = vcmp.eq.f32.partialorder %v291, %v3307
    %vm3309 = vcmp.eq.f32.partialorder %v292, %v3307
    %v3310 = vsel %vm3308, 1, 0
    %v3311 = vsel %vm3309, 1, 0
    %v3312 = vcvt.s32.f32 %v3310
    %v3313 = vcvt.s32.f32 %v3311
    %v3314 = vadd.f32 %v3286, %v3312
    %v3315 = vadd.f32 %v3287, %v3313
    %v3316 = vsel %vm3308, -1e+30, %v3288
    %v3317 = vsel %vm3309, -1e+30, %v3289
    %v3318 = vmax.f32 %v3316, %v3317
    %v3319 = vrot.slane %v3318, 4
    %v3320 = vmax.f32 %v3318, %v3319
    %v3321 = vrot.slane %v3320, 2
    %v3322 = vmax.f32 %v3320, %v3321
    %v3323 = vrot.slane %v3322, 1
    %v3324 = vmax.f32 %v3322, %v3323
    %vm3325 = vcmp.ge.f32.partialorder %v3316, %v3324
    %vm3326 = vcmp.ge.f32.partialorder %v3317, %v3324
    %v3327 = vsel %vm3325, %v291, 16.0
    %v3328 = vsel %vm3326, %v292, 16.0
    %v3329 = vmin.f32 %v3327, %v3328
    %v3330 = vrot.slane %v3329, 4
    %v3331 = vmin.f32 %v3329, %v3330
    %v3332 = vrot.slane %v3331, 2
    %v3333 = vmin.f32 %v3331, %v3332
    %v3334 = vrot.slane %v3333, 1
    %v3335 = vmin.f32 %v3333, %v3334
    %vm3336 = vcmp.eq.f32.partialorder %v291, %v3335
    %vm3337 = vcmp.eq.f32.partialorder %v292, %v3335
    %v3338 = vsel %vm3336, 1, 0
    %v3339 = vsel %vm3337, 1, 0
    %v3340 = vcvt.s32.f32 %v3338
    %v3341 = vcvt.s32.f32 %v3339
    %v3342 = vadd.f32 %v3314, %v3340
    %v3343 = vadd.f32 %v3315, %v3341
    %vm3344 = vmand %vm303, %vm2887
    %vm3345 = vmand %vm304, %vm2904
    %v3346 = vsel %vm3344, %v3200, -1e+30
    %v3347 = vsel %vm3345, %v3201, -1e+30
    %v3348 = vmax.f32 %v3346, %v3347
    %v3349 = vrot.slane %v3348, 4
    %v3350 = vmax.f32 %v3348, %v3349
    %v3351 = vrot.slane %v3350, 2
    %v3352 = vmax.f32 %v3350, %v3351
    %v3353 = vrot.slane %v3352, 1
    %v3354 = vmax.f32 %v3352, %v3353
    %vm3355 = vcmp.ge.f32.partialorder %v3346, %v3354
    %vm3356 = vcmp.ge.f32.partialorder %v3347, %v3354
    %v3357 = vsel %vm3355, %v291, 16.0
    %v3358 = vsel %vm3356, %v292, 16.0
    %v3359 = vmin.f32 %v3357, %v3358
    %v3360 = vrot.slane %v3359, 4
    %v3361 = vmin.f32 %v3359, %v3360
    %v3362 = vrot.slane %v3361, 2
    %v3363 = vmin.f32 %v3361, %v3362
    %v3364 = vrot.slane %v3363, 1
    %v3365 = vmin.f32 %v3363, %v3364
    %vm3366 = vcmp.eq.f32.partialorder %v291, %v3365
    %vm3367 = vcmp.eq.f32.partialorder %v292, %v3365
    %v3368 = vsel %vm3366, 1, 0
    %v3369 = vsel %vm3367, 1, 0
    %v3370 = vcvt.s32.f32 %v3368
    %v3371 = vcvt.s32.f32 %v3369
    %v3372 = vadd.f32 %v3342, %v3370
    %v3373 = vadd.f32 %v3343, %v3371
    %v3374 = vsel %vm3366, -1e+30, %v3346
    %v3375 = vsel %vm3367, -1e+30, %v3347
    %v3376 = vmax.f32 %v3374, %v3375
    %v3377 = vrot.slane %v3376, 4
    %v3378 = vmax.f32 %v3376, %v3377
    %v3379 = vrot.slane %v3378, 2
    %v3380 = vmax.f32 %v3378, %v3379
    %v3381 = vrot.slane %v3380, 1
    %v3382 = vmax.f32 %v3380, %v3381
    %vm3383 = vcmp.ge.f32.partialorder %v3374, %v3382
    %vm3384 = vcmp.ge.f32.partialorder %v3375, %v3382
    %v3385 = vsel %vm3383, %v291, 16.0
    %v3386 = vsel %vm3384, %v292, 16.0
    %v3387 = vmin.f32 %v3385, %v3386
    %v3388 = vrot.slane %v3387, 4
    %v3389 = vmin.f32 %v3387, %v3388
    %v3390 = vrot.slane %v3389, 2
    %v3391 = vmin.f32 %v3389, %v3390
    %v3392 = vrot.slane %v3391, 1
    %v3393 = vmin.f32 %v3391, %v3392
    %vm3394 = vcmp.eq.f32.partialorder %v291, %v3393
    %vm3395 = vcmp.eq.f32.partialorder %v292, %v3393
    %v3396 = vsel %vm3394, 1, 0
    %v3397 = vsel %vm3395, 1, 0
    %v3398 = vcvt.s32.f32 %v3396
    %v3399 = vcvt.s32.f32 %v3397
    %v3400 = vadd.f32 %v3372, %v3398
    %v3401 = vadd.f32 %v3373, %v3399
    %v3402 = vsel %vm3394, -1e+30, %v3374
    %v3403 = vsel %vm3395, -1e+30, %v3375
    %v3404 = vmax.f32 %v3402, %v3403
    %v3405 = vrot.slane %v3404, 4
    %v3406 = vmax.f32 %v3404, %v3405
    %v3407 = vrot.slane %v3406, 2
    %v3408 = vmax.f32 %v3406, %v3407
    %v3409 = vrot.slane %v3408, 1
    %v3410 = vmax.f32 %v3408, %v3409
    %vm3411 = vcmp.ge.f32.partialorder %v3402, %v3410
    %vm3412 = vcmp.ge.f32.partialorder %v3403, %v3410
    %v3413 = vsel %vm3411, %v291, 16.0
    %v3414 = vsel %vm3412, %v292, 16.0
    %v3415 = vmin.f32 %v3413, %v3414
    %v3416 = vrot.slane %v3415, 4
    %v3417 = vmin.f32 %v3415, %v3416
    %v3418 = vrot.slane %v3417, 2
    %v3419 = vmin.f32 %v3417, %v3418
    %v3420 = vrot.slane %v3419, 1
    %v3421 = vmin.f32 %v3419, %v3420
    %vm3422 = vcmp.eq.f32.partialorder %v291, %v3421
    %vm3423 = vcmp.eq.f32.partialorder %v292, %v3421
    %v3424 = vsel %vm3422, 1, 0
    %v3425 = vsel %vm3423, 1, 0
    %v3426 = vcvt.s32.f32 %v3424
    %v3427 = vcvt.s32.f32 %v3425
    %v3428 = vadd.f32 %v3400, %v3426
    %v3429 = vadd.f32 %v3401, %v3427
    %v3430 = vsel %vm3422, -1e+30, %v3402
    %v3431 = vsel %vm3423, -1e+30, %v3403
    %v3432 = vmax.f32 %v3430, %v3431
    %v3433 = vrot.slane %v3432, 4
    %v3434 = vmax.f32 %v3432, %v3433
    %v3435 = vrot.slane %v3434, 2
    %v3436 = vmax.f32 %v3434, %v3435
    %v3437 = vrot.slane %v3436, 1
    %v3438 = vmax.f32 %v3436, %v3437
    %vm3439 = vcmp.ge.f32.partialorder %v3430, %v3438
    %vm3440 = vcmp.ge.f32.partialorder %v3431, %v3438
    %v3441 = vsel %vm3439, %v291, 16.0
    %v3442 = vsel %vm3440, %v292, 16.0
    %v3443 = vmin.f32 %v3441, %v3442
    %v3444 = vrot.slane %v3443, 4
    %v3445 = vmin.f32 %v3443, %v3444
    %v3446 = vrot.slane %v3445, 2
    %v3447 = vmin.f32 %v3445, %v3446
    %v3448 = vrot.slane %v3447, 1
    %v3449 = vmin.f32 %v3447, %v3448
    %vm3450 = vcmp.eq.f32.partialorder %v291, %v3449
    %vm3451 = vcmp.eq.f32.partialorder %v292, %v3449
    %v3452 = vsel %vm3450, 1, 0
    %v3453 = vsel %vm3451, 1, 0
    %v3454 = vcvt.s32.f32 %v3452
    %v3455 = vcvt.s32.f32 %v3453
    %v3456 = vadd.f32 %v3428, %v3454
    %v3457 = vadd.f32 %v3429, %v3455
    %v3458 = vsel %vm3450, -1e+30, %v3430
    %v3459 = vsel %vm3451, -1e+30, %v3431
    %v3460 = vmax.f32 %v3458, %v3459
    %v3461 = vrot.slane %v3460, 4
    %v3462 = vmax.f32 %v3460, %v3461
    %v3463 = vrot.slane %v3462, 2
    %v3464 = vmax.f32 %v3462, %v3463
    %v3465 = vrot.slane %v3464, 1
    %v3466 = vmax.f32 %v3464, %v3465
    %vm3467 = vcmp.ge.f32.partialorder %v3458, %v3466
    %vm3468 = vcmp.ge.f32.partialorder %v3459, %v3466
    %v3469 = vsel %vm3467, %v291, 16.0
    %v3470 = vsel %vm3468, %v292, 16.0
    %v3471 = vmin.f32 %v3469, %v3470
    %v3472 = vrot.slane %v3471, 4
    %v3473 = vmin.f32 %v3471, %v3472
    %v3474 = vrot.slane %v3473, 2
    %v3475 = vmin.f32 %v3473, %v3474
    %v3476 = vrot.slane %v3475, 1
    %v3477 = vmin.f32 %v3475, %v3476
    %vm3478 = vcmp.eq.f32.partialorder %v291, %v3477
    %vm3479 = vcmp.eq.f32.partialorder %v292, %v3477
    %v3480 = vsel %vm3478, 1, 0
    %v3481 = vsel %vm3479, 1, 0
    %v3482 = vcvt.s32.f32 %v3480
    %v3483 = vcvt.s32.f32 %v3481
    %v3484 = vadd.f32 %v3456, %v3482
    %v3485 = vadd.f32 %v3457, %v3483
    %v3486 = vmul.f32 %v3185, %v3200
    %v3487 = vmul.f32 %v3186, %v3201
    %v3488 = vmul.f32 %v3486, %v3484
    %v3489 = vmul.f32 %v3487, %v3485
    %vm3490 = vcmp.gt.f32.partialorder %v3484, 0.5
    %v3491 = vsel %vm3490, 1, 0
    %vm3492 = vcmp.eq.s32.totalorder %v3491, 1
    %v3493 = vsel %vm3492, %v3488, -1e+30
    %v3494 = vrot.slane %v3493, 4
    %v3495 = vmax.f32 %v3493, %v3494
    %v3496 = vrot.slane %v3495, 2
    %v3497 = vmax.f32 %v3495, %v3496
    %v3498 = vrot.slane %v3497, 1
    %v3499 = vmax.f32 %v3497, %v3498
    %v3500 = vrot.slane %v3488, 4
    %v3501 = vadd.f32 %v3488, %v3500
    %v3502 = vrot.slane %v3501, 2
    %v3503 = vadd.f32 %v3501, %v3502
    %v3504 = vrot.slane %v3503, 1
    %v3505 = vadd.f32 %v3503, %v3504
    %v3506 = vmul.f32 %v3505, 0.2
    %vm3507 = vcmp.gt.f32.partialorder %v3485, 0.5
    %v3508 = vsel %vm3507, 1, 0
    %vm3509 = vcmp.eq.s32.totalorder %v3508, 1
    %v3510 = vsel %vm3509, %v3489, -1e+30
    %v3511 = vrot.slane %v3510, 4
    %v3512 = vmax.f32 %v3510, %v3511
    %v3513 = vrot.slane %v3512, 2
    %v3514 = vmax.f32 %v3512, %v3513
    %v3515 = vrot.slane %v3514, 1
    %v3516 = vmax.f32 %v3514, %v3515
    %v3517 = vrot.slane %v3489, 4
    %v3518 = vadd.f32 %v3489, %v3517
    %v3519 = vrot.slane %v3518, 2
    %v3520 = vadd.f32 %v3518, %v3519
    %v3521 = vrot.slane %v3520, 1
    %v3522 = vadd.f32 %v3520, %v3521
    %v3523 = vmul.f32 %v3522, 0.2
    %v3524 = vsel %vm2261, %v3499, %v3516
    %v3525 = vsel %vm2261, %v3506, %v3523
    %v3526 = vadd.f32 %v2262, %v2921
    %v3527 = vadd.f32 %v3526, %v3524
    %v3528 = vpack.c.bf16 %v3527, %v3527
    %v3529 = vadd.f32 %v2263, %v2922
    %v3530 = vadd.f32 %v3529, %v3525
    %v3531 = vpack.c.bf16 %v3530, %v3530
    %v3532 = vld [vmem:[%s19] sm:$0xf]
    %v3533 = vld [vmem:[%s19 + $0x4] sm:$0xf]
    %v3534 = vld [vmem:[%s19 + $0x8] sm:$0xf]
    %v3535 = vld [vmem:[%s19 + $0xc] sm:$0xf]
    %v3536 = vld [vmem:[%s19 + $0x10] sm:$0xf]
    %v3537 = vld [vmem:[%s19 + $0x14] sm:$0xf]
    %v3538 = vld [vmem:[%s19 + $0x18] sm:$0xf]
    %v3539 = vld [vmem:[%s19 + $0x1c] sm:$0xf]
    %v3540 = vld [vmem:[%s19 + $0x20] sm:$0xf]
    %v3541 = vld [vmem:[%s19 + $0x24] sm:$0xf]
    %v3542 = vld [vmem:[%s19 + $0x28] sm:$0xf]
    %v3543 = vld [vmem:[%s19 + $0x2c] sm:$0xf]
    %v3544 = vld [vmem:[%s19 + $0x30] sm:$0xf]
    %v3545 = vld [vmem:[%s19 + $0x34] sm:$0xf]
    %v3546 = vld [vmem:[%s19 + $0x38] sm:$0xf]
    %v3547 = vld [vmem:[%s19 + $0x3c] sm:$0xf]
    %v3548 = vld [vmem:[%s19 + $0x40] sm:$0xf]
    %v3549 = vld [vmem:[%s19 + $0x44] sm:$0xf]
    %v3550 = vld [vmem:[%s19 + $0x48] sm:$0xf]
    %v3551 = vld [vmem:[%s19 + $0x4c] sm:$0xf]
    %v3552 = vld [vmem:[%s19 + $0x50] sm:$0xf]
    %v3553 = vld [vmem:[%s19 + $0x54] sm:$0xf]
    %v3554 = vld [vmem:[%s19 + $0x58] sm:$0xf]
    %v3555 = vld [vmem:[%s19 + $0x5c] sm:$0xf]
    %v3556 = vld [vmem:[%s19 + $0x60] sm:$0xf]
    %v3557 = vld [vmem:[%s19 + $0x64] sm:$0xf]
    %v3558 = vld [vmem:[%s19 + $0x68] sm:$0xf]
    %v3559 = vld [vmem:[%s19 + $0x6c] sm:$0xf]
    %v3560 = vld [vmem:[%s19 + $0x70] sm:$0xf]
    %v3561 = vld [vmem:[%s19 + $0x74] sm:$0xf]
    %v3562 = vld [vmem:[%s19 + $0x78] sm:$0xf]
    %v3563 = vld [vmem:[%s19 + $0x7c] sm:$0xf]
    %v3580 = vunpack.c.l.b16 %v3548
    %v3581 = vunpack.c.l.b16 %v3549
    %v3582 = vunpack.c.l.b16 %v3550
    %v3583 = vunpack.c.l.b16 %v3551
    %v3584 = vunpack.c.l.b16 %v3552
    %v3585 = vunpack.c.l.b16 %v3553
    %v3586 = vunpack.c.l.b16 %v3554
    %v3587 = vunpack.c.l.b16 %v3555
    %v3588 = vunpack.c.l.b16 %v3556
    %v3589 = vunpack.c.l.b16 %v3557
    %v3590 = vunpack.c.l.b16 %v3558
    %v3591 = vunpack.c.l.b16 %v3559
    %v3592 = vunpack.c.l.b16 %v3560
    %v3593 = vunpack.c.l.b16 %v3561
    %v3594 = vunpack.c.l.b16 %v3562
    %v3595 = vunpack.c.l.b16 %v3563
    %v3596 = vpack.c.b16 %v3581, %v3580
    %v3597 = vpack.c.b16 %v3583, %v3582
    %v3598 = vpack.c.b16 %v3585, %v3584
    %v3599 = vpack.c.b16 %v3587, %v3586
    %v3600 = vpack.c.b16 %v3589, %v3588
    %v3601 = vpack.c.b16 %v3591, %v3590
    %v3602 = vpack.c.b16 %v3593, %v3592
    %v3603 = vpack.c.b16 %v3595, %v3594
    %3612 = vmatprep.subr.bf16.mxu0 0
    %3613 = vmatpush1.bf16.msra.mxu0 %v3596
    %3614 = vmatprep.subr.bf16.mxu0 0
    %3615 = vmatpush1.bf16.msra.mxu0 %v3597
    %3616 = vmatprep.subr.bf16.mxu0 0
    %3617 = vmatpush1.bf16.msra.mxu0 %v3598
    %3618 = vmatprep.subr.bf16.mxu0 0
    %3619 = vmatpush1.bf16.msra.mxu0 %v3599
    %3620 = vmatprep.subr.bf16.mxu0 0
    %3621 = vmatpush1.bf16.msra.mxu0 %v3600
    %3622 = vmatprep.subr.bf16.mxu0 0
    %3623 = vmatpush1.bf16.msra.mxu0 %v3601
    %3624 = vmatprep.subr.bf16.mxu0 0
    %3625 = vmatpush1.bf16.msra.mxu0 %v3602
    %3626 = vmatprep.subr.bf16.mxu0 0
    %3627 = vmatpush1.bf16.msra.mxu0 %v3603
    %3628 = vmatprep.subr.bf16.mxu0 0
    %3629 = vmatpush1.bf16.msra.mxu0 0
    %3630 = vmatprep.subr.bf16.mxu0 0
    %3631 = vmatpush1.bf16.msra.mxu0 0
    %3632 = vmatprep.subr.bf16.mxu0 0
    %3633 = vmatpush1.bf16.msra.mxu0 0
    %3634 = vmatprep.subr.bf16.mxu0 0
    %3635 = vmatpush1.bf16.msra.mxu0 0
    %3636 = vmatprep.subr.bf16.mxu0 0
    %3637 = vmatpush1.bf16.msra.mxu0 0
    %3638 = vmatprep.subr.bf16.mxu0 0
    %3639 = vmatpush1.bf16.msra.mxu0 0
    %3640 = vmatprep.subr.bf16.mxu0 0
    %3641 = vmatpush1.bf16.msra.mxu0 0
    %3642 = vmatprep.subr.bf16.mxu0 0
    %3643 = vmatpush1.bf16.msra.mxu0 0
    %3644 = vmatprep.mubr.bf16.mxu0 0
    %3645 = vmatmul.mubr.bf16.gmra.mrb[0].mxu0 %v3531
    %v3646 = vpop.f32.mrb[0].mxu0
    %v3647 = vadd.f32 0.0, %v3646
    %v3648 = vpop.f32.mrb[0].mxu0
    %v3649 = vpop.f32.mrb[0].mxu0
    %v3650 = vpop.f32.mrb[0].mxu0
    %3651 = vdwg.mxu0
    %v3668 = vunpack.c.l.b16 %v3532
    %v3669 = vunpack.c.l.b16 %v3533
    %v3670 = vunpack.c.l.b16 %v3534
    %v3671 = vunpack.c.l.b16 %v3535
    %v3672 = vunpack.c.l.b16 %v3536
    %v3673 = vunpack.c.l.b16 %v3537
    %v3674 = vunpack.c.l.b16 %v3538
    %v3675 = vunpack.c.l.b16 %v3539
    %v3676 = vunpack.c.l.b16 %v3540
    %v3677 = vunpack.c.l.b16 %v3541
    %v3678 = vunpack.c.l.b16 %v3542
    %v3679 = vunpack.c.l.b16 %v3543
    %v3680 = vunpack.c.l.b16 %v3544
    %v3681 = vunpack.c.l.b16 %v3545
    %v3682 = vunpack.c.l.b16 %v3546
    %v3683 = vunpack.c.l.b16 %v3547
    %v3684 = vpack.c.b16 %v3669, %v3668
    %v3685 = vpack.c.b16 %v3671, %v3670
    %v3686 = vpack.c.b16 %v3673, %v3672
    %v3687 = vpack.c.b16 %v3675, %v3674
    %v3688 = vpack.c.b16 %v3677, %v3676
    %v3689 = vpack.c.b16 %v3679, %v3678
    %v3690 = vpack.c.b16 %v3681, %v3680
    %v3691 = vpack.c.b16 %v3683, %v3682
    %3700 = vmatprep.subr.bf16.mxu0 0
    %3701 = vmatpush1.bf16.msra.mxu0 %v3684
    %3702 = vmatprep.subr.bf16.mxu0 0
    %3703 = vmatpush1.bf16.msra.mxu0 %v3685
    %3704 = vmatprep.subr.bf16.mxu0 0
    %3705 = vmatpush1.bf16.msra.mxu0 %v3686
    %3706 = vmatprep.subr.bf16.mxu0 0
    %3707 = vmatpush1.bf16.msra.mxu0 %v3687
    %3708 = vmatprep.subr.bf16.mxu0 0
    %3709 = vmatpush1.bf16.msra.mxu0 %v3688
    %3710 = vmatprep.subr.bf16.mxu0 0
    %3711 = vmatpush1.bf16.msra.mxu0 %v3689
    %3712 = vmatprep.subr.bf16.mxu0 0
    %3713 = vmatpush1.bf16.msra.mxu0 %v3690
    %3714 = vmatprep.subr.bf16.mxu0 0
    %3715 = vmatpush1.bf16.msra.mxu0 %v3691
    %3716 = vmatprep.subr.bf16.mxu0 0
    %3717 = vmatpush1.bf16.msra.mxu0 0
    %3718 = vmatprep.subr.bf16.mxu0 0
    %3719 = vmatpush1.bf16.msra.mxu0 0
    %3720 = vmatprep.subr.bf16.mxu0 0
    %3721 = vmatpush1.bf16.msra.mxu0 0
    %3722 = vmatprep.subr.bf16.mxu0 0
    %3723 = vmatpush1.bf16.msra.mxu0 0
    %3724 = vmatprep.subr.bf16.mxu0 0
    %3725 = vmatpush1.bf16.msra.mxu0 0
    %3726 = vmatprep.subr.bf16.mxu0 0
    %3727 = vmatpush1.bf16.msra.mxu0 0
    %3728 = vmatprep.subr.bf16.mxu0 0
    %3729 = vmatpush1.bf16.msra.mxu0 0
    %3730 = vmatprep.subr.bf16.mxu0 0
    %3731 = vmatpush1.bf16.msra.mxu0 0
    %3732 = vmatprep.mubr.bf16.mxu0 0
    %3733 = vmatmul.mubr.bf16.gmra.mrb[0].mxu0 %v3528
    %v3734 = vpop.f32.mrb[0].mxu0
    %v3735 = vadd.f32 %v3647, %v3734
    %v3736 = vpop.f32.mrb[0].mxu0
    %v3737 = vpop.f32.mrb[0].mxu0
    %v3738 = vpop.f32.mrb[0].mxu0
    %3739 = vdwg.mxu0
    %v3740 = vld [vmem:[#allocation23] sm:$0x1]
    %v3742 = vlaneseq
    %v3743 = vshrl.u32 %v3742, 7
    %v3744 = vsub.s32 0, %v3743
    %v3745 = vrot.slane %v3740, %v3744
    %v3747 = vadd.f32 %v3735, %v3745
    %v3748 = vmax.f32 %v3747, 0.0
    %v3749 = vpack.c.bf16 %v3748, %v3748
    %v3750 = vld [vmem:[%s21] sm:$0xf]
    %v3751 = vld [vmem:[%s21 + $0x4] sm:$0xf]
    %v3752 = vld [vmem:[%s21 + $0x8] sm:$0xf]
    %v3753 = vld [vmem:[%s21 + $0xc] sm:$0xf]
    %v3754 = vld [vmem:[%s21 + $0x10] sm:$0xf]
    %v3755 = vld [vmem:[%s21 + $0x14] sm:$0xf]
    %v3756 = vld [vmem:[%s21 + $0x18] sm:$0xf]
    %v3757 = vld [vmem:[%s21 + $0x1c] sm:$0xf]
    %v3758 = vld [vmem:[%s21 + $0x20] sm:$0xf]
    %v3759 = vld [vmem:[%s21 + $0x24] sm:$0xf]
    %v3760 = vld [vmem:[%s21 + $0x28] sm:$0xf]
    %v3761 = vld [vmem:[%s21 + $0x2c] sm:$0xf]
    %v3762 = vld [vmem:[%s21 + $0x30] sm:$0xf]
    %v3763 = vld [vmem:[%s21 + $0x34] sm:$0xf]
    %v3764 = vld [vmem:[%s21 + $0x38] sm:$0xf]
    %v3765 = vld [vmem:[%s21 + $0x3c] sm:$0xf]
    %v3766 = vld [vmem:[#allocation25] sm:$0x1]
    %v3768 = vlaneseq
    %v3769 = vshrl.u32 %v3768, 7
    %v3770 = vsub.s32 0, %v3769
    %v3771 = vrot.slane %v3766, %v3770
    %v3789 = vunpack.c.l.b16 %v3750
    %v3790 = vunpack.c.l.b16 %v3751
    %v3791 = vunpack.c.l.b16 %v3752
    %v3792 = vunpack.c.l.b16 %v3753
    %v3793 = vunpack.c.l.b16 %v3754
    %v3794 = vunpack.c.l.b16 %v3755
    %v3795 = vunpack.c.l.b16 %v3756
    %v3796 = vunpack.c.l.b16 %v3757
    %v3797 = vunpack.c.l.b16 %v3758
    %v3798 = vunpack.c.l.b16 %v3759
    %v3799 = vunpack.c.l.b16 %v3760
    %v3800 = vunpack.c.l.b16 %v3761
    %v3801 = vunpack.c.l.b16 %v3762
    %v3802 = vunpack.c.l.b16 %v3763
    %v3803 = vunpack.c.l.b16 %v3764
    %v3804 = vunpack.c.l.b16 %v3765
    %v3805 = vpack.c.b16 %v3790, %v3789
    %v3806 = vpack.c.b16 %v3792, %v3791
    %v3807 = vpack.c.b16 %v3794, %v3793
    %v3808 = vpack.c.b16 %v3796, %v3795
    %v3809 = vpack.c.b16 %v3798, %v3797
    %v3810 = vpack.c.b16 %v3800, %v3799
    %v3811 = vpack.c.b16 %v3802, %v3801
    %v3812 = vpack.c.b16 %v3804, %v3803
    %3821 = vmatprep.subr.bf16.mxu0 0
    %3822 = vmatpush1.bf16.msra.mxu0 %v3805
    %3823 = vmatprep.subr.bf16.mxu0 0
    %3824 = vmatpush1.bf16.msra.mxu0 %v3806
    %3825 = vmatprep.subr.bf16.mxu0 0
    %3826 = vmatpush1.bf16.msra.mxu0 %v3807
    %3827 = vmatprep.subr.bf16.mxu0 0
    %3828 = vmatpush1.bf16.msra.mxu0 %v3808
    %3829 = vmatprep.subr.bf16.mxu0 0
    %3830 = vmatpush1.bf16.msra.mxu0 %v3809
    %3831 = vmatprep.subr.bf16.mxu0 0
    %3832 = vmatpush1.bf16.msra.mxu0 %v3810
    %3833 = vmatprep.subr.bf16.mxu0 0
    %3834 = vmatpush1.bf16.msra.mxu0 %v3811
    %3835 = vmatprep.subr.bf16.mxu0 0
    %3836 = vmatpush1.bf16.msra.mxu0 %v3812
    %3837 = vmatprep.subr.bf16.mxu0 0
    %3838 = vmatpush1.bf16.msra.mxu0 0
    %3839 = vmatprep.subr.bf16.mxu0 0
    %3840 = vmatpush1.bf16.msra.mxu0 0
    %3841 = vmatprep.subr.bf16.mxu0 0
    %3842 = vmatpush1.bf16.msra.mxu0 0
    %3843 = vmatprep.subr.bf16.mxu0 0
    %3844 = vmatpush1.bf16.msra.mxu0 0
    %3845 = vmatprep.subr.bf16.mxu0 0
    %3846 = vmatpush1.bf16.msra.mxu0 0
    %3847 = vmatprep.subr.bf16.mxu0 0
    %3848 = vmatpush1.bf16.msra.mxu0 0
    %3849 = vmatprep.subr.bf16.mxu0 0
    %3850 = vmatpush1.bf16.msra.mxu0 0
    %3851 = vmatprep.subr.bf16.mxu0 0
    %3852 = vmatpush1.bf16.msra.mxu0 0
    %3853 = vmatprep.mubr.bf16.mxu0 0
    %3854 = vmatmul.mubr.bf16.gmra.mrb[0].mxu0 %v3749
    %v3855 = vpop.f32.mrb[0].mxu0
    %v3856 = vadd.f32 %v3771, %v3855
    %v3857 = vpop.f32.mrb[0].mxu0
    %v3858 = vpop.f32.mrb[0].mxu0
    %v3859 = vpop.f32.mrb[0].mxu0
    %3860 = vdwg.mxu0
    %v3861 = vmax.f32 %v3856, 0.0
    %v3862 = vpack.c.bf16 %v3861, %v3861
    %v3863 = vld [vmem:[%s23] sm:$0xf]
    %v3864 = vld [vmem:[%s23 + $0x4] sm:$0xf]
    %v3865 = vld [vmem:[%s23 + $0x8] sm:$0xf]
    %v3866 = vld [vmem:[%s23 + $0xc] sm:$0xf]
    %v3867 = vld [vmem:[%s23 + $0x10] sm:$0xf]
    %v3868 = vld [vmem:[%s23 + $0x14] sm:$0xf]
    %v3869 = vld [vmem:[%s23 + $0x18] sm:$0xf]
    %v3870 = vld [vmem:[%s23 + $0x1c] sm:$0xf]
    %v3871 = vld [vmem:[#allocation26] sm:$0x1]
    %v3873 = vlaneseq
    %v3874 = vshrl.u32 %v3873, 7
    %v3875 = vsub.s32 0, %v3874
    %v3876 = vrot.slane %v3871, %v3875
    %v3886 = vunpack.c.l.b16 %v3863
    %v3887 = vunpack.c.l.b16 %v3864
    %v3888 = vunpack.c.l.b16 %v3865
    %v3889 = vunpack.c.l.b16 %v3866
    %v3890 = vunpack.c.l.b16 %v3867
    %v3891 = vunpack.c.l.b16 %v3868
    %v3892 = vunpack.c.l.b16 %v3869
    %v3893 = vunpack.c.l.b16 %v3870
    %v3894 = vpack.c.b16 %v3887, %v3886
    %v3895 = vpack.c.b16 %v3889, %v3888
    %v3896 = vpack.c.b16 %v3891, %v3890
    %v3897 = vpack.c.b16 %v3893, %v3892
    %vm3902 = vcmask 523264
    %v3904 = vsel %vm3902, %v3862, 0
    %3906 = vmatprep.subr.bf16.mxu0 0
    %3907 = vmatpush1.bf16.msra.mxu0 %v3894
    %3908 = vmatprep.subr.bf16.mxu0 0
    %3909 = vmatpush1.bf16.msra.mxu0 %v3895
    %3910 = vmatprep.subr.bf16.mxu0 0
    %3911 = vmatpush1.bf16.msra.mxu0 %v3896
    %3912 = vmatprep.subr.bf16.mxu0 0
    %3913 = vmatpush1.bf16.msra.mxu0 %v3897
    %3914 = vmatprep.subr.bf16.mxu0 0
    %3915 = vmatpush1.bf16.msra.mxu0 0
    %3916 = vmatprep.subr.bf16.mxu0 0
    %3917 = vmatpush1.bf16.msra.mxu0 0
    %3918 = vmatprep.subr.bf16.mxu0 0
    %3919 = vmatpush1.bf16.msra.mxu0 0
    %3920 = vmatprep.subr.bf16.mxu0 0
    %3921 = vmatpush1.bf16.msra.mxu0 0
    %3922 = vmatprep.subr.bf16.mxu0 0
    %3923 = vmatpush1.bf16.msra.mxu0 0
    %3924 = vmatprep.subr.bf16.mxu0 0
    %3925 = vmatpush1.bf16.msra.mxu0 0
    %3926 = vmatprep.subr.bf16.mxu0 0
    %3927 = vmatpush1.bf16.msra.mxu0 0
    %3928 = vmatprep.subr.bf16.mxu0 0
    %3929 = vmatpush1.bf16.msra.mxu0 0
    %3930 = vmatprep.subr.bf16.mxu0 0
    %3931 = vmatpush1.bf16.msra.mxu0 0
    %3932 = vmatprep.subr.bf16.mxu0 0
    %3933 = vmatpush1.bf16.msra.mxu0 0
    %3934 = vmatprep.subr.bf16.mxu0 0
    %3935 = vmatpush1.bf16.msra.mxu0 0
    %3936 = vmatprep.subr.bf16.mxu0 0
    %3937 = vmatpush1.bf16.msra.mxu0 0
    %3938 = vmatprep.mubr.bf16.mxu0 0
    %3939 = vmatmul.mubr.bf16.gmra.mrb[0].mxu0 %v3904
    %v3940 = vpop.f32.mrb[0].mxu0
    %v3941 = vadd.f32 %v3876, %v3940
    %v3942 = vpop.f32.mrb[0].mxu0
    %v3943 = vpop.f32.mrb[0].mxu0
    %v3944 = vpop.f32.mrb[0].mxu0
    %3945 = vdwg.mxu0
    %v3946 = vsel %vm368, %v3941, -inf
    %3947 = vmax.xlane.f32.xlu0 %v3946
    %v3948 = vpop.xlane.xlu0 %3947
    %v3949 = vsub.f32 %v3941, %v3948
    %v3950 = vmul.f32 %v3949, 1.442695
    %v3951 = vpow.pop %v3950
    %v3952 = vsel %vm368, %v3951, 0.0
    %3953 = vadd.xlane.f32.xlu0 %v3952
    %v3954 = vpop.xlane.xlu0 %3953
    %v3955 = vlog2.pop %v3954
    %v3956 = vmul.f32 %v3955, 0.6931472
    %v3957 = vsub.f32 %v3949, %v3956
    %3958 = vst [vmem:[#allocation28] sm:$0x3] %v3957
    // Predicated region
    $region166: #{forward.1} parent=1 // pred_check
      _
    $region167: #{forward.1} parent=1 // pred_check_branch
      %3960 = sbr.rel (0) target = $region169
    $region168: #{forward.1} parent=1 // pred_region
      %s3962 = ssub.s32 32, 32
      %3963 = vsyncadd [#allocation4], %s3962
      %s3965 = sshll.u32 [#allocation28], 4
      %s3966 = int_to_ptr.vmem [resolvable:$true] %s3965
      %3968 = dma.vmem_to_hbm [thread:$0]  %s3966, 32, %s25, [#allocation4]
    $region169: #{forward.1} parent=1 // pred_fallthru
      _
    // Predicated region
    $region170: #{forward.1} parent=1 // pred_check
      _
    $region171: #{forward.1} parent=1 // pred_check_branch
      %3970 = sbr.rel (0) target = $region173
    $region172: #{forward.1} parent=1 // pred_region
      %s3972 = ssub.s32 16, 16
      %3973 = vsyncadd [#allocation30], %s3972
      %s3975 = sshll.u32 [#allocation29], 4
      %s3976 = int_to_ptr.vmem [resolvable:$true] %s3975
      %3978 = dma.vmem_to_hbm [thread:$0]  %s3976, 16, %s26, [#allocation30]
    $region173: #{forward.1} parent=1 // pred_fallthru
      _
    // Predicated region
    $region174: #{forward.1} parent=1 // pred_check
      _
    $region175: #{forward.1} parent=1 // pred_check_branch
      %3980 = sbr.rel (0) target = $region177
    $region176: #{forward.1} parent=1 // pred_region
      %3981 = dma.done [#allocation4], 32
    $region177: #{forward.1} parent=1 // pred_fallthru
      _
    // Predicated region
    $region178: #{forward.1} parent=1 // pred_check
      _
    $region179: #{forward.1} parent=1 // pred_check_branch
      %3983 = sbr.rel (0) target = $region181
    $region180: #{forward.1} parent=1 // pred_region
      %3984 = dma.done [#allocation30], 16
    $region181: #{forward.1} parent=1 // pred_fallthru
      _
    %3985 = vsyncpa [#allocation3], 1
    %3986 = vsyncpa [#allocation6], 1
    %3987 = vsyncpa [#allocation9], 1
    %3988 = vsyncpa [#allocation12], 1
    %3989 = vsyncpa [#allocation15], 1
    %3990 = vsyncpa [#allocation18], 1
    %3991 = vsyncpa [#allocation21], 1
    %3992 = vsyncpa [#allocation24], 1
    %3993 = vsyncpa [#allocation27], 1
    %3994 = vsyncpa [#allocation4], 1
    %3995 = vsyncpa [#allocation30], 1

</llo_original>
